<compile_context>
chip_gen: v5e
topology: v5e:2x2
jax: 0.10.0
libtpu: 0.0.40
codegen_flags: <defaults>
</compile_context>

<pallas_src>
import jax
import jax.numpy as jnp
from jax.experimental import pallas as pl
from jax.experimental.pallas import tpu as pltpu

# ---- module constants (consistent with the forward's 288/512 grid) ----
EMBED_DIM = 32
HIDDEN_DIM = 64
PATCH_SIZE = 32
H_PATCHES = 288 // PATCH_SIZE          # 9
W_PATCHES = 512 // PATCH_SIZE          # 16
N_TOKENS = H_PATCHES * W_PATCHES       # 144
TOK_FLAT = N_TOKENS * EMBED_DIM        # 4608 = 36 * 128 (lane-dense)
OUT_H = 18                             # upsampled output height
OUT_W = 32                             # upsampled output width
OUT_PIX = OUT_H * OUT_W                # 576
OUT_PAD = 640                          # 5 * 128 -> unmasked vector stores

B_TILE = 256                           # max batch elements per grid step


def _round_up(x, m):
    return (x + m - 1) // m * m


# --------------------------------------------------------------------------- #
# Pallas kernel: one tile of `bt` batch elements per grid step.
# --------------------------------------------------------------------------- #
def decoder_head_kernel(tok_ref, wz_ref, kt_ref, bfold_ref, out_ref):
    # tok_ref   : (bt, 4608)   lane-dense flattened tokens          (VMEM)
    # wz_ref    : (4608, 144)  block-diagonal folded proj weight    (VMEM, resident)
    # kt_ref    : (144, 640)   bilinear matrix^T, zero-padded       (VMEM, resident)
    # bfold_ref : (1,)         folded scalar bias                   (SMEM)
    # out_ref   : (bt, 640)    sigmoid saliency, lane-dense         (VMEM)
    # per-token folded projection on the MXU: (bt,4608)@(4608,144) -> (bt,144)
    z = jnp.dot(tok_ref[...], wz_ref[...], preferred_element_type=jnp.float32)
    # bilinear upsample + sal_fc in one MXU matmul: (bt,144)@(144,640)
    s = jnp.dot(z, kt_ref[...], preferred_element_type=jnp.float32)
    out_ref[...] = jax.nn.sigmoid(s + bfold_ref[0])


# --------------------------------------------------------------------------- #
# Wrapper
# --------------------------------------------------------------------------- #
@jax.jit
def decoder_head(tokens, wproj_t, bproj, wsal, bsal, kmat_t):
    B = tokens.shape[0]

    # Fold sal_fc through the (row-stochastic) bilinear upsample into proj.
    ws = wsal.reshape(HIDDEN_DIM)                                # (H,)
    w_fold = wproj_t @ ws                                        # (D,)
    b_fold = (bproj @ ws + bsal.reshape(())).reshape(1)          # (1,)

    # Block-diagonal lift of the folded weight so the embed-dim contraction
    # runs on the MXU against the lane-dense (bt, 4608) token block:
    #   Wz[n*D + d, n] = w_fold[d]
    wz = (jnp.eye(N_TOKENS, dtype=jnp.float32)[:, None, :]
          * w_fold[None, :, None]).reshape(TOK_FLAT, N_TOKENS)   # (4608, 144)

    # Zero-pad the upsample matrix's output dim to a multiple of 128 lanes.
    kt_pad = jnp.pad(kmat_t, ((0, 0), (0, OUT_PAD - OUT_PIX)))   # (144, 640)

    # Lane-dense token layout (contiguous reshape, free).
    tok2d = tokens.reshape(B, TOK_FLAT)

    # Adaptive batch tiling: minimize padding, cap the tile at B_TILE, and
    # aim for >= 2 grid steps when B allows (keeps both v7x TCs busy).
    n_steps = max(pl.cdiv(B, B_TILE), min(2, pl.cdiv(B, 8)))
    bt = _round_up(pl.cdiv(B, n_steps), 8)
    b_pad = _round_up(B, bt)
    if b_pad != B:
        tok2d = jnp.pad(tok2d, ((0, b_pad - B), (0, 0)))

    out_flat = pl.pallas_call(
        decoder_head_kernel,
        out_shape=jax.ShapeDtypeStruct((b_pad, OUT_PAD), jnp.float32),
        grid_spec=pltpu.PrefetchScalarGridSpec(
            num_scalar_prefetch=0,
            grid=(b_pad // bt,),
            in_specs=[
                pl.BlockSpec((bt, TOK_FLAT), lambda i: (i, 0)),
                pl.BlockSpec((TOK_FLAT, N_TOKENS), lambda i: (0, 0)),
                pl.BlockSpec((N_TOKENS, OUT_PAD), lambda i: (0, 0)),
                pl.BlockSpec(memory_space=pltpu.MemorySpace.SMEM),
            ],
            out_specs=pl.BlockSpec((bt, OUT_PAD), lambda i: (i, 0)),
        ),
        compiler_params=pltpu.CompilerParams(
            dimension_semantics=("parallel",),
            vmem_limit_bytes=32 * 1024 * 1024),
    )(tok2d, wz, kt_pad, b_fold)

    # Layout plumbing back to NCHW outside the kernel (lane-dense inside).
    return out_flat[:B, :OUT_PIX].reshape(B, 1, OUT_H, OUT_W)


# --------------------------------------------------------------------------- #
# Glue: 1-D bilinear interpolation matrix matching torch align_corners=False.
# --------------------------------------------------------------------------- #
def interp_matrix_1d(out_size, in_size):
    scale = in_size / out_size
    dst = jnp.arange(out_size, dtype=jnp.float32)
    src = jnp.maximum((dst + 0.5) * scale - 0.5, 0.0)       # torch clamps to >= 0
    i0 = jnp.minimum(jnp.floor(src).astype(jnp.int32), in_size - 1)
    i1 = jnp.minimum(i0 + 1, in_size - 1)
    w1 = src - i0.astype(jnp.float32)
    w0 = 1.0 - w1
    m = jnp.zeros((out_size, in_size), jnp.float32)
    rows = jnp.arange(out_size)
    m = m.at[rows, i0].add(w0)
    m = m.at[rows, i1].add(w1)
    return m


def build_upsample_matrix():
    rh = interp_matrix_1d(OUT_H, H_PATCHES)                  # (OUT_H, Hp)
    rw = interp_matrix_1d(OUT_W, W_PATCHES)                  # (OUT_W, Wp)
    # K[(oh, ow), (h, w)] = rh[oh, h] * rw[ow, w]
    k = jnp.einsum("ah,bw->abhw", rh, rw)
    return k.reshape(OUT_H * OUT_W, H_PATCHES * W_PATCHES)   # (576, 144)


# --------------------------------------------------------------------------- #
# Pure-JAX reference with the ORIGINAL (unfused) op order:
#   proj -> bilinear upsample -> sal_fc -> sigmoid
# --------------------------------------------------------------------------- #
def reference(tokens, wproj_t, bproj, wsal, bsal, kmat):
    x = tokens @ wproj_t + bproj.reshape(1, 1, HIDDEN_DIM)           # (B, N, H)
    up = jnp.einsum("pn,bnh->bph", kmat, x)                          # (B, P, H)
    s = jnp.einsum("bph,h->bp", up, wsal.reshape(-1)) + bsal.reshape(())
    return jax.nn.sigmoid(s).reshape(-1, 1, OUT_H, OUT_W)


if __name__ == "__main__":
    B = 2
    key = jax.random.PRNGKey(0)
    k_tok, k_wp, k_bp, k_ws, k_bs = jax.random.split(key, 5)

    tokens = jax.random.normal(k_tok, (B, N_TOKENS, EMBED_DIM), jnp.float32)

    # Deterministic parameter init (torch Linear-like uniform ranges).
    lim_p = 1.0 / (EMBED_DIM ** 0.5)
    wproj_t = jax.random.uniform(k_wp, (EMBED_DIM, HIDDEN_DIM), jnp.float32,
                                 -lim_p, lim_p)                      # proj.weight.T
    bproj = jax.random.uniform(k_bp, (HIDDEN_DIM,), jnp.float32,
                               -lim_p, lim_p)                        # proj.bias
    lim_s = 1.0 / (HIDDEN_DIM ** 0.5)
    wsal = jax.random.uniform(k_ws, (1, HIDDEN_DIM), jnp.float32,
                              -lim_s, lim_s)                         # sal_fc.weight
    bsal = jax.random.uniform(k_bs, (1,), jnp.float32,
                              -lim_s, lim_s)                         # sal_fc.bias

    kmat = build_upsample_matrix()                                   # (576, 144)
    kmat_t = kmat.T                                                  # (144, 576)

    out = decoder_head(tokens, wproj_t, bproj, wsal, bsal, kmat_t)
    out = jax.block_until_ready(out)

    ref = reference(tokens, wproj_t, bproj, wsal, bsal, kmat)
    assert out.shape == (B, 1, OUT_H, OUT_W), out.shape
    max_err = float(jnp.max(jnp.abs(out - ref)))
    assert jnp.allclose(out, ref, atol=1e-5, rtol=1e-5), max_err

    print("KERNEL_OK")
</pallas_src>

<mosaic_0001>
module attributes {stable_mosaic.version = 11 : i64} {
  func.func @decoder_head_kernel(%arg0: i32, %arg1: memref<8x4608xf32, #tpu.memory_space<vmem>>, %arg2: memref<4608x144xf32, #tpu.memory_space<vmem>>, %arg3: memref<144x640xf32, #tpu.memory_space<vmem>>, %arg4: memref<1xf32, #tpu.memory_space<smem>>, %arg5: memref<8x640xf32, #tpu.memory_space<vmem>>) attributes {dimension_semantics = [#tpu.dimension_semantics<parallel>], iteration_bounds = array<i64: 1>, scalar_prefetch = 0 : i64, scratch_operands = 0 : i64, tpu.core_type = #tpu.core_type<tc>, window_params = [{transform_indices = @transform_0, window_bounds = array<i64: 8, 4608>}, {pipeline_mode = #tpu.pipeline_mode<synchronous>, transform_indices = @transform_1, window_bounds = array<i64: 4608, 144>}, {pipeline_mode = #tpu.pipeline_mode<synchronous>, transform_indices = @transform_2, window_bounds = array<i64: 144, 640>}, {transform_indices = @transform_3, window_bounds = array<i64: 1>}, {transform_indices = @transform_4, window_bounds = array<i64: 8, 640>}]} {
    %c0 = arith.constant 0 : index
    %c0_0 = arith.constant 0 : index
    %0 = vector.load %arg1[%c0, %c0_0] : memref<8x4608xf32, #tpu.memory_space<vmem>>, vector<8x4608xf32>
    %c0_1 = arith.constant 0 : index
    %c0_2 = arith.constant 0 : index
    %1 = vector.load %arg2[%c0_1, %c0_2] : memref<4608x144xf32, #tpu.memory_space<vmem>>, vector<4608x144xf32>
    %cst = arith.constant dense<0.000000e+00> : vector<8x144xf32>
    %2 = tpu.matmul %0, %1, %cst {dimension_numbers = #tpu.dot_dimension_numbers<[1], [0], [0], [1], [0, 0, 1, 1], [], []>} : vector<8x4608xf32>, vector<4608x144xf32>, vector<8x144xf32> -> vector<8x144xf32>
    %c0_3 = arith.constant 0 : index
    %c0_4 = arith.constant 0 : index
    %3 = vector.load %arg3[%c0_3, %c0_4] : memref<144x640xf32, #tpu.memory_space<vmem>>, vector<144x640xf32>
    %cst_5 = arith.constant dense<0.000000e+00> : vector<8x640xf32>
    %4 = tpu.matmul %2, %3, %cst_5 {dimension_numbers = #tpu.dot_dimension_numbers<[1], [0], [0], [1], [0, 0, 1, 1], [], []>} : vector<8x144xf32>, vector<144x640xf32>, vector<8x640xf32> -> vector<8x640xf32>
    %c0_6 = arith.constant 0 : index
    %5 = memref.load %arg4[%c0_6] : memref<1xf32, #tpu.memory_space<smem>>
    %6 = vector.broadcast %5 : f32 to vector<8x640xf32>
    %7 = arith.addf %4, %6 : vector<8x640xf32>
    %8 = arith.negf %7 : vector<8x640xf32>
    %9 = math.exp %8 : vector<8x640xf32>
    %cst_7 = arith.constant 1.000000e+00 : f32
    %10 = vector.broadcast %cst_7 : f32 to vector<8x640xf32>
    %11 = arith.addf %10, %9 : vector<8x640xf32>
    %12 = arith.divf %10, %11 : vector<8x640xf32>
    %c0_8 = arith.constant 0 : index
    %c0_9 = arith.constant 0 : index
    %13 = vector.load %arg5[%c0_8, %c0_9] : memref<8x640xf32, #tpu.memory_space<vmem>>, vector<8x640xf32>
    tpu.vector_store %arg5[%c0_8, %c0_9], %12 {strides = array<i32>} : memref<8x640xf32, #tpu.memory_space<vmem>>, vector<8x640xf32>,
    return
  }
  func.func @transform_0(%arg0: i32) -> (i32, i32) {
    %c0_i32 = arith.constant 0 : i32
    %c0_i32_0 = arith.constant 0 : i32
    return %arg0, %c0_i32 : i32, i32
  }
  func.func @transform_1(%arg0: i32) -> (i32, i32) {
    %c0_i32 = arith.constant 0 : i32
    %c0_i32_0 = arith.constant 0 : i32
    %c0_i32_1 = arith.constant 0 : i32
    return %c0_i32, %c0_i32_0 : i32, i32
  }
  func.func @transform_2(%arg0: i32) -> (i32, i32) {
    %c0_i32 = arith.constant 0 : i32
    %c0_i32_0 = arith.constant 0 : i32
    %c0_i32_1 = arith.constant 0 : i32
    return %c0_i32, %c0_i32_0 : i32, i32
  }
  func.func @transform_3(%arg0: i32) -> i32 {
    %c0_i32 = arith.constant 0 : i32
    %c0_i32_0 = arith.constant 0 : i32
    return %c0_i32 : i32
  }
  func.func @transform_4(%arg0: i32) -> (i32, i32) {
    %c0_i32 = arith.constant 0 : i32
    %c0_i32_0 = arith.constant 0 : i32
    return %arg0, %c0_i32 : i32, i32
  }
}

</mosaic_0001>

<llo_original>
// kernel: decoder_head.1
$region0: #{decoder_head.1}
  #allocation0 [shape = 'u32[]', space=smem, size = 0x4, offset = 0x4, fixed_abs, tag = 'smem constant byte address 0x4 - core index']
  #allocation1 [shape = 'u32[72,128]{1,0:T(1,128)}', space=vmem, size = 0x9000, scoped, tag = 'internal scratch']
  #allocation2 [shape = 'f32[1]{0:T(128)S(6)}', space=smem, size = 0x200, scoped, tag = 'scoped memory for decoder_head.1']
  %s0 = inlined_call_operand.vmem [shape: f32[8,4608], index: 0, kind: input, shape index: {}]
  %s1 = inlined_call_operand.vmem [shape: f32[4608,144], index: 1, kind: input, shape index: {}]
  %s2 = inlined_call_operand.vmem [shape: f32[144,640], index: 2, kind: input, shape index: {}]
  %s3 = inlined_call_operand.<no memory space> [shape: f32[1], index: 3, kind: input, shape index: {}]
  %s4 = inlined_call_operand.vmem [shape: f32[8,640], index: 4, kind: output, shape index: {}]
  %s5 = sld [smem:[#allocation0]]
  $region26: #{decoder_head.1} parent=0
    _
  %s7 = ssub.s32 1, %s5
  %s8 = scalar_select 0, %s7, %s5
  %9 = sst [smem:[#allocation2]] %s3
  // Predicated region
  $region2: #{decoder_head.1} parent=0 // pred_check
    _
  $region3: #{decoder_head.1} parent=0 // pred_check_branch
    %11 = sbr.rel (0) target = $region5
  $region4: #{decoder_head.1} parent=0 // pred_region
    _
  $region5: #{decoder_head.1} parent=0 // pred_fallthru
    _
  // Predicated region
  $region6: #{decoder_head.1} parent=0 // pred_check
    _
  $region7: #{decoder_head.1} parent=0 // pred_check_branch
    %13 = sbr.rel (0) target = $region9
  $region8: #{decoder_head.1} parent=0 // pred_region
    _
  $region9: #{decoder_head.1} parent=0 // pred_fallthru
    _
  // Predicated region
  $region10: #{decoder_head.1} parent=0 // pred_check
    _
  $region11: #{decoder_head.1} parent=0 // pred_check_branch
    %15 = sbr.rel (0) target = $region13
  $region12: #{decoder_head.1} parent=0 // pred_region
    _
  $region13: #{decoder_head.1} parent=0 // pred_fallthru
    _
  // Predicated region
  $region14: #{decoder_head.1} parent=0 // pred_check
    _
  $region15: #{decoder_head.1} parent=0 // pred_check_branch
    %17 = sbr.rel (0) target = $region17
  $region16: #{decoder_head.1} parent=0 // pred_region
    _
  $region17: #{decoder_head.1} parent=0 // pred_fallthru
    _
  %v18 = vld [vmem:[%s0] sm:$0xff]
  %v19 = vld [vmem:[%s0 + $0x8] sm:$0xff]
  %v20 = vld [vmem:[%s0 + $0x10] sm:$0xff]
  %v21 = vld [vmem:[%s0 + $0x18] sm:$0xff]
  %v22 = vld [vmem:[%s0 + $0x20] sm:$0xff]
  %v23 = vld [vmem:[%s0 + $0x28] sm:$0xff]
  %v24 = vld [vmem:[%s0 + $0x30] sm:$0xff]
  %v25 = vld [vmem:[%s0 + $0x38] sm:$0xff]
  %v26 = vld [vmem:[%s0 + $0x40] sm:$0xff]
  %v27 = vld [vmem:[%s0 + $0x48] sm:$0xff]
  %v28 = vld [vmem:[%s0 + $0x50] sm:$0xff]
  %v29 = vld [vmem:[%s0 + $0x58] sm:$0xff]
  %v30 = vld [vmem:[%s0 + $0x60] sm:$0xff]
  %v31 = vld [vmem:[%s0 + $0x68] sm:$0xff]
  %v32 = vld [vmem:[%s0 + $0x70] sm:$0xff]
  %v33 = vld [vmem:[%s0 + $0x78] sm:$0xff]
  %v34 = vld [vmem:[%s0 + $0x80] sm:$0xff]
  %v35 = vld [vmem:[%s0 + $0x88] sm:$0xff]
  %v36 = vld [vmem:[%s0 + $0x90] sm:$0xff]
  %v37 = vld [vmem:[%s0 + $0x98] sm:$0xff]
  %v38 = vld [vmem:[%s0 + $0xa0] sm:$0xff]
  %v39 = vld [vmem:[%s0 + $0xa8] sm:$0xff]
  %v40 = vld [vmem:[%s0 + $0xb0] sm:$0xff]
  %v41 = vld [vmem:[%s0 + $0xb8] sm:$0xff]
  %v42 = vld [vmem:[%s0 + $0xc0] sm:$0xff]
  %v43 = vld [vmem:[%s0 + $0xc8] sm:$0xff]
  %v44 = vld [vmem:[%s0 + $0xd0] sm:$0xff]
  %v45 = vld [vmem:[%s0 + $0xd8] sm:$0xff]
  %v46 = vld [vmem:[%s0 + $0xe0] sm:$0xff]
  %v47 = vld [vmem:[%s0 + $0xe8] sm:$0xff]
  %v48 = vld [vmem:[%s0 + $0xf0] sm:$0xff]
  %v49 = vld [vmem:[%s0 + $0xf8] sm:$0xff]
  %v50 = vld [vmem:[%s0 + $0x100] sm:$0xff]
  %v51 = vld [vmem:[%s0 + $0x108] sm:$0xff]
  %v52 = vld [vmem:[%s0 + $0x110] sm:$0xff]
  %v53 = vld [vmem:[%s0 + $0x118] sm:$0xff]
  %v54 = vld [vmem:[%s1] sm:$0xff]
  %v55 = vld [vmem:[%s1 + $0x8] sm:$0xff]
  %v56 = vld [vmem:[%s1 + $0x10] sm:$0xff]
  %v57 = vld [vmem:[%s1 + $0x18] sm:$0xff]
  %v58 = vld [vmem:[%s1 + $0x20] sm:$0xff]
  %v59 = vld [vmem:[%s1 + $0x28] sm:$0xff]
  %v60 = vld [vmem:[%s1 + $0x30] sm:$0xff]
  %v61 = vld [vmem:[%s1 + $0x38] sm:$0xff]
  %v62 = vld [vmem:[%s1 + $0x40] sm:$0xff]
  %v63 = vld [vmem:[%s1 + $0x48] sm:$0xff]
  %v64 = vld [vmem:[%s1 + $0x50] sm:$0xff]
  %v65 = vld [vmem:[%s1 + $0x58] sm:$0xff]
  %v66 = vld [vmem:[%s1 + $0x60] sm:$0xff]
  %v67 = vld [vmem:[%s1 + $0x68] sm:$0xff]
  %v68 = vld [vmem:[%s1 + $0x70] sm:$0xff]
  %v69 = vld [vmem:[%s1 + $0x78] sm:$0xff]
  %v70 = vld [vmem:[%s1 + $0x80] sm:$0xff]
  %v71 = vld [vmem:[%s1 + $0x88] sm:$0xff]
  %v72 = vld [vmem:[%s1 + $0x90] sm:$0xff]
  %v73 = vld [vmem:[%s1 + $0x98] sm:$0xff]
  %v74 = vld [vmem:[%s1 + $0xa0] sm:$0xff]
  %v75 = vld [vmem:[%s1 + $0xa8] sm:$0xff]
  %v76 = vld [vmem:[%s1 + $0xb0] sm:$0xff]
  %v77 = vld [vmem:[%s1 + $0xb8] sm:$0xff]
  %v78 = vld [vmem:[%s1 + $0xc0] sm:$0xff]
  %v79 = vld [vmem:[%s1 + $0xc8] sm:$0xff]
  %v80 = vld [vmem:[%s1 + $0xd0] sm:$0xff]
  %v81 = vld [vmem:[%s1 + $0xd8] sm:$0xff]
  %v82 = vld [vmem:[%s1 + $0xe0] sm:$0xff]
  %v83 = vld [vmem:[%s1 + $0xe8] sm:$0xff]
  %v84 = vld [vmem:[%s1 + $0xf0] sm:$0xff]
  %v85 = vld [vmem:[%s1 + $0xf8] sm:$0xff]
  %v86 = vld [vmem:[%s1 + $0x100] sm:$0xff]
  %v87 = vld [vmem:[%s1 + $0x108] sm:$0xff]
  %v88 = vld [vmem:[%s1 + $0x110] sm:$0xff]
  %v89 = vld [vmem:[%s1 + $0x118] sm:$0xff]
  %v90 = vld [vmem:[%s1 + $0x120] sm:$0xff]
  %v91 = vld [vmem:[%s1 + $0x128] sm:$0xff]
  %v92 = vld [vmem:[%s1 + $0x130] sm:$0xff]
  %v93 = vld [vmem:[%s1 + $0x138] sm:$0xff]
  %v94 = vld [vmem:[%s1 + $0x140] sm:$0xff]
  %v95 = vld [vmem:[%s1 + $0x148] sm:$0xff]
  %v96 = vld [vmem:[%s1 + $0x150] sm:$0xff]
  %v97 = vld [vmem:[%s1 + $0x158] sm:$0xff]
  %v98 = vld [vmem:[%s1 + $0x160] sm:$0xff]
  %v99 = vld [vmem:[%s1 + $0x168] sm:$0xff]
  %v100 = vld [vmem:[%s1 + $0x170] sm:$0xff]
  %v101 = vld [vmem:[%s1 + $0x178] sm:$0xff]
  %v102 = vld [vmem:[%s1 + $0x180] sm:$0xff]
  %v103 = vld [vmem:[%s1 + $0x188] sm:$0xff]
  %v104 = vld [vmem:[%s1 + $0x190] sm:$0xff]
  %v105 = vld [vmem:[%s1 + $0x198] sm:$0xff]
  %v106 = vld [vmem:[%s1 + $0x1a0] sm:$0xff]
  %v107 = vld [vmem:[%s1 + $0x1a8] sm:$0xff]
  %v108 = vld [vmem:[%s1 + $0x1b0] sm:$0xff]
  %v109 = vld [vmem:[%s1 + $0x1b8] sm:$0xff]
  %v110 = vld [vmem:[%s1 + $0x1c0] sm:$0xff]
  %v111 = vld [vmem:[%s1 + $0x1c8] sm:$0xff]
  %v112 = vld [vmem:[%s1 + $0x1d0] sm:$0xff]
  %v113 = vld [vmem:[%s1 + $0x1d8] sm:$0xff]
  %v114 = vld [vmem:[%s1 + $0x1e0] sm:$0xff]
  %v115 = vld [vmem:[%s1 + $0x1e8] sm:$0xff]
  %v116 = vld [vmem:[%s1 + $0x1f0] sm:$0xff]
  %v117 = vld [vmem:[%s1 + $0x1f8] sm:$0xff]
  %v118 = vld [vmem:[%s1 + $0x200] sm:$0xff]
  %v119 = vld [vmem:[%s1 + $0x208] sm:$0xff]
  %v120 = vld [vmem:[%s1 + $0x210] sm:$0xff]
  %v121 = vld [vmem:[%s1 + $0x218] sm:$0xff]
  %v122 = vld [vmem:[%s1 + $0x220] sm:$0xff]
  %v123 = vld [vmem:[%s1 + $0x228] sm:$0xff]
  %v124 = vld [vmem:[%s1 + $0x230] sm:$0xff]
  %v125 = vld [vmem:[%s1 + $0x238] sm:$0xff]
  %v126 = vld [vmem:[%s1 + $0x240] sm:$0xff]
  %v127 = vld [vmem:[%s1 + $0x248] sm:$0xff]
  %v128 = vld [vmem:[%s1 + $0x250] sm:$0xff]
  %v129 = vld [vmem:[%s1 + $0x258] sm:$0xff]
  %v130 = vld [vmem:[%s1 + $0x260] sm:$0xff]
  %v131 = vld [vmem:[%s1 + $0x268] sm:$0xff]
  %v132 = vld [vmem:[%s1 + $0x270] sm:$0xff]
  %v133 = vld [vmem:[%s1 + $0x278] sm:$0xff]
  %v134 = vld [vmem:[%s1 + $0x280] sm:$0xff]
  %v135 = vld [vmem:[%s1 + $0x288] sm:$0xff]
  %v136 = vld [vmem:[%s1 + $0x290] sm:$0xff]
  %v137 = vld [vmem:[%s1 + $0x298] sm:$0xff]
  %v138 = vld [vmem:[%s1 + $0x2a0] sm:$0xff]
  %v139 = vld [vmem:[%s1 + $0x2a8] sm:$0xff]
  %v140 = vld [vmem:[%s1 + $0x2b0] sm:$0xff]
  %v141 = vld [vmem:[%s1 + $0x2b8] sm:$0xff]
  %v142 = vld [vmem:[%s1 + $0x2c0] sm:$0xff]
  %v143 = vld [vmem:[%s1 + $0x2c8] sm:$0xff]
  %v144 = vld [vmem:[%s1 + $0x2d0] sm:$0xff]
  %v145 = vld [vmem:[%s1 + $0x2d8] sm:$0xff]
  %v146 = vld [vmem:[%s1 + $0x2e0] sm:$0xff]
  %v147 = vld [vmem:[%s1 + $0x2e8] sm:$0xff]
  %v148 = vld [vmem:[%s1 + $0x2f0] sm:$0xff]
  %v149 = vld [vmem:[%s1 + $0x2f8] sm:$0xff]
  %v150 = vld [vmem:[%s1 + $0x300] sm:$0xff]
  %v151 = vld [vmem:[%s1 + $0x308] sm:$0xff]
  %v152 = vld [vmem:[%s1 + $0x310] sm:$0xff]
  %v153 = vld [vmem:[%s1 + $0x318] sm:$0xff]
  %v154 = vld [vmem:[%s1 + $0x320] sm:$0xff]
  %v155 = vld [vmem:[%s1 + $0x328] sm:$0xff]
  %v156 = vld [vmem:[%s1 + $0x330] sm:$0xff]
  %v157 = vld [vmem:[%s1 + $0x338] sm:$0xff]
  %v158 = vld [vmem:[%s1 + $0x340] sm:$0xff]
  %v159 = vld [vmem:[%s1 + $0x348] sm:$0xff]
  %v160 = vld [vmem:[%s1 + $0x350] sm:$0xff]
  %v161 = vld [vmem:[%s1 + $0x358] sm:$0xff]
  %v162 = vld [vmem:[%s1 + $0x360] sm:$0xff]
  %v163 = vld [vmem:[%s1 + $0x368] sm:$0xff]
  %v164 = vld [vmem:[%s1 + $0x370] sm:$0xff]
  %v165 = vld [vmem:[%s1 + $0x378] sm:$0xff]
  %v166 = vld [vmem:[%s1 + $0x380] sm:$0xff]
  %v167 = vld [vmem:[%s1 + $0x388] sm:$0xff]
  %v168 = vld [vmem:[%s1 + $0x390] sm:$0xff]
  %v169 = vld [vmem:[%s1 + $0x398] sm:$0xff]
  %v170 = vld [vmem:[%s1 + $0x3a0] sm:$0xff]
  %v171 = vld [vmem:[%s1 + $0x3a8] sm:$0xff]
  %v172 = vld [vmem:[%s1 + $0x3b0] sm:$0xff]
  %v173 = vld [vmem:[%s1 + $0x3b8] sm:$0xff]
  %v174 = vld [vmem:[%s1 + $0x3c0] sm:$0xff]
  %v175 = vld [vmem:[%s1 + $0x3c8] sm:$0xff]
  %v176 = vld [vmem:[%s1 + $0x3d0] sm:$0xff]
  %v177 = vld [vmem:[%s1 + $0x3d8] sm:$0xff]
  %v178 = vld [vmem:[%s1 + $0x3e0] sm:$0xff]
  %v179 = vld [vmem:[%s1 + $0x3e8] sm:$0xff]
  %v180 = vld [vmem:[%s1 + $0x3f0] sm:$0xff]
  %v181 = vld [vmem:[%s1 + $0x3f8] sm:$0xff]
  %v182 = vld [vmem:[%s1 + $0x400] sm:$0xff]
  %v183 = vld [vmem:[%s1 + $0x408] sm:$0xff]
  %v184 = vld [vmem:[%s1 + $0x410] sm:$0xff]
  %v185 = vld [vmem:[%s1 + $0x418] sm:$0xff]
  %v186 = vld [vmem:[%s1 + $0x420] sm:$0xff]
  %v187 = vld [vmem:[%s1 + $0x428] sm:$0xff]
  %v188 = vld [vmem:[%s1 + $0x430] sm:$0xff]
  %v189 = vld [vmem:[%s1 + $0x438] sm:$0xff]
  %v190 = vld [vmem:[%s1 + $0x440] sm:$0xff]
  %v191 = vld [vmem:[%s1 + $0x448] sm:$0xff]
  %v192 = vld [vmem:[%s1 + $0x450] sm:$0xff]
  %v193 = vld [vmem:[%s1 + $0x458] sm:$0xff]
  %v194 = vld [vmem:[%s1 + $0x460] sm:$0xff]
  %v195 = vld [vmem:[%s1 + $0x468] sm:$0xff]
  %v196 = vld [vmem:[%s1 + $0x470] sm:$0xff]
  %v197 = vld [vmem:[%s1 + $0x478] sm:$0xff]
  %v198 = vld [vmem:[%s1 + $0x480] sm:$0xff]
  %v199 = vld [vmem:[%s1 + $0x488] sm:$0xff]
  %v200 = vld [vmem:[%s1 + $0x490] sm:$0xff]
  %v201 = vld [vmem:[%s1 + $0x498] sm:$0xff]
  %v202 = vld [vmem:[%s1 + $0x4a0] sm:$0xff]
  %v203 = vld [vmem:[%s1 + $0x4a8] sm:$0xff]
  %v204 = vld [vmem:[%s1 + $0x4b0] sm:$0xff]
  %v205 = vld [vmem:[%s1 + $0x4b8] sm:$0xff]
  %v206 = vld [vmem:[%s1 + $0x4c0] sm:$0xff]
  %v207 = vld [vmem:[%s1 + $0x4c8] sm:$0xff]
  %v208 = vld [vmem:[%s1 + $0x4d0] sm:$0xff]
  %v209 = vld [vmem:[%s1 + $0x4d8] sm:$0xff]
  %v210 = vld [vmem:[%s1 + $0x4e0] sm:$0xff]
  %v211 = vld [vmem:[%s1 + $0x4e8] sm:$0xff]
  %v212 = vld [vmem:[%s1 + $0x4f0] sm:$0xff]
  %v213 = vld [vmem:[%s1 + $0x4f8] sm:$0xff]
  %v214 = vld [vmem:[%s1 + $0x500] sm:$0xff]
  %v215 = vld [vmem:[%s1 + $0x508] sm:$0xff]
  %v216 = vld [vmem:[%s1 + $0x510] sm:$0xff]
  %v217 = vld [vmem:[%s1 + $0x518] sm:$0xff]
  %v218 = vld [vmem:[%s1 + $0x520] sm:$0xff]
  %v219 = vld [vmem:[%s1 + $0x528] sm:$0xff]
  %v220 = vld [vmem:[%s1 + $0x530] sm:$0xff]
  %v221 = vld [vmem:[%s1 + $0x538] sm:$0xff]
  %v222 = vld [vmem:[%s1 + $0x540] sm:$0xff]
  %v223 = vld [vmem:[%s1 + $0x548] sm:$0xff]
  %v224 = vld [vmem:[%s1 + $0x550] sm:$0xff]
  %v225 = vld [vmem:[%s1 + $0x558] sm:$0xff]
  %v226 = vld [vmem:[%s1 + $0x560] sm:$0xff]
  %v227 = vld [vmem:[%s1 + $0x568] sm:$0xff]
  %v228 = vld [vmem:[%s1 + $0x570] sm:$0xff]
  %v229 = vld [vmem:[%s1 + $0x578] sm:$0xff]
  %v230 = vld [vmem:[%s1 + $0x580] sm:$0xff]
  %v231 = vld [vmem:[%s1 + $0x588] sm:$0xff]
  %v232 = vld [vmem:[%s1 + $0x590] sm:$0xff]
  %v233 = vld [vmem:[%s1 + $0x598] sm:$0xff]
  %v234 = vld [vmem:[%s1 + $0x5a0] sm:$0xff]
  %v235 = vld [vmem:[%s1 + $0x5a8] sm:$0xff]
  %v236 = vld [vmem:[%s1 + $0x5b0] sm:$0xff]
  %v237 = vld [vmem:[%s1 + $0x5b8] sm:$0xff]
  %v238 = vld [vmem:[%s1 + $0x5c0] sm:$0xff]
  %v239 = vld [vmem:[%s1 + $0x5c8] sm:$0xff]
  %v240 = vld [vmem:[%s1 + $0x5d0] sm:$0xff]
  %v241 = vld [vmem:[%s1 + $0x5d8] sm:$0xff]
  %v242 = vld [vmem:[%s1 + $0x5e0] sm:$0xff]
  %v243 = vld [vmem:[%s1 + $0x5e8] sm:$0xff]
  %v244 = vld [vmem:[%s1 + $0x5f0] sm:$0xff]
  %v245 = vld [vmem:[%s1 + $0x5f8] sm:$0xff]
  %v246 = vld [vmem:[%s1 + $0x600] sm:$0xff]
  %v247 = vld [vmem:[%s1 + $0x608] sm:$0xff]
  %v248 = vld [vmem:[%s1 + $0x610] sm:$0xff]
  %v249 = vld [vmem:[%s1 + $0x618] sm:$0xff]
  %v250 = vld [vmem:[%s1 + $0x620] sm:$0xff]
  %v251 = vld [vmem:[%s1 + $0x628] sm:$0xff]
  %v252 = vld [vmem:[%s1 + $0x630] sm:$0xff]
  %v253 = vld [vmem:[%s1 + $0x638] sm:$0xff]
  %v254 = vld [vmem:[%s1 + $0x640] sm:$0xff]
  %v255 = vld [vmem:[%s1 + $0x648] sm:$0xff]
  %v256 = vld [vmem:[%s1 + $0x650] sm:$0xff]
  %v257 = vld [vmem:[%s1 + $0x658] sm:$0xff]
  %v258 = vld [vmem:[%s1 + $0x660] sm:$0xff]
  %v259 = vld [vmem:[%s1 + $0x668] sm:$0xff]
  %v260 = vld [vmem:[%s1 + $0x670] sm:$0xff]
  %v261 = vld [vmem:[%s1 + $0x678] sm:$0xff]
  %v262 = vld [vmem:[%s1 + $0x680] sm:$0xff]
  %v263 = vld [vmem:[%s1 + $0x688] sm:$0xff]
  %v264 = vld [vmem:[%s1 + $0x690] sm:$0xff]
  %v265 = vld [vmem:[%s1 + $0x698] sm:$0xff]
  %v266 = vld [vmem:[%s1 + $0x6a0] sm:$0xff]
  %v267 = vld [vmem:[%s1 + $0x6a8] sm:$0xff]
  %v268 = vld [vmem:[%s1 + $0x6b0] sm:$0xff]
  %v269 = vld [vmem:[%s1 + $0x6b8] sm:$0xff]
  %v270 = vld [vmem:[%s1 + $0x6c0] sm:$0xff]
  %v271 = vld [vmem:[%s1 + $0x6c8] sm:$0xff]
  %v272 = vld [vmem:[%s1 + $0x6d0] sm:$0xff]
  %v273 = vld [vmem:[%s1 + $0x6d8] sm:$0xff]
  %v274 = vld [vmem:[%s1 + $0x6e0] sm:$0xff]
  %v275 = vld [vmem:[%s1 + $0x6e8] sm:$0xff]
  %v276 = vld [vmem:[%s1 + $0x6f0] sm:$0xff]
  %v277 = vld [vmem:[%s1 + $0x6f8] sm:$0xff]
  %v278 = vld [vmem:[%s1 + $0x700] sm:$0xff]
  %v279 = vld [vmem:[%s1 + $0x708] sm:$0xff]
  %v280 = vld [vmem:[%s1 + $0x710] sm:$0xff]
  %v281 = vld [vmem:[%s1 + $0x718] sm:$0xff]
  %v282 = vld [vmem:[%s1 + $0x720] sm:$0xff]
  %v283 = vld [vmem:[%s1 + $0x728] sm:$0xff]
  %v284 = vld [vmem:[%s1 + $0x730] sm:$0xff]
  %v285 = vld [vmem:[%s1 + $0x738] sm:$0xff]
  %v286 = vld [vmem:[%s1 + $0x740] sm:$0xff]
  %v287 = vld [vmem:[%s1 + $0x748] sm:$0xff]
  %v288 = vld [vmem:[%s1 + $0x750] sm:$0xff]
  %v289 = vld [vmem:[%s1 + $0x758] sm:$0xff]
  %v290 = vld [vmem:[%s1 + $0x760] sm:$0xff]
  %v291 = vld [vmem:[%s1 + $0x768] sm:$0xff]
  %v292 = vld [vmem:[%s1 + $0x770] sm:$0xff]
  %v293 = vld [vmem:[%s1 + $0x778] sm:$0xff]
  %v294 = vld [vmem:[%s1 + $0x780] sm:$0xff]
  %v295 = vld [vmem:[%s1 + $0x788] sm:$0xff]
  %v296 = vld [vmem:[%s1 + $0x790] sm:$0xff]
  %v297 = vld [vmem:[%s1 + $0x798] sm:$0xff]
  %v298 = vld [vmem:[%s1 + $0x7a0] sm:$0xff]
  %v299 = vld [vmem:[%s1 + $0x7a8] sm:$0xff]
  %v300 = vld [vmem:[%s1 + $0x7b0] sm:$0xff]
  %v301 = vld [vmem:[%s1 + $0x7b8] sm:$0xff]
  %v302 = vld [vmem:[%s1 + $0x7c0] sm:$0xff]
  %v303 = vld [vmem:[%s1 + $0x7c8] sm:$0xff]
  %v304 = vld [vmem:[%s1 + $0x7d0] sm:$0xff]
  %v305 = vld [vmem:[%s1 + $0x7d8] sm:$0xff]
  %v306 = vld [vmem:[%s1 + $0x7e0] sm:$0xff]
  %v307 = vld [vmem:[%s1 + $0x7e8] sm:$0xff]
  %v308 = vld [vmem:[%s1 + $0x7f0] sm:$0xff]
  %v309 = vld [vmem:[%s1 + $0x7f8] sm:$0xff]
  %v310 = vld [vmem:[%s1 + $0x800] sm:$0xff]
  %v311 = vld [vmem:[%s1 + $0x808] sm:$0xff]
  %v312 = vld [vmem:[%s1 + $0x810] sm:$0xff]
  %v313 = vld [vmem:[%s1 + $0x818] sm:$0xff]
  %v314 = vld [vmem:[%s1 + $0x820] sm:$0xff]
  %v315 = vld [vmem:[%s1 + $0x828] sm:$0xff]
  %v316 = vld [vmem:[%s1 + $0x830] sm:$0xff]
  %v317 = vld [vmem:[%s1 + $0x838] sm:$0xff]
  %v318 = vld [vmem:[%s1 + $0x840] sm:$0xff]
  %v319 = vld [vmem:[%s1 + $0x848] sm:$0xff]
  %v320 = vld [vmem:[%s1 + $0x850] sm:$0xff]
  %v321 = vld [vmem:[%s1 + $0x858] sm:$0xff]
  %v322 = vld [vmem:[%s1 + $0x860] sm:$0xff]
  %v323 = vld [vmem:[%s1 + $0x868] sm:$0xff]
  %v324 = vld [vmem:[%s1 + $0x870] sm:$0xff]
  %v325 = vld [vmem:[%s1 + $0x878] sm:$0xff]
  %v326 = vld [vmem:[%s1 + $0x880] sm:$0xff]
  %v327 = vld [vmem:[%s1 + $0x888] sm:$0xff]
  %v328 = vld [vmem:[%s1 + $0x890] sm:$0xff]
  %v329 = vld [vmem:[%s1 + $0x898] sm:$0xff]
  %v330 = vld [vmem:[%s1 + $0x8a0] sm:$0xff]
  %v331 = vld [vmem:[%s1 + $0x8a8] sm:$0xff]
  %v332 = vld [vmem:[%s1 + $0x8b0] sm:$0xff]
  %v333 = vld [vmem:[%s1 + $0x8b8] sm:$0xff]
  %v334 = vld [vmem:[%s1 + $0x8c0] sm:$0xff]
  %v335 = vld [vmem:[%s1 + $0x8c8] sm:$0xff]
  %v336 = vld [vmem:[%s1 + $0x8d0] sm:$0xff]
  %v337 = vld [vmem:[%s1 + $0x8d8] sm:$0xff]
  %v338 = vld [vmem:[%s1 + $0x8e0] sm:$0xff]
  %v339 = vld [vmem:[%s1 + $0x8e8] sm:$0xff]
  %v340 = vld [vmem:[%s1 + $0x8f0] sm:$0xff]
  %v341 = vld [vmem:[%s1 + $0x8f8] sm:$0xff]
  %v342 = vld [vmem:[%s1 + $0x900] sm:$0xff]
  %v343 = vld [vmem:[%s1 + $0x908] sm:$0xff]
  %v344 = vld [vmem:[%s1 + $0x910] sm:$0xff]
  %v345 = vld [vmem:[%s1 + $0x918] sm:$0xff]
  %v346 = vld [vmem:[%s1 + $0x920] sm:$0xff]
  %v347 = vld [vmem:[%s1 + $0x928] sm:$0xff]
  %v348 = vld [vmem:[%s1 + $0x930] sm:$0xff]
  %v349 = vld [vmem:[%s1 + $0x938] sm:$0xff]
  %v350 = vld [vmem:[%s1 + $0x940] sm:$0xff]
  %v351 = vld [vmem:[%s1 + $0x948] sm:$0xff]
  %v352 = vld [vmem:[%s1 + $0x950] sm:$0xff]
  %v353 = vld [vmem:[%s1 + $0x958] sm:$0xff]
  %v354 = vld [vmem:[%s1 + $0x960] sm:$0xff]
  %v355 = vld [vmem:[%s1 + $0x968] sm:$0xff]
  %v356 = vld [vmem:[%s1 + $0x970] sm:$0xff]
  %v357 = vld [vmem:[%s1 + $0x978] sm:$0xff]
  %v358 = vld [vmem:[%s1 + $0x980] sm:$0xff]
  %v359 = vld [vmem:[%s1 + $0x988] sm:$0xff]
  %v360 = vld [vmem:[%s1 + $0x990] sm:$0xff]
  %v361 = vld [vmem:[%s1 + $0x998] sm:$0xff]
  %v362 = vld [vmem:[%s1 + $0x9a0] sm:$0xff]
  %v363 = vld [vmem:[%s1 + $0x9a8] sm:$0xff]
  %v364 = vld [vmem:[%s1 + $0x9b0] sm:$0xff]
  %v365 = vld [vmem:[%s1 + $0x9b8] sm:$0xff]
  %v366 = vld [vmem:[%s1 + $0x9c0] sm:$0xff]
  %v367 = vld [vmem:[%s1 + $0x9c8] sm:$0xff]
  %v368 = vld [vmem:[%s1 + $0x9d0] sm:$0xff]
  %v369 = vld [vmem:[%s1 + $0x9d8] sm:$0xff]
  %v370 = vld [vmem:[%s1 + $0x9e0] sm:$0xff]
  %v371 = vld [vmem:[%s1 + $0x9e8] sm:$0xff]
  %v372 = vld [vmem:[%s1 + $0x9f0] sm:$0xff]
  %v373 = vld [vmem:[%s1 + $0x9f8] sm:$0xff]
  %v374 = vld [vmem:[%s1 + $0xa00] sm:$0xff]
  %v375 = vld [vmem:[%s1 + $0xa08] sm:$0xff]
  %v376 = vld [vmem:[%s1 + $0xa10] sm:$0xff]
  %v377 = vld [vmem:[%s1 + $0xa18] sm:$0xff]
  %v378 = vld [vmem:[%s1 + $0xa20] sm:$0xff]
  %v379 = vld [vmem:[%s1 + $0xa28] sm:$0xff]
  %v380 = vld [vmem:[%s1 + $0xa30] sm:$0xff]
  %v381 = vld [vmem:[%s1 + $0xa38] sm:$0xff]
  %v382 = vld [vmem:[%s1 + $0xa40] sm:$0xff]
  %v383 = vld [vmem:[%s1 + $0xa48] sm:$0xff]
  %v384 = vld [vmem:[%s1 + $0xa50] sm:$0xff]
  %v385 = vld [vmem:[%s1 + $0xa58] sm:$0xff]
  %v386 = vld [vmem:[%s1 + $0xa60] sm:$0xff]
  %v387 = vld [vmem:[%s1 + $0xa68] sm:$0xff]
  %v388 = vld [vmem:[%s1 + $0xa70] sm:$0xff]
  %v389 = vld [vmem:[%s1 + $0xa78] sm:$0xff]
  %v390 = vld [vmem:[%s1 + $0xa80] sm:$0xff]
  %v391 = vld [vmem:[%s1 + $0xa88] sm:$0xff]
  %v392 = vld [vmem:[%s1 + $0xa90] sm:$0xff]
  %v393 = vld [vmem:[%s1 + $0xa98] sm:$0xff]
  %v394 = vld [vmem:[%s1 + $0xaa0] sm:$0xff]
  %v395 = vld [vmem:[%s1 + $0xaa8] sm:$0xff]
  %v396 = vld [vmem:[%s1 + $0xab0] sm:$0xff]
  %v397 = vld [vmem:[%s1 + $0xab8] sm:$0xff]
  %v398 = vld [vmem:[%s1 + $0xac0] sm:$0xff]
  %v399 = vld [vmem:[%s1 + $0xac8] sm:$0xff]
  %v400 = vld [vmem:[%s1 + $0xad0] sm:$0xff]
  %v401 = vld [vmem:[%s1 + $0xad8] sm:$0xff]
  %v402 = vld [vmem:[%s1 + $0xae0] sm:$0xff]
  %v403 = vld [vmem:[%s1 + $0xae8] sm:$0xff]
  %v404 = vld [vmem:[%s1 + $0xaf0] sm:$0xff]
  %v405 = vld [vmem:[%s1 + $0xaf8] sm:$0xff]
  %v406 = vld [vmem:[%s1 + $0xb00] sm:$0xff]
  %v407 = vld [vmem:[%s1 + $0xb08] sm:$0xff]
  %v408 = vld [vmem:[%s1 + $0xb10] sm:$0xff]
  %v409 = vld [vmem:[%s1 + $0xb18] sm:$0xff]
  %v410 = vld [vmem:[%s1 + $0xb20] sm:$0xff]
  %v411 = vld [vmem:[%s1 + $0xb28] sm:$0xff]
  %v412 = vld [vmem:[%s1 + $0xb30] sm:$0xff]
  %v413 = vld [vmem:[%s1 + $0xb38] sm:$0xff]
  %v414 = vld [vmem:[%s1 + $0xb40] sm:$0xff]
  %v415 = vld [vmem:[%s1 + $0xb48] sm:$0xff]
  %v416 = vld [vmem:[%s1 + $0xb50] sm:$0xff]
  %v417 = vld [vmem:[%s1 + $0xb58] sm:$0xff]
  %v418 = vld [vmem:[%s1 + $0xb60] sm:$0xff]
  %v419 = vld [vmem:[%s1 + $0xb68] sm:$0xff]
  %v420 = vld [vmem:[%s1 + $0xb70] sm:$0xff]
  %v421 = vld [vmem:[%s1 + $0xb78] sm:$0xff]
  %v422 = vld [vmem:[%s1 + $0xb80] sm:$0xff]
  %v423 = vld [vmem:[%s1 + $0xb88] sm:$0xff]
  %v424 = vld [vmem:[%s1 + $0xb90] sm:$0xff]
  %v425 = vld [vmem:[%s1 + $0xb98] sm:$0xff]
  %v426 = vld [vmem:[%s1 + $0xba0] sm:$0xff]
  %v427 = vld [vmem:[%s1 + $0xba8] sm:$0xff]
  %v428 = vld [vmem:[%s1 + $0xbb0] sm:$0xff]
  %v429 = vld [vmem:[%s1 + $0xbb8] sm:$0xff]
  %v430 = vld [vmem:[%s1 + $0xbc0] sm:$0xff]
  %v431 = vld [vmem:[%s1 + $0xbc8] sm:$0xff]
  %v432 = vld [vmem:[%s1 + $0xbd0] sm:$0xff]
  %v433 = vld [vmem:[%s1 + $0xbd8] sm:$0xff]
  %v434 = vld [vmem:[%s1 + $0xbe0] sm:$0xff]
  %v435 = vld [vmem:[%s1 + $0xbe8] sm:$0xff]
  %v436 = vld [vmem:[%s1 + $0xbf0] sm:$0xff]
  %v437 = vld [vmem:[%s1 + $0xbf8] sm:$0xff]
  %v438 = vld [vmem:[%s1 + $0xc00] sm:$0xff]
  %v439 = vld [vmem:[%s1 + $0xc08] sm:$0xff]
  %v440 = vld [vmem:[%s1 + $0xc10] sm:$0xff]
  %v441 = vld [vmem:[%s1 + $0xc18] sm:$0xff]
  %v442 = vld [vmem:[%s1 + $0xc20] sm:$0xff]
  %v443 = vld [vmem:[%s1 + $0xc28] sm:$0xff]
  %v444 = vld [vmem:[%s1 + $0xc30] sm:$0xff]
  %v445 = vld [vmem:[%s1 + $0xc38] sm:$0xff]
  %v446 = vld [vmem:[%s1 + $0xc40] sm:$0xff]
  %v447 = vld [vmem:[%s1 + $0xc48] sm:$0xff]
  %v448 = vld [vmem:[%s1 + $0xc50] sm:$0xff]
  %v449 = vld [vmem:[%s1 + $0xc58] sm:$0xff]
  %v450 = vld [vmem:[%s1 + $0xc60] sm:$0xff]
  %v451 = vld [vmem:[%s1 + $0xc68] sm:$0xff]
  %v452 = vld [vmem:[%s1 + $0xc70] sm:$0xff]
  %v453 = vld [vmem:[%s1 + $0xc78] sm:$0xff]
  %v454 = vld [vmem:[%s1 + $0xc80] sm:$0xff]
  %v455 = vld [vmem:[%s1 + $0xc88] sm:$0xff]
  %v456 = vld [vmem:[%s1 + $0xc90] sm:$0xff]
  %v457 = vld [vmem:[%s1 + $0xc98] sm:$0xff]
  %v458 = vld [vmem:[%s1 + $0xca0] sm:$0xff]
  %v459 = vld [vmem:[%s1 + $0xca8] sm:$0xff]
  %v460 = vld [vmem:[%s1 + $0xcb0] sm:$0xff]
  %v461 = vld [vmem:[%s1 + $0xcb8] sm:$0xff]
  %v462 = vld [vmem:[%s1 + $0xcc0] sm:$0xff]
  %v463 = vld [vmem:[%s1 + $0xcc8] sm:$0xff]
  %v464 = vld [vmem:[%s1 + $0xcd0] sm:$0xff]
  %v465 = vld [vmem:[%s1 + $0xcd8] sm:$0xff]
  %v466 = vld [vmem:[%s1 + $0xce0] sm:$0xff]
  %v467 = vld [vmem:[%s1 + $0xce8] sm:$0xff]
  %v468 = vld [vmem:[%s1 + $0xcf0] sm:$0xff]
  %v469 = vld [vmem:[%s1 + $0xcf8] sm:$0xff]
  %v470 = vld [vmem:[%s1 + $0xd00] sm:$0xff]
  %v471 = vld [vmem:[%s1 + $0xd08] sm:$0xff]
  %v472 = vld [vmem:[%s1 + $0xd10] sm:$0xff]
  %v473 = vld [vmem:[%s1 + $0xd18] sm:$0xff]
  %v474 = vld [vmem:[%s1 + $0xd20] sm:$0xff]
  %v475 = vld [vmem:[%s1 + $0xd28] sm:$0xff]
  %v476 = vld [vmem:[%s1 + $0xd30] sm:$0xff]
  %v477 = vld [vmem:[%s1 + $0xd38] sm:$0xff]
  %v478 = vld [vmem:[%s1 + $0xd40] sm:$0xff]
  %v479 = vld [vmem:[%s1 + $0xd48] sm:$0xff]
  %v480 = vld [vmem:[%s1 + $0xd50] sm:$0xff]
  %v481 = vld [vmem:[%s1 + $0xd58] sm:$0xff]
  %v482 = vld [vmem:[%s1 + $0xd60] sm:$0xff]
  %v483 = vld [vmem:[%s1 + $0xd68] sm:$0xff]
  %v484 = vld [vmem:[%s1 + $0xd70] sm:$0xff]
  %v485 = vld [vmem:[%s1 + $0xd78] sm:$0xff]
  %v486 = vld [vmem:[%s1 + $0xd80] sm:$0xff]
  %v487 = vld [vmem:[%s1 + $0xd88] sm:$0xff]
  %v488 = vld [vmem:[%s1 + $0xd90] sm:$0xff]
  %v489 = vld [vmem:[%s1 + $0xd98] sm:$0xff]
  %v490 = vld [vmem:[%s1 + $0xda0] sm:$0xff]
  %v491 = vld [vmem:[%s1 + $0xda8] sm:$0xff]
  %v492 = vld [vmem:[%s1 + $0xdb0] sm:$0xff]
  %v493 = vld [vmem:[%s1 + $0xdb8] sm:$0xff]
  %v494 = vld [vmem:[%s1 + $0xdc0] sm:$0xff]
  %v495 = vld [vmem:[%s1 + $0xdc8] sm:$0xff]
  %v496 = vld [vmem:[%s1 + $0xdd0] sm:$0xff]
  %v497 = vld [vmem:[%s1 + $0xdd8] sm:$0xff]
  %v498 = vld [vmem:[%s1 + $0xde0] sm:$0xff]
  %v499 = vld [vmem:[%s1 + $0xde8] sm:$0xff]
  %v500 = vld [vmem:[%s1 + $0xdf0] sm:$0xff]
  %v501 = vld [vmem:[%s1 + $0xdf8] sm:$0xff]
  %v502 = vld [vmem:[%s1 + $0xe00] sm:$0xff]
  %v503 = vld [vmem:[%s1 + $0xe08] sm:$0xff]
  %v504 = vld [vmem:[%s1 + $0xe10] sm:$0xff]
  %v505 = vld [vmem:[%s1 + $0xe18] sm:$0xff]
  %v506 = vld [vmem:[%s1 + $0xe20] sm:$0xff]
  %v507 = vld [vmem:[%s1 + $0xe28] sm:$0xff]
  %v508 = vld [vmem:[%s1 + $0xe30] sm:$0xff]
  %v509 = vld [vmem:[%s1 + $0xe38] sm:$0xff]
  %v510 = vld [vmem:[%s1 + $0xe40] sm:$0xff]
  %v511 = vld [vmem:[%s1 + $0xe48] sm:$0xff]
  %v512 = vld [vmem:[%s1 + $0xe50] sm:$0xff]
  %v513 = vld [vmem:[%s1 + $0xe58] sm:$0xff]
  %v514 = vld [vmem:[%s1 + $0xe60] sm:$0xff]
  %v515 = vld [vmem:[%s1 + $0xe68] sm:$0xff]
  %v516 = vld [vmem:[%s1 + $0xe70] sm:$0xff]
  %v517 = vld [vmem:[%s1 + $0xe78] sm:$0xff]
  %v518 = vld [vmem:[%s1 + $0xe80] sm:$0xff]
  %v519 = vld [vmem:[%s1 + $0xe88] sm:$0xff]
  %v520 = vld [vmem:[%s1 + $0xe90] sm:$0xff]
  %v521 = vld [vmem:[%s1 + $0xe98] sm:$0xff]
  %v522 = vld [vmem:[%s1 + $0xea0] sm:$0xff]
  %v523 = vld [vmem:[%s1 + $0xea8] sm:$0xff]
  %v524 = vld [vmem:[%s1 + $0xeb0] sm:$0xff]
  %v525 = vld [vmem:[%s1 + $0xeb8] sm:$0xff]
  %v526 = vld [vmem:[%s1 + $0xec0] sm:$0xff]
  %v527 = vld [vmem:[%s1 + $0xec8] sm:$0xff]
  %v528 = vld [vmem:[%s1 + $0xed0] sm:$0xff]
  %v529 = vld [vmem:[%s1 + $0xed8] sm:$0xff]
  %v530 = vld [vmem:[%s1 + $0xee0] sm:$0xff]
  %v531 = vld [vmem:[%s1 + $0xee8] sm:$0xff]
  %v532 = vld [vmem:[%s1 + $0xef0] sm:$0xff]
  %v533 = vld [vmem:[%s1 + $0xef8] sm:$0xff]
  %v534 = vld [vmem:[%s1 + $0xf00] sm:$0xff]
  %v535 = vld [vmem:[%s1 + $0xf08] sm:$0xff]
  %v536 = vld [vmem:[%s1 + $0xf10] sm:$0xff]
  %v537 = vld [vmem:[%s1 + $0xf18] sm:$0xff]
  %v538 = vld [vmem:[%s1 + $0xf20] sm:$0xff]
  %v539 = vld [vmem:[%s1 + $0xf28] sm:$0xff]
  %v540 = vld [vmem:[%s1 + $0xf30] sm:$0xff]
  %v541 = vld [vmem:[%s1 + $0xf38] sm:$0xff]
  %v542 = vld [vmem:[%s1 + $0xf40] sm:$0xff]
  %v543 = vld [vmem:[%s1 + $0xf48] sm:$0xff]
  %v544 = vld [vmem:[%s1 + $0xf50] sm:$0xff]
  %v545 = vld [vmem:[%s1 + $0xf58] sm:$0xff]
  %v546 = vld [vmem:[%s1 + $0xf60] sm:$0xff]
  %v547 = vld [vmem:[%s1 + $0xf68] sm:$0xff]
  %v548 = vld [vmem:[%s1 + $0xf70] sm:$0xff]
  %v549 = vld [vmem:[%s1 + $0xf78] sm:$0xff]
  %v550 = vld [vmem:[%s1 + $0xf80] sm:$0xff]
  %v551 = vld [vmem:[%s1 + $0xf88] sm:$0xff]
  %v552 = vld [vmem:[%s1 + $0xf90] sm:$0xff]
  %v553 = vld [vmem:[%s1 + $0xf98] sm:$0xff]
  %v554 = vld [vmem:[%s1 + $0xfa0] sm:$0xff]
  %v555 = vld [vmem:[%s1 + $0xfa8] sm:$0xff]
  %v556 = vld [vmem:[%s1 + $0xfb0] sm:$0xff]
  %v557 = vld [vmem:[%s1 + $0xfb8] sm:$0xff]
  %v558 = vld [vmem:[%s1 + $0xfc0] sm:$0xff]
  %v559 = vld [vmem:[%s1 + $0xfc8] sm:$0xff]
  %v560 = vld [vmem:[%s1 + $0xfd0] sm:$0xff]
  %v561 = vld [vmem:[%s1 + $0xfd8] sm:$0xff]
  %v562 = vld [vmem:[%s1 + $0xfe0] sm:$0xff]
  %v563 = vld [vmem:[%s1 + $0xfe8] sm:$0xff]
  %v564 = vld [vmem:[%s1 + $0xff0] sm:$0xff]
  %v565 = vld [vmem:[%s1 + $0xff8] sm:$0xff]
  %v566 = vld [vmem:[%s1 + $0x1000] sm:$0xff]
  %v567 = vld [vmem:[%s1 + $0x1008] sm:$0xff]
  %v568 = vld [vmem:[%s1 + $0x1010] sm:$0xff]
  %v569 = vld [vmem:[%s1 + $0x1018] sm:$0xff]
  %v570 = vld [vmem:[%s1 + $0x1020] sm:$0xff]
  %v571 = vld [vmem:[%s1 + $0x1028] sm:$0xff]
  %v572 = vld [vmem:[%s1 + $0x1030] sm:$0xff]
  %v573 = vld [vmem:[%s1 + $0x1038] sm:$0xff]
  %v574 = vld [vmem:[%s1 + $0x1040] sm:$0xff]
  %v575 = vld [vmem:[%s1 + $0x1048] sm:$0xff]
  %v576 = vld [vmem:[%s1 + $0x1050] sm:$0xff]
  %v577 = vld [vmem:[%s1 + $0x1058] sm:$0xff]
  %v578 = vld [vmem:[%s1 + $0x1060] sm:$0xff]
  %v579 = vld [vmem:[%s1 + $0x1068] sm:$0xff]
  %v580 = vld [vmem:[%s1 + $0x1070] sm:$0xff]
  %v581 = vld [vmem:[%s1 + $0x1078] sm:$0xff]
  %v582 = vld [vmem:[%s1 + $0x1080] sm:$0xff]
  %v583 = vld [vmem:[%s1 + $0x1088] sm:$0xff]
  %v584 = vld [vmem:[%s1 + $0x1090] sm:$0xff]
  %v585 = vld [vmem:[%s1 + $0x1098] sm:$0xff]
  %v586 = vld [vmem:[%s1 + $0x10a0] sm:$0xff]
  %v587 = vld [vmem:[%s1 + $0x10a8] sm:$0xff]
  %v588 = vld [vmem:[%s1 + $0x10b0] sm:$0xff]
  %v589 = vld [vmem:[%s1 + $0x10b8] sm:$0xff]
  %v590 = vld [vmem:[%s1 + $0x10c0] sm:$0xff]
  %v591 = vld [vmem:[%s1 + $0x10c8] sm:$0xff]
  %v592 = vld [vmem:[%s1 + $0x10d0] sm:$0xff]
  %v593 = vld [vmem:[%s1 + $0x10d8] sm:$0xff]
  %v594 = vld [vmem:[%s1 + $0x10e0] sm:$0xff]
  %v595 = vld [vmem:[%s1 + $0x10e8] sm:$0xff]
  %v596 = vld [vmem:[%s1 + $0x10f0] sm:$0xff]
  %v597 = vld [vmem:[%s1 + $0x10f8] sm:$0xff]
  %v598 = vld [vmem:[%s1 + $0x1100] sm:$0xff]
  %v599 = vld [vmem:[%s1 + $0x1108] sm:$0xff]
  %v600 = vld [vmem:[%s1 + $0x1110] sm:$0xff]
  %v601 = vld [vmem:[%s1 + $0x1118] sm:$0xff]
  %v602 = vld [vmem:[%s1 + $0x1120] sm:$0xff]
  %v603 = vld [vmem:[%s1 + $0x1128] sm:$0xff]
  %v604 = vld [vmem:[%s1 + $0x1130] sm:$0xff]
  %v605 = vld [vmem:[%s1 + $0x1138] sm:$0xff]
  %v606 = vld [vmem:[%s1 + $0x1140] sm:$0xff]
  %v607 = vld [vmem:[%s1 + $0x1148] sm:$0xff]
  %v608 = vld [vmem:[%s1 + $0x1150] sm:$0xff]
  %v609 = vld [vmem:[%s1 + $0x1158] sm:$0xff]
  %v610 = vld [vmem:[%s1 + $0x1160] sm:$0xff]
  %v611 = vld [vmem:[%s1 + $0x1168] sm:$0xff]
  %v612 = vld [vmem:[%s1 + $0x1170] sm:$0xff]
  %v613 = vld [vmem:[%s1 + $0x1178] sm:$0xff]
  %v614 = vld [vmem:[%s1 + $0x1180] sm:$0xff]
  %v615 = vld [vmem:[%s1 + $0x1188] sm:$0xff]
  %v616 = vld [vmem:[%s1 + $0x1190] sm:$0xff]
  %v617 = vld [vmem:[%s1 + $0x1198] sm:$0xff]
  %v618 = vld [vmem:[%s1 + $0x11a0] sm:$0xff]
  %v619 = vld [vmem:[%s1 + $0x11a8] sm:$0xff]
  %v620 = vld [vmem:[%s1 + $0x11b0] sm:$0xff]
  %v621 = vld [vmem:[%s1 + $0x11b8] sm:$0xff]
  %v622 = vld [vmem:[%s1 + $0x11c0] sm:$0xff]
  %v623 = vld [vmem:[%s1 + $0x11c8] sm:$0xff]
  %v624 = vld [vmem:[%s1 + $0x11d0] sm:$0xff]
  %v625 = vld [vmem:[%s1 + $0x11d8] sm:$0xff]
  %v626 = vld [vmem:[%s1 + $0x11e0] sm:$0xff]
  %v627 = vld [vmem:[%s1 + $0x11e8] sm:$0xff]
  %v628 = vld [vmem:[%s1 + $0x11f0] sm:$0xff]
  %v629 = vld [vmem:[%s1 + $0x11f8] sm:$0xff]
  %v630 = vld [vmem:[%s1 + $0x1200] sm:$0xff]
  %v631 = vld [vmem:[%s1 + $0x1208] sm:$0xff]
  %v632 = vld [vmem:[%s1 + $0x1210] sm:$0xff]
  %v633 = vld [vmem:[%s1 + $0x1218] sm:$0xff]
  %v634 = vld [vmem:[%s1 + $0x1220] sm:$0xff]
  %v635 = vld [vmem:[%s1 + $0x1228] sm:$0xff]
  %v636 = vld [vmem:[%s1 + $0x1230] sm:$0xff]
  %v637 = vld [vmem:[%s1 + $0x1238] sm:$0xff]
  %v638 = vld [vmem:[%s1 + $0x1240] sm:$0xff]
  %v639 = vld [vmem:[%s1 + $0x1248] sm:$0xff]
  %v640 = vld [vmem:[%s1 + $0x1250] sm:$0xff]
  %v641 = vld [vmem:[%s1 + $0x1258] sm:$0xff]
  %v642 = vld [vmem:[%s1 + $0x1260] sm:$0xff]
  %v643 = vld [vmem:[%s1 + $0x1268] sm:$0xff]
  %v644 = vld [vmem:[%s1 + $0x1270] sm:$0xff]
  %v645 = vld [vmem:[%s1 + $0x1278] sm:$0xff]
  %v646 = vld [vmem:[%s1 + $0x1280] sm:$0xff]
  %v647 = vld [vmem:[%s1 + $0x1288] sm:$0xff]
  %v648 = vld [vmem:[%s1 + $0x1290] sm:$0xff]
  %v649 = vld [vmem:[%s1 + $0x1298] sm:$0xff]
  %v650 = vld [vmem:[%s1 + $0x12a0] sm:$0xff]
  %v651 = vld [vmem:[%s1 + $0x12a8] sm:$0xff]
  %v652 = vld [vmem:[%s1 + $0x12b0] sm:$0xff]
  %v653 = vld [vmem:[%s1 + $0x12b8] sm:$0xff]
  %v654 = vld [vmem:[%s1 + $0x12c0] sm:$0xff]
  %v655 = vld [vmem:[%s1 + $0x12c8] sm:$0xff]
  %v656 = vld [vmem:[%s1 + $0x12d0] sm:$0xff]
  %v657 = vld [vmem:[%s1 + $0x12d8] sm:$0xff]
  %v658 = vld [vmem:[%s1 + $0x12e0] sm:$0xff]
  %v659 = vld [vmem:[%s1 + $0x12e8] sm:$0xff]
  %v660 = vld [vmem:[%s1 + $0x12f0] sm:$0xff]
  %v661 = vld [vmem:[%s1 + $0x12f8] sm:$0xff]
  %v662 = vld [vmem:[%s1 + $0x1300] sm:$0xff]
  %v663 = vld [vmem:[%s1 + $0x1308] sm:$0xff]
  %v664 = vld [vmem:[%s1 + $0x1310] sm:$0xff]
  %v665 = vld [vmem:[%s1 + $0x1318] sm:$0xff]
  %v666 = vld [vmem:[%s1 + $0x1320] sm:$0xff]
  %v667 = vld [vmem:[%s1 + $0x1328] sm:$0xff]
  %v668 = vld [vmem:[%s1 + $0x1330] sm:$0xff]
  %v669 = vld [vmem:[%s1 + $0x1338] sm:$0xff]
  %v670 = vld [vmem:[%s1 + $0x1340] sm:$0xff]
  %v671 = vld [vmem:[%s1 + $0x1348] sm:$0xff]
  %v672 = vld [vmem:[%s1 + $0x1350] sm:$0xff]
  %v673 = vld [vmem:[%s1 + $0x1358] sm:$0xff]
  %v674 = vld [vmem:[%s1 + $0x1360] sm:$0xff]
  %v675 = vld [vmem:[%s1 + $0x1368] sm:$0xff]
  %v676 = vld [vmem:[%s1 + $0x1370] sm:$0xff]
  %v677 = vld [vmem:[%s1 + $0x1378] sm:$0xff]
  %v678 = vld [vmem:[%s1 + $0x1380] sm:$0xff]
  %v679 = vld [vmem:[%s1 + $0x1388] sm:$0xff]
  %v680 = vld [vmem:[%s1 + $0x1390] sm:$0xff]
  %v681 = vld [vmem:[%s1 + $0x1398] sm:$0xff]
  %v682 = vld [vmem:[%s1 + $0x13a0] sm:$0xff]
  %v683 = vld [vmem:[%s1 + $0x13a8] sm:$0xff]
  %v684 = vld [vmem:[%s1 + $0x13b0] sm:$0xff]
  %v685 = vld [vmem:[%s1 + $0x13b8] sm:$0xff]
  %v686 = vld [vmem:[%s1 + $0x13c0] sm:$0xff]
  %v687 = vld [vmem:[%s1 + $0x13c8] sm:$0xff]
  %v688 = vld [vmem:[%s1 + $0x13d0] sm:$0xff]
  %v689 = vld [vmem:[%s1 + $0x13d8] sm:$0xff]
  %v690 = vld [vmem:[%s1 + $0x13e0] sm:$0xff]
  %v691 = vld [vmem:[%s1 + $0x13e8] sm:$0xff]
  %v692 = vld [vmem:[%s1 + $0x13f0] sm:$0xff]
  %v693 = vld [vmem:[%s1 + $0x13f8] sm:$0xff]
  %v694 = vld [vmem:[%s1 + $0x1400] sm:$0xff]
  %v695 = vld [vmem:[%s1 + $0x1408] sm:$0xff]
  %v696 = vld [vmem:[%s1 + $0x1410] sm:$0xff]
  %v697 = vld [vmem:[%s1 + $0x1418] sm:$0xff]
  %v698 = vld [vmem:[%s1 + $0x1420] sm:$0xff]
  %v699 = vld [vmem:[%s1 + $0x1428] sm:$0xff]
  %v700 = vld [vmem:[%s1 + $0x1430] sm:$0xff]
  %v701 = vld [vmem:[%s1 + $0x1438] sm:$0xff]
  %v702 = vld [vmem:[%s1 + $0x1440] sm:$0xff]
  %v703 = vld [vmem:[%s1 + $0x1448] sm:$0xff]
  %v704 = vld [vmem:[%s1 + $0x1450] sm:$0xff]
  %v705 = vld [vmem:[%s1 + $0x1458] sm:$0xff]
  %v706 = vld [vmem:[%s1 + $0x1460] sm:$0xff]
  %v707 = vld [vmem:[%s1 + $0x1468] sm:$0xff]
  %v708 = vld [vmem:[%s1 + $0x1470] sm:$0xff]
  %v709 = vld [vmem:[%s1 + $0x1478] sm:$0xff]
  %v710 = vld [vmem:[%s1 + $0x1480] sm:$0xff]
  %v711 = vld [vmem:[%s1 + $0x1488] sm:$0xff]
  %v712 = vld [vmem:[%s1 + $0x1490] sm:$0xff]
  %v713 = vld [vmem:[%s1 + $0x1498] sm:$0xff]
  %v714 = vld [vmem:[%s1 + $0x14a0] sm:$0xff]
  %v715 = vld [vmem:[%s1 + $0x14a8] sm:$0xff]
  %v716 = vld [vmem:[%s1 + $0x14b0] sm:$0xff]
  %v717 = vld [vmem:[%s1 + $0x14b8] sm:$0xff]
  %v718 = vld [vmem:[%s1 + $0x14c0] sm:$0xff]
  %v719 = vld [vmem:[%s1 + $0x14c8] sm:$0xff]
  %v720 = vld [vmem:[%s1 + $0x14d0] sm:$0xff]
  %v721 = vld [vmem:[%s1 + $0x14d8] sm:$0xff]
  %v722 = vld [vmem:[%s1 + $0x14e0] sm:$0xff]
  %v723 = vld [vmem:[%s1 + $0x14e8] sm:$0xff]
  %v724 = vld [vmem:[%s1 + $0x14f0] sm:$0xff]
  %v725 = vld [vmem:[%s1 + $0x14f8] sm:$0xff]
  %v726 = vld [vmem:[%s1 + $0x1500] sm:$0xff]
  %v727 = vld [vmem:[%s1 + $0x1508] sm:$0xff]
  %v728 = vld [vmem:[%s1 + $0x1510] sm:$0xff]
  %v729 = vld [vmem:[%s1 + $0x1518] sm:$0xff]
  %v730 = vld [vmem:[%s1 + $0x1520] sm:$0xff]
  %v731 = vld [vmem:[%s1 + $0x1528] sm:$0xff]
  %v732 = vld [vmem:[%s1 + $0x1530] sm:$0xff]
  %v733 = vld [vmem:[%s1 + $0x1538] sm:$0xff]
  %v734 = vld [vmem:[%s1 + $0x1540] sm:$0xff]
  %v735 = vld [vmem:[%s1 + $0x1548] sm:$0xff]
  %v736 = vld [vmem:[%s1 + $0x1550] sm:$0xff]
  %v737 = vld [vmem:[%s1 + $0x1558] sm:$0xff]
  %v738 = vld [vmem:[%s1 + $0x1560] sm:$0xff]
  %v739 = vld [vmem:[%s1 + $0x1568] sm:$0xff]
  %v740 = vld [vmem:[%s1 + $0x1570] sm:$0xff]
  %v741 = vld [vmem:[%s1 + $0x1578] sm:$0xff]
  %v742 = vld [vmem:[%s1 + $0x1580] sm:$0xff]
  %v743 = vld [vmem:[%s1 + $0x1588] sm:$0xff]
  %v744 = vld [vmem:[%s1 + $0x1590] sm:$0xff]
  %v745 = vld [vmem:[%s1 + $0x1598] sm:$0xff]
  %v746 = vld [vmem:[%s1 + $0x15a0] sm:$0xff]
  %v747 = vld [vmem:[%s1 + $0x15a8] sm:$0xff]
  %v748 = vld [vmem:[%s1 + $0x15b0] sm:$0xff]
  %v749 = vld [vmem:[%s1 + $0x15b8] sm:$0xff]
  %v750 = vld [vmem:[%s1 + $0x15c0] sm:$0xff]
  %v751 = vld [vmem:[%s1 + $0x15c8] sm:$0xff]
  %v752 = vld [vmem:[%s1 + $0x15d0] sm:$0xff]
  %v753 = vld [vmem:[%s1 + $0x15d8] sm:$0xff]
  %v754 = vld [vmem:[%s1 + $0x15e0] sm:$0xff]
  %v755 = vld [vmem:[%s1 + $0x15e8] sm:$0xff]
  %v756 = vld [vmem:[%s1 + $0x15f0] sm:$0xff]
  %v757 = vld [vmem:[%s1 + $0x15f8] sm:$0xff]
  %v758 = vld [vmem:[%s1 + $0x1600] sm:$0xff]
  %v759 = vld [vmem:[%s1 + $0x1608] sm:$0xff]
  %v760 = vld [vmem:[%s1 + $0x1610] sm:$0xff]
  %v761 = vld [vmem:[%s1 + $0x1618] sm:$0xff]
  %v762 = vld [vmem:[%s1 + $0x1620] sm:$0xff]
  %v763 = vld [vmem:[%s1 + $0x1628] sm:$0xff]
  %v764 = vld [vmem:[%s1 + $0x1630] sm:$0xff]
  %v765 = vld [vmem:[%s1 + $0x1638] sm:$0xff]
  %v766 = vld [vmem:[%s1 + $0x1640] sm:$0xff]
  %v767 = vld [vmem:[%s1 + $0x1648] sm:$0xff]
  %v768 = vld [vmem:[%s1 + $0x1650] sm:$0xff]
  %v769 = vld [vmem:[%s1 + $0x1658] sm:$0xff]
  %v770 = vld [vmem:[%s1 + $0x1660] sm:$0xff]
  %v771 = vld [vmem:[%s1 + $0x1668] sm:$0xff]
  %v772 = vld [vmem:[%s1 + $0x1670] sm:$0xff]
  %v773 = vld [vmem:[%s1 + $0x1678] sm:$0xff]
  %v774 = vld [vmem:[%s1 + $0x1680] sm:$0xff]
  %v775 = vld [vmem:[%s1 + $0x1688] sm:$0xff]
  %v776 = vld [vmem:[%s1 + $0x1690] sm:$0xff]
  %v777 = vld [vmem:[%s1 + $0x1698] sm:$0xff]
  %v778 = vld [vmem:[%s1 + $0x16a0] sm:$0xff]
  %v779 = vld [vmem:[%s1 + $0x16a8] sm:$0xff]
  %v780 = vld [vmem:[%s1 + $0x16b0] sm:$0xff]
  %v781 = vld [vmem:[%s1 + $0x16b8] sm:$0xff]
  %v782 = vld [vmem:[%s1 + $0x16c0] sm:$0xff]
  %v783 = vld [vmem:[%s1 + $0x16c8] sm:$0xff]
  %v784 = vld [vmem:[%s1 + $0x16d0] sm:$0xff]
  %v785 = vld [vmem:[%s1 + $0x16d8] sm:$0xff]
  %v786 = vld [vmem:[%s1 + $0x16e0] sm:$0xff]
  %v787 = vld [vmem:[%s1 + $0x16e8] sm:$0xff]
  %v788 = vld [vmem:[%s1 + $0x16f0] sm:$0xff]
  %v789 = vld [vmem:[%s1 + $0x16f8] sm:$0xff]
  %v790 = vld [vmem:[%s1 + $0x1700] sm:$0xff]
  %v791 = vld [vmem:[%s1 + $0x1708] sm:$0xff]
  %v792 = vld [vmem:[%s1 + $0x1710] sm:$0xff]
  %v793 = vld [vmem:[%s1 + $0x1718] sm:$0xff]
  %v794 = vld [vmem:[%s1 + $0x1720] sm:$0xff]
  %v795 = vld [vmem:[%s1 + $0x1728] sm:$0xff]
  %v796 = vld [vmem:[%s1 + $0x1730] sm:$0xff]
  %v797 = vld [vmem:[%s1 + $0x1738] sm:$0xff]
  %v798 = vld [vmem:[%s1 + $0x1740] sm:$0xff]
  %v799 = vld [vmem:[%s1 + $0x1748] sm:$0xff]
  %v800 = vld [vmem:[%s1 + $0x1750] sm:$0xff]
  %v801 = vld [vmem:[%s1 + $0x1758] sm:$0xff]
  %v802 = vld [vmem:[%s1 + $0x1760] sm:$0xff]
  %v803 = vld [vmem:[%s1 + $0x1768] sm:$0xff]
  %v804 = vld [vmem:[%s1 + $0x1770] sm:$0xff]
  %v805 = vld [vmem:[%s1 + $0x1778] sm:$0xff]
  %v806 = vld [vmem:[%s1 + $0x1780] sm:$0xff]
  %v807 = vld [vmem:[%s1 + $0x1788] sm:$0xff]
  %v808 = vld [vmem:[%s1 + $0x1790] sm:$0xff]
  %v809 = vld [vmem:[%s1 + $0x1798] sm:$0xff]
  %v810 = vld [vmem:[%s1 + $0x17a0] sm:$0xff]
  %v811 = vld [vmem:[%s1 + $0x17a8] sm:$0xff]
  %v812 = vld [vmem:[%s1 + $0x17b0] sm:$0xff]
  %v813 = vld [vmem:[%s1 + $0x17b8] sm:$0xff]
  %v814 = vld [vmem:[%s1 + $0x17c0] sm:$0xff]
  %v815 = vld [vmem:[%s1 + $0x17c8] sm:$0xff]
  %v816 = vld [vmem:[%s1 + $0x17d0] sm:$0xff]
  %v817 = vld [vmem:[%s1 + $0x17d8] sm:$0xff]
  %v818 = vld [vmem:[%s1 + $0x17e0] sm:$0xff]
  %v819 = vld [vmem:[%s1 + $0x17e8] sm:$0xff]
  %v820 = vld [vmem:[%s1 + $0x17f0] sm:$0xff]
  %v821 = vld [vmem:[%s1 + $0x17f8] sm:$0xff]
  %v822 = vld [vmem:[%s1 + $0x1800] sm:$0xff]
  %v823 = vld [vmem:[%s1 + $0x1808] sm:$0xff]
  %v824 = vld [vmem:[%s1 + $0x1810] sm:$0xff]
  %v825 = vld [vmem:[%s1 + $0x1818] sm:$0xff]
  %v826 = vld [vmem:[%s1 + $0x1820] sm:$0xff]
  %v827 = vld [vmem:[%s1 + $0x1828] sm:$0xff]
  %v828 = vld [vmem:[%s1 + $0x1830] sm:$0xff]
  %v829 = vld [vmem:[%s1 + $0x1838] sm:$0xff]
  %v830 = vld [vmem:[%s1 + $0x1840] sm:$0xff]
  %v831 = vld [vmem:[%s1 + $0x1848] sm:$0xff]
  %v832 = vld [vmem:[%s1 + $0x1850] sm:$0xff]
  %v833 = vld [vmem:[%s1 + $0x1858] sm:$0xff]
  %v834 = vld [vmem:[%s1 + $0x1860] sm:$0xff]
  %v835 = vld [vmem:[%s1 + $0x1868] sm:$0xff]
  %v836 = vld [vmem:[%s1 + $0x1870] sm:$0xff]
  %v837 = vld [vmem:[%s1 + $0x1878] sm:$0xff]
  %v838 = vld [vmem:[%s1 + $0x1880] sm:$0xff]
  %v839 = vld [vmem:[%s1 + $0x1888] sm:$0xff]
  %v840 = vld [vmem:[%s1 + $0x1890] sm:$0xff]
  %v841 = vld [vmem:[%s1 + $0x1898] sm:$0xff]
  %v842 = vld [vmem:[%s1 + $0x18a0] sm:$0xff]
  %v843 = vld [vmem:[%s1 + $0x18a8] sm:$0xff]
  %v844 = vld [vmem:[%s1 + $0x18b0] sm:$0xff]
  %v845 = vld [vmem:[%s1 + $0x18b8] sm:$0xff]
  %v846 = vld [vmem:[%s1 + $0x18c0] sm:$0xff]
  %v847 = vld [vmem:[%s1 + $0x18c8] sm:$0xff]
  %v848 = vld [vmem:[%s1 + $0x18d0] sm:$0xff]
  %v849 = vld [vmem:[%s1 + $0x18d8] sm:$0xff]
  %v850 = vld [vmem:[%s1 + $0x18e0] sm:$0xff]
  %v851 = vld [vmem:[%s1 + $0x18e8] sm:$0xff]
  %v852 = vld [vmem:[%s1 + $0x18f0] sm:$0xff]
  %v853 = vld [vmem:[%s1 + $0x18f8] sm:$0xff]
  %v854 = vld [vmem:[%s1 + $0x1900] sm:$0xff]
  %v855 = vld [vmem:[%s1 + $0x1908] sm:$0xff]
  %v856 = vld [vmem:[%s1 + $0x1910] sm:$0xff]
  %v857 = vld [vmem:[%s1 + $0x1918] sm:$0xff]
  %v858 = vld [vmem:[%s1 + $0x1920] sm:$0xff]
  %v859 = vld [vmem:[%s1 + $0x1928] sm:$0xff]
  %v860 = vld [vmem:[%s1 + $0x1930] sm:$0xff]
  %v861 = vld [vmem:[%s1 + $0x1938] sm:$0xff]
  %v862 = vld [vmem:[%s1 + $0x1940] sm:$0xff]
  %v863 = vld [vmem:[%s1 + $0x1948] sm:$0xff]
  %v864 = vld [vmem:[%s1 + $0x1950] sm:$0xff]
  %v865 = vld [vmem:[%s1 + $0x1958] sm:$0xff]
  %v866 = vld [vmem:[%s1 + $0x1960] sm:$0xff]
  %v867 = vld [vmem:[%s1 + $0x1968] sm:$0xff]
  %v868 = vld [vmem:[%s1 + $0x1970] sm:$0xff]
  %v869 = vld [vmem:[%s1 + $0x1978] sm:$0xff]
  %v870 = vld [vmem:[%s1 + $0x1980] sm:$0xff]
  %v871 = vld [vmem:[%s1 + $0x1988] sm:$0xff]
  %v872 = vld [vmem:[%s1 + $0x1990] sm:$0xff]
  %v873 = vld [vmem:[%s1 + $0x1998] sm:$0xff]
  %v874 = vld [vmem:[%s1 + $0x19a0] sm:$0xff]
  %v875 = vld [vmem:[%s1 + $0x19a8] sm:$0xff]
  %v876 = vld [vmem:[%s1 + $0x19b0] sm:$0xff]
  %v877 = vld [vmem:[%s1 + $0x19b8] sm:$0xff]
  %v878 = vld [vmem:[%s1 + $0x19c0] sm:$0xff]
  %v879 = vld [vmem:[%s1 + $0x19c8] sm:$0xff]
  %v880 = vld [vmem:[%s1 + $0x19d0] sm:$0xff]
  %v881 = vld [vmem:[%s1 + $0x19d8] sm:$0xff]
  %v882 = vld [vmem:[%s1 + $0x19e0] sm:$0xff]
  %v883 = vld [vmem:[%s1 + $0x19e8] sm:$0xff]
  %v884 = vld [vmem:[%s1 + $0x19f0] sm:$0xff]
  %v885 = vld [vmem:[%s1 + $0x19f8] sm:$0xff]
  %v886 = vld [vmem:[%s1 + $0x1a00] sm:$0xff]
  %v887 = vld [vmem:[%s1 + $0x1a08] sm:$0xff]
  %v888 = vld [vmem:[%s1 + $0x1a10] sm:$0xff]
  %v889 = vld [vmem:[%s1 + $0x1a18] sm:$0xff]
  %v890 = vld [vmem:[%s1 + $0x1a20] sm:$0xff]
  %v891 = vld [vmem:[%s1 + $0x1a28] sm:$0xff]
  %v892 = vld [vmem:[%s1 + $0x1a30] sm:$0xff]
  %v893 = vld [vmem:[%s1 + $0x1a38] sm:$0xff]
  %v894 = vld [vmem:[%s1 + $0x1a40] sm:$0xff]
  %v895 = vld [vmem:[%s1 + $0x1a48] sm:$0xff]
  %v896 = vld [vmem:[%s1 + $0x1a50] sm:$0xff]
  %v897 = vld [vmem:[%s1 + $0x1a58] sm:$0xff]
  %v898 = vld [vmem:[%s1 + $0x1a60] sm:$0xff]
  %v899 = vld [vmem:[%s1 + $0x1a68] sm:$0xff]
  %v900 = vld [vmem:[%s1 + $0x1a70] sm:$0xff]
  %v901 = vld [vmem:[%s1 + $0x1a78] sm:$0xff]
  %v902 = vld [vmem:[%s1 + $0x1a80] sm:$0xff]
  %v903 = vld [vmem:[%s1 + $0x1a88] sm:$0xff]
  %v904 = vld [vmem:[%s1 + $0x1a90] sm:$0xff]
  %v905 = vld [vmem:[%s1 + $0x1a98] sm:$0xff]
  %v906 = vld [vmem:[%s1 + $0x1aa0] sm:$0xff]
  %v907 = vld [vmem:[%s1 + $0x1aa8] sm:$0xff]
  %v908 = vld [vmem:[%s1 + $0x1ab0] sm:$0xff]
  %v909 = vld [vmem:[%s1 + $0x1ab8] sm:$0xff]
  %v910 = vld [vmem:[%s1 + $0x1ac0] sm:$0xff]
  %v911 = vld [vmem:[%s1 + $0x1ac8] sm:$0xff]
  %v912 = vld [vmem:[%s1 + $0x1ad0] sm:$0xff]
  %v913 = vld [vmem:[%s1 + $0x1ad8] sm:$0xff]
  %v914 = vld [vmem:[%s1 + $0x1ae0] sm:$0xff]
  %v915 = vld [vmem:[%s1 + $0x1ae8] sm:$0xff]
  %v916 = vld [vmem:[%s1 + $0x1af0] sm:$0xff]
  %v917 = vld [vmem:[%s1 + $0x1af8] sm:$0xff]
  %v918 = vld [vmem:[%s1 + $0x1b00] sm:$0xff]
  %v919 = vld [vmem:[%s1 + $0x1b08] sm:$0xff]
  %v920 = vld [vmem:[%s1 + $0x1b10] sm:$0xff]
  %v921 = vld [vmem:[%s1 + $0x1b18] sm:$0xff]
  %v922 = vld [vmem:[%s1 + $0x1b20] sm:$0xff]
  %v923 = vld [vmem:[%s1 + $0x1b28] sm:$0xff]
  %v924 = vld [vmem:[%s1 + $0x1b30] sm:$0xff]
  %v925 = vld [vmem:[%s1 + $0x1b38] sm:$0xff]
  %v926 = vld [vmem:[%s1 + $0x1b40] sm:$0xff]
  %v927 = vld [vmem:[%s1 + $0x1b48] sm:$0xff]
  %v928 = vld [vmem:[%s1 + $0x1b50] sm:$0xff]
  %v929 = vld [vmem:[%s1 + $0x1b58] sm:$0xff]
  %v930 = vld [vmem:[%s1 + $0x1b60] sm:$0xff]
  %v931 = vld [vmem:[%s1 + $0x1b68] sm:$0xff]
  %v932 = vld [vmem:[%s1 + $0x1b70] sm:$0xff]
  %v933 = vld [vmem:[%s1 + $0x1b78] sm:$0xff]
  %v934 = vld [vmem:[%s1 + $0x1b80] sm:$0xff]
  %v935 = vld [vmem:[%s1 + $0x1b88] sm:$0xff]
  %v936 = vld [vmem:[%s1 + $0x1b90] sm:$0xff]
  %v937 = vld [vmem:[%s1 + $0x1b98] sm:$0xff]
  %v938 = vld [vmem:[%s1 + $0x1ba0] sm:$0xff]
  %v939 = vld [vmem:[%s1 + $0x1ba8] sm:$0xff]
  %v940 = vld [vmem:[%s1 + $0x1bb0] sm:$0xff]
  %v941 = vld [vmem:[%s1 + $0x1bb8] sm:$0xff]
  %v942 = vld [vmem:[%s1 + $0x1bc0] sm:$0xff]
  %v943 = vld [vmem:[%s1 + $0x1bc8] sm:$0xff]
  %v944 = vld [vmem:[%s1 + $0x1bd0] sm:$0xff]
  %v945 = vld [vmem:[%s1 + $0x1bd8] sm:$0xff]
  %v946 = vld [vmem:[%s1 + $0x1be0] sm:$0xff]
  %v947 = vld [vmem:[%s1 + $0x1be8] sm:$0xff]
  %v948 = vld [vmem:[%s1 + $0x1bf0] sm:$0xff]
  %v949 = vld [vmem:[%s1 + $0x1bf8] sm:$0xff]
  %v950 = vld [vmem:[%s1 + $0x1c00] sm:$0xff]
  %v951 = vld [vmem:[%s1 + $0x1c08] sm:$0xff]
  %v952 = vld [vmem:[%s1 + $0x1c10] sm:$0xff]
  %v953 = vld [vmem:[%s1 + $0x1c18] sm:$0xff]
  %v954 = vld [vmem:[%s1 + $0x1c20] sm:$0xff]
  %v955 = vld [vmem:[%s1 + $0x1c28] sm:$0xff]
  %v956 = vld [vmem:[%s1 + $0x1c30] sm:$0xff]
  %v957 = vld [vmem:[%s1 + $0x1c38] sm:$0xff]
  %v958 = vld [vmem:[%s1 + $0x1c40] sm:$0xff]
  %v959 = vld [vmem:[%s1 + $0x1c48] sm:$0xff]
  %v960 = vld [vmem:[%s1 + $0x1c50] sm:$0xff]
  %v961 = vld [vmem:[%s1 + $0x1c58] sm:$0xff]
  %v962 = vld [vmem:[%s1 + $0x1c60] sm:$0xff]
  %v963 = vld [vmem:[%s1 + $0x1c68] sm:$0xff]
  %v964 = vld [vmem:[%s1 + $0x1c70] sm:$0xff]
  %v965 = vld [vmem:[%s1 + $0x1c78] sm:$0xff]
  %v966 = vld [vmem:[%s1 + $0x1c80] sm:$0xff]
  %v967 = vld [vmem:[%s1 + $0x1c88] sm:$0xff]
  %v968 = vld [vmem:[%s1 + $0x1c90] sm:$0xff]
  %v969 = vld [vmem:[%s1 + $0x1c98] sm:$0xff]
  %v970 = vld [vmem:[%s1 + $0x1ca0] sm:$0xff]
  %v971 = vld [vmem:[%s1 + $0x1ca8] sm:$0xff]
  %v972 = vld [vmem:[%s1 + $0x1cb0] sm:$0xff]
  %v973 = vld [vmem:[%s1 + $0x1cb8] sm:$0xff]
  %v974 = vld [vmem:[%s1 + $0x1cc0] sm:$0xff]
  %v975 = vld [vmem:[%s1 + $0x1cc8] sm:$0xff]
  %v976 = vld [vmem:[%s1 + $0x1cd0] sm:$0xff]
  %v977 = vld [vmem:[%s1 + $0x1cd8] sm:$0xff]
  %v978 = vld [vmem:[%s1 + $0x1ce0] sm:$0xff]
  %v979 = vld [vmem:[%s1 + $0x1ce8] sm:$0xff]
  %v980 = vld [vmem:[%s1 + $0x1cf0] sm:$0xff]
  %v981 = vld [vmem:[%s1 + $0x1cf8] sm:$0xff]
  %v982 = vld [vmem:[%s1 + $0x1d00] sm:$0xff]
  %v983 = vld [vmem:[%s1 + $0x1d08] sm:$0xff]
  %v984 = vld [vmem:[%s1 + $0x1d10] sm:$0xff]
  %v985 = vld [vmem:[%s1 + $0x1d18] sm:$0xff]
  %v986 = vld [vmem:[%s1 + $0x1d20] sm:$0xff]
  %v987 = vld [vmem:[%s1 + $0x1d28] sm:$0xff]
  %v988 = vld [vmem:[%s1 + $0x1d30] sm:$0xff]
  %v989 = vld [vmem:[%s1 + $0x1d38] sm:$0xff]
  %v990 = vld [vmem:[%s1 + $0x1d40] sm:$0xff]
  %v991 = vld [vmem:[%s1 + $0x1d48] sm:$0xff]
  %v992 = vld [vmem:[%s1 + $0x1d50] sm:$0xff]
  %v993 = vld [vmem:[%s1 + $0x1d58] sm:$0xff]
  %v994 = vld [vmem:[%s1 + $0x1d60] sm:$0xff]
  %v995 = vld [vmem:[%s1 + $0x1d68] sm:$0xff]
  %v996 = vld [vmem:[%s1 + $0x1d70] sm:$0xff]
  %v997 = vld [vmem:[%s1 + $0x1d78] sm:$0xff]
  %v998 = vld [vmem:[%s1 + $0x1d80] sm:$0xff]
  %v999 = vld [vmem:[%s1 + $0x1d88] sm:$0xff]
  %v1000 = vld [vmem:[%s1 + $0x1d90] sm:$0xff]
  %v1001 = vld [vmem:[%s1 + $0x1d98] sm:$0xff]
  %v1002 = vld [vmem:[%s1 + $0x1da0] sm:$0xff]
  %v1003 = vld [vmem:[%s1 + $0x1da8] sm:$0xff]
  %v1004 = vld [vmem:[%s1 + $0x1db0] sm:$0xff]
  %v1005 = vld [vmem:[%s1 + $0x1db8] sm:$0xff]
  %v1006 = vld [vmem:[%s1 + $0x1dc0] sm:$0xff]
  %v1007 = vld [vmem:[%s1 + $0x1dc8] sm:$0xff]
  %v1008 = vld [vmem:[%s1 + $0x1dd0] sm:$0xff]
  %v1009 = vld [vmem:[%s1 + $0x1dd8] sm:$0xff]
  %v1010 = vld [vmem:[%s1 + $0x1de0] sm:$0xff]
  %v1011 = vld [vmem:[%s1 + $0x1de8] sm:$0xff]
  %v1012 = vld [vmem:[%s1 + $0x1df0] sm:$0xff]
  %v1013 = vld [vmem:[%s1 + $0x1df8] sm:$0xff]
  %v1014 = vld [vmem:[%s1 + $0x1e00] sm:$0xff]
  %v1015 = vld [vmem:[%s1 + $0x1e08] sm:$0xff]
  %v1016 = vld [vmem:[%s1 + $0x1e10] sm:$0xff]
  %v1017 = vld [vmem:[%s1 + $0x1e18] sm:$0xff]
  %v1018 = vld [vmem:[%s1 + $0x1e20] sm:$0xff]
  %v1019 = vld [vmem:[%s1 + $0x1e28] sm:$0xff]
  %v1020 = vld [vmem:[%s1 + $0x1e30] sm:$0xff]
  %v1021 = vld [vmem:[%s1 + $0x1e38] sm:$0xff]
  %v1022 = vld [vmem:[%s1 + $0x1e40] sm:$0xff]
  %v1023 = vld [vmem:[%s1 + $0x1e48] sm:$0xff]
  %v1024 = vld [vmem:[%s1 + $0x1e50] sm:$0xff]
  %v1025 = vld [vmem:[%s1 + $0x1e58] sm:$0xff]
  %v1026 = vld [vmem:[%s1 + $0x1e60] sm:$0xff]
  %v1027 = vld [vmem:[%s1 + $0x1e68] sm:$0xff]
  %v1028 = vld [vmem:[%s1 + $0x1e70] sm:$0xff]
  %v1029 = vld [vmem:[%s1 + $0x1e78] sm:$0xff]
  %v1030 = vld [vmem:[%s1 + $0x1e80] sm:$0xff]
  %v1031 = vld [vmem:[%s1 + $0x1e88] sm:$0xff]
  %v1032 = vld [vmem:[%s1 + $0x1e90] sm:$0xff]
  %v1033 = vld [vmem:[%s1 + $0x1e98] sm:$0xff]
  %v1034 = vld [vmem:[%s1 + $0x1ea0] sm:$0xff]
  %v1035 = vld [vmem:[%s1 + $0x1ea8] sm:$0xff]
  %v1036 = vld [vmem:[%s1 + $0x1eb0] sm:$0xff]
  %v1037 = vld [vmem:[%s1 + $0x1eb8] sm:$0xff]
  %v1038 = vld [vmem:[%s1 + $0x1ec0] sm:$0xff]
  %v1039 = vld [vmem:[%s1 + $0x1ec8] sm:$0xff]
  %v1040 = vld [vmem:[%s1 + $0x1ed0] sm:$0xff]
  %v1041 = vld [vmem:[%s1 + $0x1ed8] sm:$0xff]
  %v1042 = vld [vmem:[%s1 + $0x1ee0] sm:$0xff]
  %v1043 = vld [vmem:[%s1 + $0x1ee8] sm:$0xff]
  %v1044 = vld [vmem:[%s1 + $0x1ef0] sm:$0xff]
  %v1045 = vld [vmem:[%s1 + $0x1ef8] sm:$0xff]
  %v1046 = vld [vmem:[%s1 + $0x1f00] sm:$0xff]
  %v1047 = vld [vmem:[%s1 + $0x1f08] sm:$0xff]
  %v1048 = vld [vmem:[%s1 + $0x1f10] sm:$0xff]
  %v1049 = vld [vmem:[%s1 + $0x1f18] sm:$0xff]
  %v1050 = vld [vmem:[%s1 + $0x1f20] sm:$0xff]
  %v1051 = vld [vmem:[%s1 + $0x1f28] sm:$0xff]
  %v1052 = vld [vmem:[%s1 + $0x1f30] sm:$0xff]
  %v1053 = vld [vmem:[%s1 + $0x1f38] sm:$0xff]
  %v1054 = vld [vmem:[%s1 + $0x1f40] sm:$0xff]
  %v1055 = vld [vmem:[%s1 + $0x1f48] sm:$0xff]
  %v1056 = vld [vmem:[%s1 + $0x1f50] sm:$0xff]
  %v1057 = vld [vmem:[%s1 + $0x1f58] sm:$0xff]
  %v1058 = vld [vmem:[%s1 + $0x1f60] sm:$0xff]
  %v1059 = vld [vmem:[%s1 + $0x1f68] sm:$0xff]
  %v1060 = vld [vmem:[%s1 + $0x1f70] sm:$0xff]
  %v1061 = vld [vmem:[%s1 + $0x1f78] sm:$0xff]
  %v1062 = vld [vmem:[%s1 + $0x1f80] sm:$0xff]
  %v1063 = vld [vmem:[%s1 + $0x1f88] sm:$0xff]
  %v1064 = vld [vmem:[%s1 + $0x1f90] sm:$0xff]
  %v1065 = vld [vmem:[%s1 + $0x1f98] sm:$0xff]
  %v1066 = vld [vmem:[%s1 + $0x1fa0] sm:$0xff]
  %v1067 = vld [vmem:[%s1 + $0x1fa8] sm:$0xff]
  %v1068 = vld [vmem:[%s1 + $0x1fb0] sm:$0xff]
  %v1069 = vld [vmem:[%s1 + $0x1fb8] sm:$0xff]
  %v1070 = vld [vmem:[%s1 + $0x1fc0] sm:$0xff]
  %v1071 = vld [vmem:[%s1 + $0x1fc8] sm:$0xff]
  %v1072 = vld [vmem:[%s1 + $0x1fd0] sm:$0xff]
  %v1073 = vld [vmem:[%s1 + $0x1fd8] sm:$0xff]
  %v1074 = vld [vmem:[%s1 + $0x1fe0] sm:$0xff]
  %v1075 = vld [vmem:[%s1 + $0x1fe8] sm:$0xff]
  %v1076 = vld [vmem:[%s1 + $0x1ff0] sm:$0xff]
  %v1077 = vld [vmem:[%s1 + $0x1ff8] sm:$0xff]
  %v1078 = vld [vmem:[%s1 + $0x2000] sm:$0xff]
  %v1079 = vld [vmem:[%s1 + $0x2008] sm:$0xff]
  %v1080 = vld [vmem:[%s1 + $0x2010] sm:$0xff]
  %v1081 = vld [vmem:[%s1 + $0x2018] sm:$0xff]
  %v1082 = vld [vmem:[%s1 + $0x2020] sm:$0xff]
  %v1083 = vld [vmem:[%s1 + $0x2028] sm:$0xff]
  %v1084 = vld [vmem:[%s1 + $0x2030] sm:$0xff]
  %v1085 = vld [vmem:[%s1 + $0x2038] sm:$0xff]
  %v1086 = vld [vmem:[%s1 + $0x2040] sm:$0xff]
  %v1087 = vld [vmem:[%s1 + $0x2048] sm:$0xff]
  %v1088 = vld [vmem:[%s1 + $0x2050] sm:$0xff]
  %v1089 = vld [vmem:[%s1 + $0x2058] sm:$0xff]
  %v1090 = vld [vmem:[%s1 + $0x2060] sm:$0xff]
  %v1091 = vld [vmem:[%s1 + $0x2068] sm:$0xff]
  %v1092 = vld [vmem:[%s1 + $0x2070] sm:$0xff]
  %v1093 = vld [vmem:[%s1 + $0x2078] sm:$0xff]
  %v1094 = vld [vmem:[%s1 + $0x2080] sm:$0xff]
  %v1095 = vld [vmem:[%s1 + $0x2088] sm:$0xff]
  %v1096 = vld [vmem:[%s1 + $0x2090] sm:$0xff]
  %v1097 = vld [vmem:[%s1 + $0x2098] sm:$0xff]
  %v1098 = vld [vmem:[%s1 + $0x20a0] sm:$0xff]
  %v1099 = vld [vmem:[%s1 + $0x20a8] sm:$0xff]
  %v1100 = vld [vmem:[%s1 + $0x20b0] sm:$0xff]
  %v1101 = vld [vmem:[%s1 + $0x20b8] sm:$0xff]
  %v1102 = vld [vmem:[%s1 + $0x20c0] sm:$0xff]
  %v1103 = vld [vmem:[%s1 + $0x20c8] sm:$0xff]
  %v1104 = vld [vmem:[%s1 + $0x20d0] sm:$0xff]
  %v1105 = vld [vmem:[%s1 + $0x20d8] sm:$0xff]
  %v1106 = vld [vmem:[%s1 + $0x20e0] sm:$0xff]
  %v1107 = vld [vmem:[%s1 + $0x20e8] sm:$0xff]
  %v1108 = vld [vmem:[%s1 + $0x20f0] sm:$0xff]
  %v1109 = vld [vmem:[%s1 + $0x20f8] sm:$0xff]
  %v1110 = vld [vmem:[%s1 + $0x2100] sm:$0xff]
  %v1111 = vld [vmem:[%s1 + $0x2108] sm:$0xff]
  %v1112 = vld [vmem:[%s1 + $0x2110] sm:$0xff]
  %v1113 = vld [vmem:[%s1 + $0x2118] sm:$0xff]
  %v1114 = vld [vmem:[%s1 + $0x2120] sm:$0xff]
  %v1115 = vld [vmem:[%s1 + $0x2128] sm:$0xff]
  %v1116 = vld [vmem:[%s1 + $0x2130] sm:$0xff]
  %v1117 = vld [vmem:[%s1 + $0x2138] sm:$0xff]
  %v1118 = vld [vmem:[%s1 + $0x2140] sm:$0xff]
  %v1119 = vld [vmem:[%s1 + $0x2148] sm:$0xff]
  %v1120 = vld [vmem:[%s1 + $0x2150] sm:$0xff]
  %v1121 = vld [vmem:[%s1 + $0x2158] sm:$0xff]
  %v1122 = vld [vmem:[%s1 + $0x2160] sm:$0xff]
  %v1123 = vld [vmem:[%s1 + $0x2168] sm:$0xff]
  %v1124 = vld [vmem:[%s1 + $0x2170] sm:$0xff]
  %v1125 = vld [vmem:[%s1 + $0x2178] sm:$0xff]
  %v1126 = vld [vmem:[%s1 + $0x2180] sm:$0xff]
  %v1127 = vld [vmem:[%s1 + $0x2188] sm:$0xff]
  %v1128 = vld [vmem:[%s1 + $0x2190] sm:$0xff]
  %v1129 = vld [vmem:[%s1 + $0x2198] sm:$0xff]
  %v1130 = vld [vmem:[%s1 + $0x21a0] sm:$0xff]
  %v1131 = vld [vmem:[%s1 + $0x21a8] sm:$0xff]
  %v1132 = vld [vmem:[%s1 + $0x21b0] sm:$0xff]
  %v1133 = vld [vmem:[%s1 + $0x21b8] sm:$0xff]
  %v1134 = vld [vmem:[%s1 + $0x21c0] sm:$0xff]
  %v1135 = vld [vmem:[%s1 + $0x21c8] sm:$0xff]
  %v1136 = vld [vmem:[%s1 + $0x21d0] sm:$0xff]
  %v1137 = vld [vmem:[%s1 + $0x21d8] sm:$0xff]
  %v1138 = vld [vmem:[%s1 + $0x21e0] sm:$0xff]
  %v1139 = vld [vmem:[%s1 + $0x21e8] sm:$0xff]
  %v1140 = vld [vmem:[%s1 + $0x21f0] sm:$0xff]
  %v1141 = vld [vmem:[%s1 + $0x21f8] sm:$0xff]
  %v1142 = vld [vmem:[%s1 + $0x2200] sm:$0xff]
  %v1143 = vld [vmem:[%s1 + $0x2208] sm:$0xff]
  %v1144 = vld [vmem:[%s1 + $0x2210] sm:$0xff]
  %v1145 = vld [vmem:[%s1 + $0x2218] sm:$0xff]
  %v1146 = vld [vmem:[%s1 + $0x2220] sm:$0xff]
  %v1147 = vld [vmem:[%s1 + $0x2228] sm:$0xff]
  %v1148 = vld [vmem:[%s1 + $0x2230] sm:$0xff]
  %v1149 = vld [vmem:[%s1 + $0x2238] sm:$0xff]
  %v1150 = vld [vmem:[%s1 + $0x2240] sm:$0xff]
  %v1151 = vld [vmem:[%s1 + $0x2248] sm:$0xff]
  %v1152 = vld [vmem:[%s1 + $0x2250] sm:$0xff]
  %v1153 = vld [vmem:[%s1 + $0x2258] sm:$0xff]
  %v1154 = vld [vmem:[%s1 + $0x2260] sm:$0xff]
  %v1155 = vld [vmem:[%s1 + $0x2268] sm:$0xff]
  %v1156 = vld [vmem:[%s1 + $0x2270] sm:$0xff]
  %v1157 = vld [vmem:[%s1 + $0x2278] sm:$0xff]
  %v1158 = vld [vmem:[%s1 + $0x2280] sm:$0xff]
  %v1159 = vld [vmem:[%s1 + $0x2288] sm:$0xff]
  %v1160 = vld [vmem:[%s1 + $0x2290] sm:$0xff]
  %v1161 = vld [vmem:[%s1 + $0x2298] sm:$0xff]
  %v1162 = vld [vmem:[%s1 + $0x22a0] sm:$0xff]
  %v1163 = vld [vmem:[%s1 + $0x22a8] sm:$0xff]
  %v1164 = vld [vmem:[%s1 + $0x22b0] sm:$0xff]
  %v1165 = vld [vmem:[%s1 + $0x22b8] sm:$0xff]
  %v1166 = vld [vmem:[%s1 + $0x22c0] sm:$0xff]
  %v1167 = vld [vmem:[%s1 + $0x22c8] sm:$0xff]
  %v1168 = vld [vmem:[%s1 + $0x22d0] sm:$0xff]
  %v1169 = vld [vmem:[%s1 + $0x22d8] sm:$0xff]
  %v1170 = vld [vmem:[%s1 + $0x22e0] sm:$0xff]
  %v1171 = vld [vmem:[%s1 + $0x22e8] sm:$0xff]
  %v1172 = vld [vmem:[%s1 + $0x22f0] sm:$0xff]
  %v1173 = vld [vmem:[%s1 + $0x22f8] sm:$0xff]
  %v1174 = vld [vmem:[%s1 + $0x2300] sm:$0xff]
  %v1175 = vld [vmem:[%s1 + $0x2308] sm:$0xff]
  %v1176 = vld [vmem:[%s1 + $0x2310] sm:$0xff]
  %v1177 = vld [vmem:[%s1 + $0x2318] sm:$0xff]
  %v1178 = vld [vmem:[%s1 + $0x2320] sm:$0xff]
  %v1179 = vld [vmem:[%s1 + $0x2328] sm:$0xff]
  %v1180 = vld [vmem:[%s1 + $0x2330] sm:$0xff]
  %v1181 = vld [vmem:[%s1 + $0x2338] sm:$0xff]
  %v1182 = vld [vmem:[%s1 + $0x2340] sm:$0xff]
  %v1183 = vld [vmem:[%s1 + $0x2348] sm:$0xff]
  %v1184 = vld [vmem:[%s1 + $0x2350] sm:$0xff]
  %v1185 = vld [vmem:[%s1 + $0x2358] sm:$0xff]
  %v1186 = vld [vmem:[%s1 + $0x2360] sm:$0xff]
  %v1187 = vld [vmem:[%s1 + $0x2368] sm:$0xff]
  %v1188 = vld [vmem:[%s1 + $0x2370] sm:$0xff]
  %v1189 = vld [vmem:[%s1 + $0x2378] sm:$0xff]
  %v1190 = vld [vmem:[%s1 + $0x2380] sm:$0xff]
  %v1191 = vld [vmem:[%s1 + $0x2388] sm:$0xff]
  %v1192 = vld [vmem:[%s1 + $0x2390] sm:$0xff]
  %v1193 = vld [vmem:[%s1 + $0x2398] sm:$0xff]
  %v1194 = vld [vmem:[%s1 + $0x23a0] sm:$0xff]
  %v1195 = vld [vmem:[%s1 + $0x23a8] sm:$0xff]
  %v1196 = vld [vmem:[%s1 + $0x23b0] sm:$0xff]
  %v1197 = vld [vmem:[%s1 + $0x23b8] sm:$0xff]
  %v1198 = vld [vmem:[%s1 + $0x23c0] sm:$0xff]
  %v1199 = vld [vmem:[%s1 + $0x23c8] sm:$0xff]
  %v1200 = vld [vmem:[%s1 + $0x23d0] sm:$0xff]
  %v1201 = vld [vmem:[%s1 + $0x23d8] sm:$0xff]
  %v1202 = vld [vmem:[%s1 + $0x23e0] sm:$0xff]
  %v1203 = vld [vmem:[%s1 + $0x23e8] sm:$0xff]
  %v1204 = vld [vmem:[%s1 + $0x23f0] sm:$0xff]
  %v1205 = vld [vmem:[%s1 + $0x23f8] sm:$0xff]
  %1206 = vmatpush.msra.mxu0 %v84
  %1207 = vmatpush.msra.mxu0 %v82
  %1208 = vmatpush.msra.mxu0 %v80
  %1209 = vmatpush.msra.mxu0 %v78
  %1210 = vmatpush.msra.mxu0 %v76
  %1211 = vmatpush.msra.mxu0 %v74
  %1212 = vmatpush.msra.mxu0 %v72
  %1213 = vmatpush.msra.mxu0 %v70
  %1214 = vmatpush.msra.mxu0 %v68
  %1215 = vmatpush.msra.mxu0 %v66
  %1216 = vmatpush.msra.mxu0 %v64
  %1217 = vmatpush.msra.mxu0 %v62
  %1218 = vmatpush.msra.mxu0 %v60
  %1219 = vmatpush.msra.mxu0 %v58
  %1220 = vmatpush.msra.mxu0 %v56
  %1221 = vmatpush.msra.mxu0 %v54
  %1222 = vmatmul.f32.gmra.mxu0 %v18
  %v1223 = vpop.f32.mrf.mxu0
  %v1224 = vadd.f32 0.0, %v1223
  %1225 = vdwg.mxu0
  %1226 = vmatpush.msra.mxu0 %v116
  %1227 = vmatpush.msra.mxu0 %v114
  %1228 = vmatpush.msra.mxu0 %v112
  %1229 = vmatpush.msra.mxu0 %v110
  %1230 = vmatpush.msra.mxu0 %v108
  %1231 = vmatpush.msra.mxu0 %v106
  %1232 = vmatpush.msra.mxu0 %v104
  %1233 = vmatpush.msra.mxu0 %v102
  %1234 = vmatpush.msra.mxu0 %v100
  %1235 = vmatpush.msra.mxu0 %v98
  %1236 = vmatpush.msra.mxu0 %v96
  %1237 = vmatpush.msra.mxu0 %v94
  %1238 = vmatpush.msra.mxu0 %v92
  %1239 = vmatpush.msra.mxu0 %v90
  %1240 = vmatpush.msra.mxu0 %v88
  %1241 = vmatpush.msra.mxu0 %v86
  %1242 = vmatmul.f32.gmra.mxu0 %v19
  %v1243 = vpop.f32.mrf.mxu0
  %v1244 = vadd.f32 %v1224, %v1243
  %1245 = vdwg.mxu0
  %1246 = vmatpush.msra.mxu0 %v148
  %1247 = vmatpush.msra.mxu0 %v146
  %1248 = vmatpush.msra.mxu0 %v144
  %1249 = vmatpush.msra.mxu0 %v142
  %1250 = vmatpush.msra.mxu0 %v140
  %1251 = vmatpush.msra.mxu0 %v138
  %1252 = vmatpush.msra.mxu0 %v136
  %1253 = vmatpush.msra.mxu0 %v134
  %1254 = vmatpush.msra.mxu0 %v132
  %1255 = vmatpush.msra.mxu0 %v130
  %1256 = vmatpush.msra.mxu0 %v128
  %1257 = vmatpush.msra.mxu0 %v126
  %1258 = vmatpush.msra.mxu0 %v124
  %1259 = vmatpush.msra.mxu0 %v122
  %1260 = vmatpush.msra.mxu0 %v120
  %1261 = vmatpush.msra.mxu0 %v118
  %1262 = vmatmul.f32.gmra.mxu0 %v20
  %v1263 = vpop.f32.mrf.mxu0
  %v1264 = vadd.f32 %v1244, %v1263
  %1265 = vdwg.mxu0
  %1266 = vmatpush.msra.mxu0 %v180
  %1267 = vmatpush.msra.mxu0 %v178
  %1268 = vmatpush.msra.mxu0 %v176
  %1269 = vmatpush.msra.mxu0 %v174
  %1270 = vmatpush.msra.mxu0 %v172
  %1271 = vmatpush.msra.mxu0 %v170
  %1272 = vmatpush.msra.mxu0 %v168
  %1273 = vmatpush.msra.mxu0 %v166
  %1274 = vmatpush.msra.mxu0 %v164
  %1275 = vmatpush.msra.mxu0 %v162
  %1276 = vmatpush.msra.mxu0 %v160
  %1277 = vmatpush.msra.mxu0 %v158
  %1278 = vmatpush.msra.mxu0 %v156
  %1279 = vmatpush.msra.mxu0 %v154
  %1280 = vmatpush.msra.mxu0 %v152
  %1281 = vmatpush.msra.mxu0 %v150
  %1282 = vmatmul.f32.gmra.mxu0 %v21
  %v1283 = vpop.f32.mrf.mxu0
  %v1284 = vadd.f32 %v1264, %v1283
  %1285 = vdwg.mxu0
  %1286 = vmatpush.msra.mxu0 %v212
  %1287 = vmatpush.msra.mxu0 %v210
  %1288 = vmatpush.msra.mxu0 %v208
  %1289 = vmatpush.msra.mxu0 %v206
  %1290 = vmatpush.msra.mxu0 %v204
  %1291 = vmatpush.msra.mxu0 %v202
  %1292 = vmatpush.msra.mxu0 %v200
  %1293 = vmatpush.msra.mxu0 %v198
  %1294 = vmatpush.msra.mxu0 %v196
  %1295 = vmatpush.msra.mxu0 %v194
  %1296 = vmatpush.msra.mxu0 %v192
  %1297 = vmatpush.msra.mxu0 %v190
  %1298 = vmatpush.msra.mxu0 %v188
  %1299 = vmatpush.msra.mxu0 %v186
  %1300 = vmatpush.msra.mxu0 %v184
  %1301 = vmatpush.msra.mxu0 %v182
  %1302 = vmatmul.f32.gmra.mxu0 %v22
  %v1303 = vpop.f32.mrf.mxu0
  %v1304 = vadd.f32 %v1284, %v1303
  %1305 = vdwg.mxu0
  %1306 = vmatpush.msra.mxu0 %v244
  %1307 = vmatpush.msra.mxu0 %v242
  %1308 = vmatpush.msra.mxu0 %v240
  %1309 = vmatpush.msra.mxu0 %v238
  %1310 = vmatpush.msra.mxu0 %v236
  %1311 = vmatpush.msra.mxu0 %v234
  %1312 = vmatpush.msra.mxu0 %v232
  %1313 = vmatpush.msra.mxu0 %v230
  %1314 = vmatpush.msra.mxu0 %v228
  %1315 = vmatpush.msra.mxu0 %v226
  %1316 = vmatpush.msra.mxu0 %v224
  %1317 = vmatpush.msra.mxu0 %v222
  %1318 = vmatpush.msra.mxu0 %v220
  %1319 = vmatpush.msra.mxu0 %v218
  %1320 = vmatpush.msra.mxu0 %v216
  %1321 = vmatpush.msra.mxu0 %v214
  %1322 = vmatmul.f32.gmra.mxu0 %v23
  %v1323 = vpop.f32.mrf.mxu0
  %v1324 = vadd.f32 %v1304, %v1323
  %1325 = vdwg.mxu0
  %1326 = vmatpush.msra.mxu0 %v276
  %1327 = vmatpush.msra.mxu0 %v274
  %1328 = vmatpush.msra.mxu0 %v272
  %1329 = vmatpush.msra.mxu0 %v270
  %1330 = vmatpush.msra.mxu0 %v268
  %1331 = vmatpush.msra.mxu0 %v266
  %1332 = vmatpush.msra.mxu0 %v264
  %1333 = vmatpush.msra.mxu0 %v262
  %1334 = vmatpush.msra.mxu0 %v260
  %1335 = vmatpush.msra.mxu0 %v258
  %1336 = vmatpush.msra.mxu0 %v256
  %1337 = vmatpush.msra.mxu0 %v254
  %1338 = vmatpush.msra.mxu0 %v252
  %1339 = vmatpush.msra.mxu0 %v250
  %1340 = vmatpush.msra.mxu0 %v248
  %1341 = vmatpush.msra.mxu0 %v246
  %1342 = vmatmul.f32.gmra.mxu0 %v24
  %v1343 = vpop.f32.mrf.mxu0
  %v1344 = vadd.f32 %v1324, %v1343
  %1345 = vdwg.mxu0
  %1346 = vmatpush.msra.mxu0 %v308
  %1347 = vmatpush.msra.mxu0 %v306
  %1348 = vmatpush.msra.mxu0 %v304
  %1349 = vmatpush.msra.mxu0 %v302
  %1350 = vmatpush.msra.mxu0 %v300
  %1351 = vmatpush.msra.mxu0 %v298
  %1352 = vmatpush.msra.mxu0 %v296
  %1353 = vmatpush.msra.mxu0 %v294
  %1354 = vmatpush.msra.mxu0 %v292
  %1355 = vmatpush.msra.mxu0 %v290
  %1356 = vmatpush.msra.mxu0 %v288
  %1357 = vmatpush.msra.mxu0 %v286
  %1358 = vmatpush.msra.mxu0 %v284
  %1359 = vmatpush.msra.mxu0 %v282
  %1360 = vmatpush.msra.mxu0 %v280
  %1361 = vmatpush.msra.mxu0 %v278
  %1362 = vmatmul.f32.gmra.mxu0 %v25
  %v1363 = vpop.f32.mrf.mxu0
  %v1364 = vadd.f32 %v1344, %v1363
  %1365 = vdwg.mxu0
  %1366 = vmatpush.msra.mxu0 %v340
  %1367 = vmatpush.msra.mxu0 %v338
  %1368 = vmatpush.msra.mxu0 %v336
  %1369 = vmatpush.msra.mxu0 %v334
  %1370 = vmatpush.msra.mxu0 %v332
  %1371 = vmatpush.msra.mxu0 %v330
  %1372 = vmatpush.msra.mxu0 %v328
  %1373 = vmatpush.msra.mxu0 %v326
  %1374 = vmatpush.msra.mxu0 %v324
  %1375 = vmatpush.msra.mxu0 %v322
  %1376 = vmatpush.msra.mxu0 %v320
  %1377 = vmatpush.msra.mxu0 %v318
  %1378 = vmatpush.msra.mxu0 %v316
  %1379 = vmatpush.msra.mxu0 %v314
  %1380 = vmatpush.msra.mxu0 %v312
  %1381 = vmatpush.msra.mxu0 %v310
  %1382 = vmatmul.f32.gmra.mxu0 %v26
  %v1383 = vpop.f32.mrf.mxu0
  %v1384 = vadd.f32 %v1364, %v1383
  %1385 = vdwg.mxu0
  %1386 = vmatpush.msra.mxu0 %v372
  %1387 = vmatpush.msra.mxu0 %v370
  %1388 = vmatpush.msra.mxu0 %v368
  %1389 = vmatpush.msra.mxu0 %v366
  %1390 = vmatpush.msra.mxu0 %v364
  %1391 = vmatpush.msra.mxu0 %v362
  %1392 = vmatpush.msra.mxu0 %v360
  %1393 = vmatpush.msra.mxu0 %v358
  %1394 = vmatpush.msra.mxu0 %v356
  %1395 = vmatpush.msra.mxu0 %v354
  %1396 = vmatpush.msra.mxu0 %v352
  %1397 = vmatpush.msra.mxu0 %v350
  %1398 = vmatpush.msra.mxu0 %v348
  %1399 = vmatpush.msra.mxu0 %v346
  %1400 = vmatpush.msra.mxu0 %v344
  %1401 = vmatpush.msra.mxu0 %v342
  %1402 = vmatmul.f32.gmra.mxu0 %v27
  %v1403 = vpop.f32.mrf.mxu0
  %v1404 = vadd.f32 %v1384, %v1403
  %1405 = vdwg.mxu0
  %1406 = vmatpush.msra.mxu0 %v404
  %1407 = vmatpush.msra.mxu0 %v402
  %1408 = vmatpush.msra.mxu0 %v400
  %1409 = vmatpush.msra.mxu0 %v398
  %1410 = vmatpush.msra.mxu0 %v396
  %1411 = vmatpush.msra.mxu0 %v394
  %1412 = vmatpush.msra.mxu0 %v392
  %1413 = vmatpush.msra.mxu0 %v390
  %1414 = vmatpush.msra.mxu0 %v388
  %1415 = vmatpush.msra.mxu0 %v386
  %1416 = vmatpush.msra.mxu0 %v384
  %1417 = vmatpush.msra.mxu0 %v382
  %1418 = vmatpush.msra.mxu0 %v380
  %1419 = vmatpush.msra.mxu0 %v378
  %1420 = vmatpush.msra.mxu0 %v376
  %1421 = vmatpush.msra.mxu0 %v374
  %1422 = vmatmul.f32.gmra.mxu0 %v28
  %v1423 = vpop.f32.mrf.mxu0
  %v1424 = vadd.f32 %v1404, %v1423
  %1425 = vdwg.mxu0
  %1426 = vmatpush.msra.mxu0 %v436
  %1427 = vmatpush.msra.mxu0 %v434
  %1428 = vmatpush.msra.mxu0 %v432
  %1429 = vmatpush.msra.mxu0 %v430
  %1430 = vmatpush.msra.mxu0 %v428
  %1431 = vmatpush.msra.mxu0 %v426
  %1432 = vmatpush.msra.mxu0 %v424
  %1433 = vmatpush.msra.mxu0 %v422
  %1434 = vmatpush.msra.mxu0 %v420
  %1435 = vmatpush.msra.mxu0 %v418
  %1436 = vmatpush.msra.mxu0 %v416
  %1437 = vmatpush.msra.mxu0 %v414
  %1438 = vmatpush.msra.mxu0 %v412
  %1439 = vmatpush.msra.mxu0 %v410
  %1440 = vmatpush.msra.mxu0 %v408
  %1441 = vmatpush.msra.mxu0 %v406
  %1442 = vmatmul.f32.gmra.mxu0 %v29
  %v1443 = vpop.f32.mrf.mxu0
  %v1444 = vadd.f32 %v1424, %v1443
  %1445 = vdwg.mxu0
  %1446 = vmatpush.msra.mxu0 %v468
  %1447 = vmatpush.msra.mxu0 %v466
  %1448 = vmatpush.msra.mxu0 %v464
  %1449 = vmatpush.msra.mxu0 %v462
  %1450 = vmatpush.msra.mxu0 %v460
  %1451 = vmatpush.msra.mxu0 %v458
  %1452 = vmatpush.msra.mxu0 %v456
  %1453 = vmatpush.msra.mxu0 %v454
  %1454 = vmatpush.msra.mxu0 %v452
  %1455 = vmatpush.msra.mxu0 %v450
  %1456 = vmatpush.msra.mxu0 %v448
  %1457 = vmatpush.msra.mxu0 %v446
  %1458 = vmatpush.msra.mxu0 %v444
  %1459 = vmatpush.msra.mxu0 %v442
  %1460 = vmatpush.msra.mxu0 %v440
  %1461 = vmatpush.msra.mxu0 %v438
  %1462 = vmatmul.f32.gmra.mxu0 %v30
  %v1463 = vpop.f32.mrf.mxu0
  %v1464 = vadd.f32 %v1444, %v1463
  %1465 = vdwg.mxu0
  %1466 = vmatpush.msra.mxu0 %v500
  %1467 = vmatpush.msra.mxu0 %v498
  %1468 = vmatpush.msra.mxu0 %v496
  %1469 = vmatpush.msra.mxu0 %v494
  %1470 = vmatpush.msra.mxu0 %v492
  %1471 = vmatpush.msra.mxu0 %v490
  %1472 = vmatpush.msra.mxu0 %v488
  %1473 = vmatpush.msra.mxu0 %v486
  %1474 = vmatpush.msra.mxu0 %v484
  %1475 = vmatpush.msra.mxu0 %v482
  %1476 = vmatpush.msra.mxu0 %v480
  %1477 = vmatpush.msra.mxu0 %v478
  %1478 = vmatpush.msra.mxu0 %v476
  %1479 = vmatpush.msra.mxu0 %v474
  %1480 = vmatpush.msra.mxu0 %v472
  %1481 = vmatpush.msra.mxu0 %v470
  %1482 = vmatmul.f32.gmra.mxu0 %v31
  %v1483 = vpop.f32.mrf.mxu0
  %v1484 = vadd.f32 %v1464, %v1483
  %1485 = vdwg.mxu0
  %1486 = vmatpush.msra.mxu0 %v532
  %1487 = vmatpush.msra.mxu0 %v530
  %1488 = vmatpush.msra.mxu0 %v528
  %1489 = vmatpush.msra.mxu0 %v526
  %1490 = vmatpush.msra.mxu0 %v524
  %1491 = vmatpush.msra.mxu0 %v522
  %1492 = vmatpush.msra.mxu0 %v520
  %1493 = vmatpush.msra.mxu0 %v518
  %1494 = vmatpush.msra.mxu0 %v516
  %1495 = vmatpush.msra.mxu0 %v514
  %1496 = vmatpush.msra.mxu0 %v512
  %1497 = vmatpush.msra.mxu0 %v510
  %1498 = vmatpush.msra.mxu0 %v508
  %1499 = vmatpush.msra.mxu0 %v506
  %1500 = vmatpush.msra.mxu0 %v504
  %1501 = vmatpush.msra.mxu0 %v502
  %1502 = vmatmul.f32.gmra.mxu0 %v32
  %v1503 = vpop.f32.mrf.mxu0
  %v1504 = vadd.f32 %v1484, %v1503
  %1505 = vdwg.mxu0
  %1506 = vmatpush.msra.mxu0 %v564
  %1507 = vmatpush.msra.mxu0 %v562
  %1508 = vmatpush.msra.mxu0 %v560
  %1509 = vmatpush.msra.mxu0 %v558
  %1510 = vmatpush.msra.mxu0 %v556
  %1511 = vmatpush.msra.mxu0 %v554
  %1512 = vmatpush.msra.mxu0 %v552
  %1513 = vmatpush.msra.mxu0 %v550
  %1514 = vmatpush.msra.mxu0 %v548
  %1515 = vmatpush.msra.mxu0 %v546
  %1516 = vmatpush.msra.mxu0 %v544
  %1517 = vmatpush.msra.mxu0 %v542
  %1518 = vmatpush.msra.mxu0 %v540
  %1519 = vmatpush.msra.mxu0 %v538
  %1520 = vmatpush.msra.mxu0 %v536
  %1521 = vmatpush.msra.mxu0 %v534
  %1522 = vmatmul.f32.gmra.mxu0 %v33
  %v1523 = vpop.f32.mrf.mxu0
  %v1524 = vadd.f32 %v1504, %v1523
  %1525 = vdwg.mxu0
  %1526 = vmatpush.msra.mxu0 %v596
  %1527 = vmatpush.msra.mxu0 %v594
  %1528 = vmatpush.msra.mxu0 %v592
  %1529 = vmatpush.msra.mxu0 %v590
  %1530 = vmatpush.msra.mxu0 %v588
  %1531 = vmatpush.msra.mxu0 %v586
  %1532 = vmatpush.msra.mxu0 %v584
  %1533 = vmatpush.msra.mxu0 %v582
  %1534 = vmatpush.msra.mxu0 %v580
  %1535 = vmatpush.msra.mxu0 %v578
  %1536 = vmatpush.msra.mxu0 %v576
  %1537 = vmatpush.msra.mxu0 %v574
  %1538 = vmatpush.msra.mxu0 %v572
  %1539 = vmatpush.msra.mxu0 %v570
  %1540 = vmatpush.msra.mxu0 %v568
  %1541 = vmatpush.msra.mxu0 %v566
  %1542 = vmatmul.f32.gmra.mxu0 %v34
  %v1543 = vpop.f32.mrf.mxu0
  %v1544 = vadd.f32 %v1524, %v1543
  %1545 = vdwg.mxu0
  %1546 = vmatpush.msra.mxu0 %v628
  %1547 = vmatpush.msra.mxu0 %v626
  %1548 = vmatpush.msra.mxu0 %v624
  %1549 = vmatpush.msra.mxu0 %v622
  %1550 = vmatpush.msra.mxu0 %v620
  %1551 = vmatpush.msra.mxu0 %v618
  %1552 = vmatpush.msra.mxu0 %v616
  %1553 = vmatpush.msra.mxu0 %v614
  %1554 = vmatpush.msra.mxu0 %v612
  %1555 = vmatpush.msra.mxu0 %v610
  %1556 = vmatpush.msra.mxu0 %v608
  %1557 = vmatpush.msra.mxu0 %v606
  %1558 = vmatpush.msra.mxu0 %v604
  %1559 = vmatpush.msra.mxu0 %v602
  %1560 = vmatpush.msra.mxu0 %v600
  %1561 = vmatpush.msra.mxu0 %v598
  %1562 = vmatmul.f32.gmra.mxu0 %v35
  %v1563 = vpop.f32.mrf.mxu0
  %v1564 = vadd.f32 %v1544, %v1563
  %1565 = vdwg.mxu0
  %1566 = vmatpush.msra.mxu0 %v660
  %1567 = vmatpush.msra.mxu0 %v658
  %1568 = vmatpush.msra.mxu0 %v656
  %1569 = vmatpush.msra.mxu0 %v654
  %1570 = vmatpush.msra.mxu0 %v652
  %1571 = vmatpush.msra.mxu0 %v650
  %1572 = vmatpush.msra.mxu0 %v648
  %1573 = vmatpush.msra.mxu0 %v646
  %1574 = vmatpush.msra.mxu0 %v644
  %1575 = vmatpush.msra.mxu0 %v642
  %1576 = vmatpush.msra.mxu0 %v640
  %1577 = vmatpush.msra.mxu0 %v638
  %1578 = vmatpush.msra.mxu0 %v636
  %1579 = vmatpush.msra.mxu0 %v634
  %1580 = vmatpush.msra.mxu0 %v632
  %1581 = vmatpush.msra.mxu0 %v630
  %1582 = vmatmul.f32.gmra.mxu0 %v36
  %v1583 = vpop.f32.mrf.mxu0
  %v1584 = vadd.f32 %v1564, %v1583
  %1585 = vdwg.mxu0
  %1586 = vmatpush.msra.mxu0 %v692
  %1587 = vmatpush.msra.mxu0 %v690
  %1588 = vmatpush.msra.mxu0 %v688
  %1589 = vmatpush.msra.mxu0 %v686
  %1590 = vmatpush.msra.mxu0 %v684
  %1591 = vmatpush.msra.mxu0 %v682
  %1592 = vmatpush.msra.mxu0 %v680
  %1593 = vmatpush.msra.mxu0 %v678
  %1594 = vmatpush.msra.mxu0 %v676
  %1595 = vmatpush.msra.mxu0 %v674
  %1596 = vmatpush.msra.mxu0 %v672
  %1597 = vmatpush.msra.mxu0 %v670
  %1598 = vmatpush.msra.mxu0 %v668
  %1599 = vmatpush.msra.mxu0 %v666
  %1600 = vmatpush.msra.mxu0 %v664
  %1601 = vmatpush.msra.mxu0 %v662
  %1602 = vmatmul.f32.gmra.mxu0 %v37
  %v1603 = vpop.f32.mrf.mxu0
  %v1604 = vadd.f32 %v1584, %v1603
  %1605 = vdwg.mxu0
  %1606 = vmatpush.msra.mxu0 %v724
  %1607 = vmatpush.msra.mxu0 %v722
  %1608 = vmatpush.msra.mxu0 %v720
  %1609 = vmatpush.msra.mxu0 %v718
  %1610 = vmatpush.msra.mxu0 %v716
  %1611 = vmatpush.msra.mxu0 %v714
  %1612 = vmatpush.msra.mxu0 %v712
  %1613 = vmatpush.msra.mxu0 %v710
  %1614 = vmatpush.msra.mxu0 %v708
  %1615 = vmatpush.msra.mxu0 %v706
  %1616 = vmatpush.msra.mxu0 %v704
  %1617 = vmatpush.msra.mxu0 %v702
  %1618 = vmatpush.msra.mxu0 %v700
  %1619 = vmatpush.msra.mxu0 %v698
  %1620 = vmatpush.msra.mxu0 %v696
  %1621 = vmatpush.msra.mxu0 %v694
  %1622 = vmatmul.f32.gmra.mxu0 %v38
  %v1623 = vpop.f32.mrf.mxu0
  %v1624 = vadd.f32 %v1604, %v1623
  %1625 = vdwg.mxu0
  %1626 = vmatpush.msra.mxu0 %v756
  %1627 = vmatpush.msra.mxu0 %v754
  %1628 = vmatpush.msra.mxu0 %v752
  %1629 = vmatpush.msra.mxu0 %v750
  %1630 = vmatpush.msra.mxu0 %v748
  %1631 = vmatpush.msra.mxu0 %v746
  %1632 = vmatpush.msra.mxu0 %v744
  %1633 = vmatpush.msra.mxu0 %v742
  %1634 = vmatpush.msra.mxu0 %v740
  %1635 = vmatpush.msra.mxu0 %v738
  %1636 = vmatpush.msra.mxu0 %v736
  %1637 = vmatpush.msra.mxu0 %v734
  %1638 = vmatpush.msra.mxu0 %v732
  %1639 = vmatpush.msra.mxu0 %v730
  %1640 = vmatpush.msra.mxu0 %v728
  %1641 = vmatpush.msra.mxu0 %v726
  %1642 = vmatmul.f32.gmra.mxu0 %v39
  %v1643 = vpop.f32.mrf.mxu0
  %v1644 = vadd.f32 %v1624, %v1643
  %1645 = vdwg.mxu0
  %1646 = vmatpush.msra.mxu0 %v788
  %1647 = vmatpush.msra.mxu0 %v786
  %1648 = vmatpush.msra.mxu0 %v784
  %1649 = vmatpush.msra.mxu0 %v782
  %1650 = vmatpush.msra.mxu0 %v780
  %1651 = vmatpush.msra.mxu0 %v778
  %1652 = vmatpush.msra.mxu0 %v776
  %1653 = vmatpush.msra.mxu0 %v774
  %1654 = vmatpush.msra.mxu0 %v772
  %1655 = vmatpush.msra.mxu0 %v770
  %1656 = vmatpush.msra.mxu0 %v768
  %1657 = vmatpush.msra.mxu0 %v766
  %1658 = vmatpush.msra.mxu0 %v764
  %1659 = vmatpush.msra.mxu0 %v762
  %1660 = vmatpush.msra.mxu0 %v760
  %1661 = vmatpush.msra.mxu0 %v758
  %1662 = vmatmul.f32.gmra.mxu0 %v40
  %v1663 = vpop.f32.mrf.mxu0
  %v1664 = vadd.f32 %v1644, %v1663
  %1665 = vdwg.mxu0
  %1666 = vmatpush.msra.mxu0 %v820
  %1667 = vmatpush.msra.mxu0 %v818
  %1668 = vmatpush.msra.mxu0 %v816
  %1669 = vmatpush.msra.mxu0 %v814
  %1670 = vmatpush.msra.mxu0 %v812
  %1671 = vmatpush.msra.mxu0 %v810
  %1672 = vmatpush.msra.mxu0 %v808
  %1673 = vmatpush.msra.mxu0 %v806
  %1674 = vmatpush.msra.mxu0 %v804
  %1675 = vmatpush.msra.mxu0 %v802
  %1676 = vmatpush.msra.mxu0 %v800
  %1677 = vmatpush.msra.mxu0 %v798
  %1678 = vmatpush.msra.mxu0 %v796
  %1679 = vmatpush.msra.mxu0 %v794
  %1680 = vmatpush.msra.mxu0 %v792
  %1681 = vmatpush.msra.mxu0 %v790
  %1682 = vmatmul.f32.gmra.mxu0 %v41
  %v1683 = vpop.f32.mrf.mxu0
  %v1684 = vadd.f32 %v1664, %v1683
  %1685 = vdwg.mxu0
  %1686 = vmatpush.msra.mxu0 %v852
  %1687 = vmatpush.msra.mxu0 %v850
  %1688 = vmatpush.msra.mxu0 %v848
  %1689 = vmatpush.msra.mxu0 %v846
  %1690 = vmatpush.msra.mxu0 %v844
  %1691 = vmatpush.msra.mxu0 %v842
  %1692 = vmatpush.msra.mxu0 %v840
  %1693 = vmatpush.msra.mxu0 %v838
  %1694 = vmatpush.msra.mxu0 %v836
  %1695 = vmatpush.msra.mxu0 %v834
  %1696 = vmatpush.msra.mxu0 %v832
  %1697 = vmatpush.msra.mxu0 %v830
  %1698 = vmatpush.msra.mxu0 %v828
  %1699 = vmatpush.msra.mxu0 %v826
  %1700 = vmatpush.msra.mxu0 %v824
  %1701 = vmatpush.msra.mxu0 %v822
  %1702 = vmatmul.f32.gmra.mxu0 %v42
  %v1703 = vpop.f32.mrf.mxu0
  %v1704 = vadd.f32 %v1684, %v1703
  %1705 = vdwg.mxu0
  %1706 = vmatpush.msra.mxu0 %v884
  %1707 = vmatpush.msra.mxu0 %v882
  %1708 = vmatpush.msra.mxu0 %v880
  %1709 = vmatpush.msra.mxu0 %v878
  %1710 = vmatpush.msra.mxu0 %v876
  %1711 = vmatpush.msra.mxu0 %v874
  %1712 = vmatpush.msra.mxu0 %v872
  %1713 = vmatpush.msra.mxu0 %v870
  %1714 = vmatpush.msra.mxu0 %v868
  %1715 = vmatpush.msra.mxu0 %v866
  %1716 = vmatpush.msra.mxu0 %v864
  %1717 = vmatpush.msra.mxu0 %v862
  %1718 = vmatpush.msra.mxu0 %v860
  %1719 = vmatpush.msra.mxu0 %v858
  %1720 = vmatpush.msra.mxu0 %v856
  %1721 = vmatpush.msra.mxu0 %v854
  %1722 = vmatmul.f32.gmra.mxu0 %v43
  %v1723 = vpop.f32.mrf.mxu0
  %v1724 = vadd.f32 %v1704, %v1723
  %1725 = vdwg.mxu0
  %1726 = vmatpush.msra.mxu0 %v916
  %1727 = vmatpush.msra.mxu0 %v914
  %1728 = vmatpush.msra.mxu0 %v912
  %1729 = vmatpush.msra.mxu0 %v910
  %1730 = vmatpush.msra.mxu0 %v908
  %1731 = vmatpush.msra.mxu0 %v906
  %1732 = vmatpush.msra.mxu0 %v904
  %1733 = vmatpush.msra.mxu0 %v902
  %1734 = vmatpush.msra.mxu0 %v900
  %1735 = vmatpush.msra.mxu0 %v898
  %1736 = vmatpush.msra.mxu0 %v896
  %1737 = vmatpush.msra.mxu0 %v894
  %1738 = vmatpush.msra.mxu0 %v892
  %1739 = vmatpush.msra.mxu0 %v890
  %1740 = vmatpush.msra.mxu0 %v888
  %1741 = vmatpush.msra.mxu0 %v886
  %1742 = vmatmul.f32.gmra.mxu0 %v44
  %v1743 = vpop.f32.mrf.mxu0
  %v1744 = vadd.f32 %v1724, %v1743
  %1745 = vdwg.mxu0
  %1746 = vmatpush.msra.mxu0 %v948
  %1747 = vmatpush.msra.mxu0 %v946
  %1748 = vmatpush.msra.mxu0 %v944
  %1749 = vmatpush.msra.mxu0 %v942
  %1750 = vmatpush.msra.mxu0 %v940
  %1751 = vmatpush.msra.mxu0 %v938
  %1752 = vmatpush.msra.mxu0 %v936
  %1753 = vmatpush.msra.mxu0 %v934
  %1754 = vmatpush.msra.mxu0 %v932
  %1755 = vmatpush.msra.mxu0 %v930
  %1756 = vmatpush.msra.mxu0 %v928
  %1757 = vmatpush.msra.mxu0 %v926
  %1758 = vmatpush.msra.mxu0 %v924
  %1759 = vmatpush.msra.mxu0 %v922
  %1760 = vmatpush.msra.mxu0 %v920
  %1761 = vmatpush.msra.mxu0 %v918
  %1762 = vmatmul.f32.gmra.mxu0 %v45
  %v1763 = vpop.f32.mrf.mxu0
  %v1764 = vadd.f32 %v1744, %v1763
  %1765 = vdwg.mxu0
  %1766 = vmatpush.msra.mxu0 %v980
  %1767 = vmatpush.msra.mxu0 %v978
  %1768 = vmatpush.msra.mxu0 %v976
  %1769 = vmatpush.msra.mxu0 %v974
  %1770 = vmatpush.msra.mxu0 %v972
  %1771 = vmatpush.msra.mxu0 %v970
  %1772 = vmatpush.msra.mxu0 %v968
  %1773 = vmatpush.msra.mxu0 %v966
  %1774 = vmatpush.msra.mxu0 %v964
  %1775 = vmatpush.msra.mxu0 %v962
  %1776 = vmatpush.msra.mxu0 %v960
  %1777 = vmatpush.msra.mxu0 %v958
  %1778 = vmatpush.msra.mxu0 %v956
  %1779 = vmatpush.msra.mxu0 %v954
  %1780 = vmatpush.msra.mxu0 %v952
  %1781 = vmatpush.msra.mxu0 %v950
  %1782 = vmatmul.f32.gmra.mxu0 %v46
  %v1783 = vpop.f32.mrf.mxu0
  %v1784 = vadd.f32 %v1764, %v1783
  %1785 = vdwg.mxu0
  %1786 = vmatpush.msra.mxu0 %v1012
  %1787 = vmatpush.msra.mxu0 %v1010
  %1788 = vmatpush.msra.mxu0 %v1008
  %1789 = vmatpush.msra.mxu0 %v1006
  %1790 = vmatpush.msra.mxu0 %v1004
  %1791 = vmatpush.msra.mxu0 %v1002
  %1792 = vmatpush.msra.mxu0 %v1000
  %1793 = vmatpush.msra.mxu0 %v998
  %1794 = vmatpush.msra.mxu0 %v996
  %1795 = vmatpush.msra.mxu0 %v994
  %1796 = vmatpush.msra.mxu0 %v992
  %1797 = vmatpush.msra.mxu0 %v990
  %1798 = vmatpush.msra.mxu0 %v988
  %1799 = vmatpush.msra.mxu0 %v986
  %1800 = vmatpush.msra.mxu0 %v984
  %1801 = vmatpush.msra.mxu0 %v982
  %1802 = vmatmul.f32.gmra.mxu0 %v47
  %v1803 = vpop.f32.mrf.mxu0
  %v1804 = vadd.f32 %v1784, %v1803
  %1805 = vdwg.mxu0
  %1806 = vmatpush.msra.mxu0 %v1044
  %1807 = vmatpush.msra.mxu0 %v1042
  %1808 = vmatpush.msra.mxu0 %v1040
  %1809 = vmatpush.msra.mxu0 %v1038
  %1810 = vmatpush.msra.mxu0 %v1036
  %1811 = vmatpush.msra.mxu0 %v1034
  %1812 = vmatpush.msra.mxu0 %v1032
  %1813 = vmatpush.msra.mxu0 %v1030
  %1814 = vmatpush.msra.mxu0 %v1028
  %1815 = vmatpush.msra.mxu0 %v1026
  %1816 = vmatpush.msra.mxu0 %v1024
  %1817 = vmatpush.msra.mxu0 %v1022
  %1818 = vmatpush.msra.mxu0 %v1020
  %1819 = vmatpush.msra.mxu0 %v1018
  %1820 = vmatpush.msra.mxu0 %v1016
  %1821 = vmatpush.msra.mxu0 %v1014
  %1822 = vmatmul.f32.gmra.mxu0 %v48
  %v1823 = vpop.f32.mrf.mxu0
  %v1824 = vadd.f32 %v1804, %v1823
  %1825 = vdwg.mxu0
  %1826 = vmatpush.msra.mxu0 %v1076
  %1827 = vmatpush.msra.mxu0 %v1074
  %1828 = vmatpush.msra.mxu0 %v1072
  %1829 = vmatpush.msra.mxu0 %v1070
  %1830 = vmatpush.msra.mxu0 %v1068
  %1831 = vmatpush.msra.mxu0 %v1066
  %1832 = vmatpush.msra.mxu0 %v1064
  %1833 = vmatpush.msra.mxu0 %v1062
  %1834 = vmatpush.msra.mxu0 %v1060
  %1835 = vmatpush.msra.mxu0 %v1058
  %1836 = vmatpush.msra.mxu0 %v1056
  %1837 = vmatpush.msra.mxu0 %v1054
  %1838 = vmatpush.msra.mxu0 %v1052
  %1839 = vmatpush.msra.mxu0 %v1050
  %1840 = vmatpush.msra.mxu0 %v1048
  %1841 = vmatpush.msra.mxu0 %v1046
  %1842 = vmatmul.f32.gmra.mxu0 %v49
  %v1843 = vpop.f32.mrf.mxu0
  %v1844 = vadd.f32 %v1824, %v1843
  %1845 = vdwg.mxu0
  %1846 = vmatpush.msra.mxu0 %v1108
  %1847 = vmatpush.msra.mxu0 %v1106
  %1848 = vmatpush.msra.mxu0 %v1104
  %1849 = vmatpush.msra.mxu0 %v1102
  %1850 = vmatpush.msra.mxu0 %v1100
  %1851 = vmatpush.msra.mxu0 %v1098
  %1852 = vmatpush.msra.mxu0 %v1096
  %1853 = vmatpush.msra.mxu0 %v1094
  %1854 = vmatpush.msra.mxu0 %v1092
  %1855 = vmatpush.msra.mxu0 %v1090
  %1856 = vmatpush.msra.mxu0 %v1088
  %1857 = vmatpush.msra.mxu0 %v1086
  %1858 = vmatpush.msra.mxu0 %v1084
  %1859 = vmatpush.msra.mxu0 %v1082
  %1860 = vmatpush.msra.mxu0 %v1080
  %1861 = vmatpush.msra.mxu0 %v1078
  %1862 = vmatmul.f32.gmra.mxu0 %v50
  %v1863 = vpop.f32.mrf.mxu0
  %v1864 = vadd.f32 %v1844, %v1863
  %1865 = vdwg.mxu0
  %1866 = vmatpush.msra.mxu0 %v1140
  %1867 = vmatpush.msra.mxu0 %v1138
  %1868 = vmatpush.msra.mxu0 %v1136
  %1869 = vmatpush.msra.mxu0 %v1134
  %1870 = vmatpush.msra.mxu0 %v1132
  %1871 = vmatpush.msra.mxu0 %v1130
  %1872 = vmatpush.msra.mxu0 %v1128
  %1873 = vmatpush.msra.mxu0 %v1126
  %1874 = vmatpush.msra.mxu0 %v1124
  %1875 = vmatpush.msra.mxu0 %v1122
  %1876 = vmatpush.msra.mxu0 %v1120
  %1877 = vmatpush.msra.mxu0 %v1118
  %1878 = vmatpush.msra.mxu0 %v1116
  %1879 = vmatpush.msra.mxu0 %v1114
  %1880 = vmatpush.msra.mxu0 %v1112
  %1881 = vmatpush.msra.mxu0 %v1110
  %1882 = vmatmul.f32.gmra.mxu0 %v51
  %v1883 = vpop.f32.mrf.mxu0
  %v1884 = vadd.f32 %v1864, %v1883
  %1885 = vdwg.mxu0
  %1886 = vmatpush.msra.mxu0 %v1172
  %1887 = vmatpush.msra.mxu0 %v1170
  %1888 = vmatpush.msra.mxu0 %v1168
  %1889 = vmatpush.msra.mxu0 %v1166
  %1890 = vmatpush.msra.mxu0 %v1164
  %1891 = vmatpush.msra.mxu0 %v1162
  %1892 = vmatpush.msra.mxu0 %v1160
  %1893 = vmatpush.msra.mxu0 %v1158
  %1894 = vmatpush.msra.mxu0 %v1156
  %1895 = vmatpush.msra.mxu0 %v1154
  %1896 = vmatpush.msra.mxu0 %v1152
  %1897 = vmatpush.msra.mxu0 %v1150
  %1898 = vmatpush.msra.mxu0 %v1148
  %1899 = vmatpush.msra.mxu0 %v1146
  %1900 = vmatpush.msra.mxu0 %v1144
  %1901 = vmatpush.msra.mxu0 %v1142
  %1902 = vmatmul.f32.gmra.mxu0 %v52
  %v1903 = vpop.f32.mrf.mxu0
  %v1904 = vadd.f32 %v1884, %v1903
  %1905 = vdwg.mxu0
  %1906 = vmatpush.msra.mxu0 %v1204
  %1907 = vmatpush.msra.mxu0 %v1202
  %1908 = vmatpush.msra.mxu0 %v1200
  %1909 = vmatpush.msra.mxu0 %v1198
  %1910 = vmatpush.msra.mxu0 %v1196
  %1911 = vmatpush.msra.mxu0 %v1194
  %1912 = vmatpush.msra.mxu0 %v1192
  %1913 = vmatpush.msra.mxu0 %v1190
  %1914 = vmatpush.msra.mxu0 %v1188
  %1915 = vmatpush.msra.mxu0 %v1186
  %1916 = vmatpush.msra.mxu0 %v1184
  %1917 = vmatpush.msra.mxu0 %v1182
  %1918 = vmatpush.msra.mxu0 %v1180
  %1919 = vmatpush.msra.mxu0 %v1178
  %1920 = vmatpush.msra.mxu0 %v1176
  %1921 = vmatpush.msra.mxu0 %v1174
  %1922 = vmatmul.f32.gmra.mxu0 %v53
  %v1923 = vpop.f32.mrf.mxu0
  %v1924 = vadd.f32 %v1904, %v1923
  %1925 = vdwg.mxu0
  %1926 = vmatpush.msra.mxu0 %v85
  %1927 = vmatpush.msra.mxu0 %v83
  %1928 = vmatpush.msra.mxu0 %v81
  %1929 = vmatpush.msra.mxu0 %v79
  %1930 = vmatpush.msra.mxu0 %v77
  %1931 = vmatpush.msra.mxu0 %v75
  %1932 = vmatpush.msra.mxu0 %v73
  %1933 = vmatpush.msra.mxu0 %v71
  %1934 = vmatpush.msra.mxu0 %v69
  %1935 = vmatpush.msra.mxu0 %v67
  %1936 = vmatpush.msra.mxu0 %v65
  %1937 = vmatpush.msra.mxu0 %v63
  %1938 = vmatpush.msra.mxu0 %v61
  %1939 = vmatpush.msra.mxu0 %v59
  %1940 = vmatpush.msra.mxu0 %v57
  %1941 = vmatpush.msra.mxu0 %v55
  %1942 = vmatmul.f32.gmra.mxu0 %v18
  %v1943 = vpop.f32.mrf.mxu0
  %v1944 = vadd.f32 0.0, %v1943
  %1945 = vdwg.mxu0
  %1946 = vmatpush.msra.mxu0 %v117
  %1947 = vmatpush.msra.mxu0 %v115
  %1948 = vmatpush.msra.mxu0 %v113
  %1949 = vmatpush.msra.mxu0 %v111
  %1950 = vmatpush.msra.mxu0 %v109
  %1951 = vmatpush.msra.mxu0 %v107
  %1952 = vmatpush.msra.mxu0 %v105
  %1953 = vmatpush.msra.mxu0 %v103
  %1954 = vmatpush.msra.mxu0 %v101
  %1955 = vmatpush.msra.mxu0 %v99
  %1956 = vmatpush.msra.mxu0 %v97
  %1957 = vmatpush.msra.mxu0 %v95
  %1958 = vmatpush.msra.mxu0 %v93
  %1959 = vmatpush.msra.mxu0 %v91
  %1960 = vmatpush.msra.mxu0 %v89
  %1961 = vmatpush.msra.mxu0 %v87
  %1962 = vmatmul.f32.gmra.mxu0 %v19
  %v1963 = vpop.f32.mrf.mxu0
  %v1964 = vadd.f32 %v1944, %v1963
  %1965 = vdwg.mxu0
  %1966 = vmatpush.msra.mxu0 %v149
  %1967 = vmatpush.msra.mxu0 %v147
  %1968 = vmatpush.msra.mxu0 %v145
  %1969 = vmatpush.msra.mxu0 %v143
  %1970 = vmatpush.msra.mxu0 %v141
  %1971 = vmatpush.msra.mxu0 %v139
  %1972 = vmatpush.msra.mxu0 %v137
  %1973 = vmatpush.msra.mxu0 %v135
  %1974 = vmatpush.msra.mxu0 %v133
  %1975 = vmatpush.msra.mxu0 %v131
  %1976 = vmatpush.msra.mxu0 %v129
  %1977 = vmatpush.msra.mxu0 %v127
  %1978 = vmatpush.msra.mxu0 %v125
  %1979 = vmatpush.msra.mxu0 %v123
  %1980 = vmatpush.msra.mxu0 %v121
  %1981 = vmatpush.msra.mxu0 %v119
  %1982 = vmatmul.f32.gmra.mxu0 %v20
  %v1983 = vpop.f32.mrf.mxu0
  %v1984 = vadd.f32 %v1964, %v1983
  %1985 = vdwg.mxu0
  %1986 = vmatpush.msra.mxu0 %v181
  %1987 = vmatpush.msra.mxu0 %v179
  %1988 = vmatpush.msra.mxu0 %v177
  %1989 = vmatpush.msra.mxu0 %v175
  %1990 = vmatpush.msra.mxu0 %v173
  %1991 = vmatpush.msra.mxu0 %v171
  %1992 = vmatpush.msra.mxu0 %v169
  %1993 = vmatpush.msra.mxu0 %v167
  %1994 = vmatpush.msra.mxu0 %v165
  %1995 = vmatpush.msra.mxu0 %v163
  %1996 = vmatpush.msra.mxu0 %v161
  %1997 = vmatpush.msra.mxu0 %v159
  %1998 = vmatpush.msra.mxu0 %v157
  %1999 = vmatpush.msra.mxu0 %v155
  %2000 = vmatpush.msra.mxu0 %v153
  %2001 = vmatpush.msra.mxu0 %v151
  %2002 = vmatmul.f32.gmra.mxu0 %v21
  %v2003 = vpop.f32.mrf.mxu0
  %v2004 = vadd.f32 %v1984, %v2003
  %2005 = vdwg.mxu0
  %2006 = vmatpush.msra.mxu0 %v213
  %2007 = vmatpush.msra.mxu0 %v211
  %2008 = vmatpush.msra.mxu0 %v209
  %2009 = vmatpush.msra.mxu0 %v207
  %2010 = vmatpush.msra.mxu0 %v205
  %2011 = vmatpush.msra.mxu0 %v203
  %2012 = vmatpush.msra.mxu0 %v201
  %2013 = vmatpush.msra.mxu0 %v199
  %2014 = vmatpush.msra.mxu0 %v197
  %2015 = vmatpush.msra.mxu0 %v195
  %2016 = vmatpush.msra.mxu0 %v193
  %2017 = vmatpush.msra.mxu0 %v191
  %2018 = vmatpush.msra.mxu0 %v189
  %2019 = vmatpush.msra.mxu0 %v187
  %2020 = vmatpush.msra.mxu0 %v185
  %2021 = vmatpush.msra.mxu0 %v183
  %2022 = vmatmul.f32.gmra.mxu0 %v22
  %v2023 = vpop.f32.mrf.mxu0
  %v2024 = vadd.f32 %v2004, %v2023
  %2025 = vdwg.mxu0
  %2026 = vmatpush.msra.mxu0 %v245
  %2027 = vmatpush.msra.mxu0 %v243
  %2028 = vmatpush.msra.mxu0 %v241
  %2029 = vmatpush.msra.mxu0 %v239
  %2030 = vmatpush.msra.mxu0 %v237
  %2031 = vmatpush.msra.mxu0 %v235
  %2032 = vmatpush.msra.mxu0 %v233
  %2033 = vmatpush.msra.mxu0 %v231
  %2034 = vmatpush.msra.mxu0 %v229
  %2035 = vmatpush.msra.mxu0 %v227
  %2036 = vmatpush.msra.mxu0 %v225
  %2037 = vmatpush.msra.mxu0 %v223
  %2038 = vmatpush.msra.mxu0 %v221
  %2039 = vmatpush.msra.mxu0 %v219
  %2040 = vmatpush.msra.mxu0 %v217
  %2041 = vmatpush.msra.mxu0 %v215
  %2042 = vmatmul.f32.gmra.mxu0 %v23
  %v2043 = vpop.f32.mrf.mxu0
  %v2044 = vadd.f32 %v2024, %v2043
  %2045 = vdwg.mxu0
  %2046 = vmatpush.msra.mxu0 %v277
  %2047 = vmatpush.msra.mxu0 %v275
  %2048 = vmatpush.msra.mxu0 %v273
  %2049 = vmatpush.msra.mxu0 %v271
  %2050 = vmatpush.msra.mxu0 %v269
  %2051 = vmatpush.msra.mxu0 %v267
  %2052 = vmatpush.msra.mxu0 %v265
  %2053 = vmatpush.msra.mxu0 %v263
  %2054 = vmatpush.msra.mxu0 %v261
  %2055 = vmatpush.msra.mxu0 %v259
  %2056 = vmatpush.msra.mxu0 %v257
  %2057 = vmatpush.msra.mxu0 %v255
  %2058 = vmatpush.msra.mxu0 %v253
  %2059 = vmatpush.msra.mxu0 %v251
  %2060 = vmatpush.msra.mxu0 %v249
  %2061 = vmatpush.msra.mxu0 %v247
  %2062 = vmatmul.f32.gmra.mxu0 %v24
  %v2063 = vpop.f32.mrf.mxu0
  %v2064 = vadd.f32 %v2044, %v2063
  %2065 = vdwg.mxu0
  %2066 = vmatpush.msra.mxu0 %v309
  %2067 = vmatpush.msra.mxu0 %v307
  %2068 = vmatpush.msra.mxu0 %v305
  %2069 = vmatpush.msra.mxu0 %v303
  %2070 = vmatpush.msra.mxu0 %v301
  %2071 = vmatpush.msra.mxu0 %v299
  %2072 = vmatpush.msra.mxu0 %v297
  %2073 = vmatpush.msra.mxu0 %v295
  %2074 = vmatpush.msra.mxu0 %v293
  %2075 = vmatpush.msra.mxu0 %v291
  %2076 = vmatpush.msra.mxu0 %v289
  %2077 = vmatpush.msra.mxu0 %v287
  %2078 = vmatpush.msra.mxu0 %v285
  %2079 = vmatpush.msra.mxu0 %v283
  %2080 = vmatpush.msra.mxu0 %v281
  %2081 = vmatpush.msra.mxu0 %v279
  %2082 = vmatmul.f32.gmra.mxu0 %v25
  %v2083 = vpop.f32.mrf.mxu0
  %v2084 = vadd.f32 %v2064, %v2083
  %2085 = vdwg.mxu0
  %2086 = vmatpush.msra.mxu0 %v341
  %2087 = vmatpush.msra.mxu0 %v339
  %2088 = vmatpush.msra.mxu0 %v337
  %2089 = vmatpush.msra.mxu0 %v335
  %2090 = vmatpush.msra.mxu0 %v333
  %2091 = vmatpush.msra.mxu0 %v331
  %2092 = vmatpush.msra.mxu0 %v329
  %2093 = vmatpush.msra.mxu0 %v327
  %2094 = vmatpush.msra.mxu0 %v325
  %2095 = vmatpush.msra.mxu0 %v323
  %2096 = vmatpush.msra.mxu0 %v321
  %2097 = vmatpush.msra.mxu0 %v319
  %2098 = vmatpush.msra.mxu0 %v317
  %2099 = vmatpush.msra.mxu0 %v315
  %2100 = vmatpush.msra.mxu0 %v313
  %2101 = vmatpush.msra.mxu0 %v311
  %2102 = vmatmul.f32.gmra.mxu0 %v26
  %v2103 = vpop.f32.mrf.mxu0
  %v2104 = vadd.f32 %v2084, %v2103
  %2105 = vdwg.mxu0
  %2106 = vmatpush.msra.mxu0 %v373
  %2107 = vmatpush.msra.mxu0 %v371
  %2108 = vmatpush.msra.mxu0 %v369
  %2109 = vmatpush.msra.mxu0 %v367
  %2110 = vmatpush.msra.mxu0 %v365
  %2111 = vmatpush.msra.mxu0 %v363
  %2112 = vmatpush.msra.mxu0 %v361
  %2113 = vmatpush.msra.mxu0 %v359
  %2114 = vmatpush.msra.mxu0 %v357
  %2115 = vmatpush.msra.mxu0 %v355
  %2116 = vmatpush.msra.mxu0 %v353
  %2117 = vmatpush.msra.mxu0 %v351
  %2118 = vmatpush.msra.mxu0 %v349
  %2119 = vmatpush.msra.mxu0 %v347
  %2120 = vmatpush.msra.mxu0 %v345
  %2121 = vmatpush.msra.mxu0 %v343
  %2122 = vmatmul.f32.gmra.mxu0 %v27
  %v2123 = vpop.f32.mrf.mxu0
  %v2124 = vadd.f32 %v2104, %v2123
  %2125 = vdwg.mxu0
  %2126 = vmatpush.msra.mxu0 %v405
  %2127 = vmatpush.msra.mxu0 %v403
  %2128 = vmatpush.msra.mxu0 %v401
  %2129 = vmatpush.msra.mxu0 %v399
  %2130 = vmatpush.msra.mxu0 %v397
  %2131 = vmatpush.msra.mxu0 %v395
  %2132 = vmatpush.msra.mxu0 %v393
  %2133 = vmatpush.msra.mxu0 %v391
  %2134 = vmatpush.msra.mxu0 %v389
  %2135 = vmatpush.msra.mxu0 %v387
  %2136 = vmatpush.msra.mxu0 %v385
  %2137 = vmatpush.msra.mxu0 %v383
  %2138 = vmatpush.msra.mxu0 %v381
  %2139 = vmatpush.msra.mxu0 %v379
  %2140 = vmatpush.msra.mxu0 %v377
  %2141 = vmatpush.msra.mxu0 %v375
  %2142 = vmatmul.f32.gmra.mxu0 %v28
  %v2143 = vpop.f32.mrf.mxu0
  %v2144 = vadd.f32 %v2124, %v2143
  %2145 = vdwg.mxu0
  %2146 = vmatpush.msra.mxu0 %v437
  %2147 = vmatpush.msra.mxu0 %v435
  %2148 = vmatpush.msra.mxu0 %v433
  %2149 = vmatpush.msra.mxu0 %v431
  %2150 = vmatpush.msra.mxu0 %v429
  %2151 = vmatpush.msra.mxu0 %v427
  %2152 = vmatpush.msra.mxu0 %v425
  %2153 = vmatpush.msra.mxu0 %v423
  %2154 = vmatpush.msra.mxu0 %v421
  %2155 = vmatpush.msra.mxu0 %v419
  %2156 = vmatpush.msra.mxu0 %v417
  %2157 = vmatpush.msra.mxu0 %v415
  %2158 = vmatpush.msra.mxu0 %v413
  %2159 = vmatpush.msra.mxu0 %v411
  %2160 = vmatpush.msra.mxu0 %v409
  %2161 = vmatpush.msra.mxu0 %v407
  %2162 = vmatmul.f32.gmra.mxu0 %v29
  %v2163 = vpop.f32.mrf.mxu0
  %v2164 = vadd.f32 %v2144, %v2163
  %2165 = vdwg.mxu0
  %2166 = vmatpush.msra.mxu0 %v469
  %2167 = vmatpush.msra.mxu0 %v467
  %2168 = vmatpush.msra.mxu0 %v465
  %2169 = vmatpush.msra.mxu0 %v463
  %2170 = vmatpush.msra.mxu0 %v461
  %2171 = vmatpush.msra.mxu0 %v459
  %2172 = vmatpush.msra.mxu0 %v457
  %2173 = vmatpush.msra.mxu0 %v455
  %2174 = vmatpush.msra.mxu0 %v453
  %2175 = vmatpush.msra.mxu0 %v451
  %2176 = vmatpush.msra.mxu0 %v449
  %2177 = vmatpush.msra.mxu0 %v447
  %2178 = vmatpush.msra.mxu0 %v445
  %2179 = vmatpush.msra.mxu0 %v443
  %2180 = vmatpush.msra.mxu0 %v441
  %2181 = vmatpush.msra.mxu0 %v439
  %2182 = vmatmul.f32.gmra.mxu0 %v30
  %v2183 = vpop.f32.mrf.mxu0
  %v2184 = vadd.f32 %v2164, %v2183
  %2185 = vdwg.mxu0
  %2186 = vmatpush.msra.mxu0 %v501
  %2187 = vmatpush.msra.mxu0 %v499
  %2188 = vmatpush.msra.mxu0 %v497
  %2189 = vmatpush.msra.mxu0 %v495
  %2190 = vmatpush.msra.mxu0 %v493
  %2191 = vmatpush.msra.mxu0 %v491
  %2192 = vmatpush.msra.mxu0 %v489
  %2193 = vmatpush.msra.mxu0 %v487
  %2194 = vmatpush.msra.mxu0 %v485
  %2195 = vmatpush.msra.mxu0 %v483
  %2196 = vmatpush.msra.mxu0 %v481
  %2197 = vmatpush.msra.mxu0 %v479
  %2198 = vmatpush.msra.mxu0 %v477
  %2199 = vmatpush.msra.mxu0 %v475
  %2200 = vmatpush.msra.mxu0 %v473
  %2201 = vmatpush.msra.mxu0 %v471
  %2202 = vmatmul.f32.gmra.mxu0 %v31
  %v2203 = vpop.f32.mrf.mxu0
  %v2204 = vadd.f32 %v2184, %v2203
  %2205 = vdwg.mxu0
  %2206 = vmatpush.msra.mxu0 %v533
  %2207 = vmatpush.msra.mxu0 %v531
  %2208 = vmatpush.msra.mxu0 %v529
  %2209 = vmatpush.msra.mxu0 %v527
  %2210 = vmatpush.msra.mxu0 %v525
  %2211 = vmatpush.msra.mxu0 %v523
  %2212 = vmatpush.msra.mxu0 %v521
  %2213 = vmatpush.msra.mxu0 %v519
  %2214 = vmatpush.msra.mxu0 %v517
  %2215 = vmatpush.msra.mxu0 %v515
  %2216 = vmatpush.msra.mxu0 %v513
  %2217 = vmatpush.msra.mxu0 %v511
  %2218 = vmatpush.msra.mxu0 %v509
  %2219 = vmatpush.msra.mxu0 %v507
  %2220 = vmatpush.msra.mxu0 %v505
  %2221 = vmatpush.msra.mxu0 %v503
  %2222 = vmatmul.f32.gmra.mxu0 %v32
  %v2223 = vpop.f32.mrf.mxu0
  %v2224 = vadd.f32 %v2204, %v2223
  %2225 = vdwg.mxu0
  %2226 = vmatpush.msra.mxu0 %v565
  %2227 = vmatpush.msra.mxu0 %v563
  %2228 = vmatpush.msra.mxu0 %v561
  %2229 = vmatpush.msra.mxu0 %v559
  %2230 = vmatpush.msra.mxu0 %v557
  %2231 = vmatpush.msra.mxu0 %v555
  %2232 = vmatpush.msra.mxu0 %v553
  %2233 = vmatpush.msra.mxu0 %v551
  %2234 = vmatpush.msra.mxu0 %v549
  %2235 = vmatpush.msra.mxu0 %v547
  %2236 = vmatpush.msra.mxu0 %v545
  %2237 = vmatpush.msra.mxu0 %v543
  %2238 = vmatpush.msra.mxu0 %v541
  %2239 = vmatpush.msra.mxu0 %v539
  %2240 = vmatpush.msra.mxu0 %v537
  %2241 = vmatpush.msra.mxu0 %v535
  %2242 = vmatmul.f32.gmra.mxu0 %v33
  %v2243 = vpop.f32.mrf.mxu0
  %v2244 = vadd.f32 %v2224, %v2243
  %2245 = vdwg.mxu0
  %2246 = vmatpush.msra.mxu0 %v597
  %2247 = vmatpush.msra.mxu0 %v595
  %2248 = vmatpush.msra.mxu0 %v593
  %2249 = vmatpush.msra.mxu0 %v591
  %2250 = vmatpush.msra.mxu0 %v589
  %2251 = vmatpush.msra.mxu0 %v587
  %2252 = vmatpush.msra.mxu0 %v585
  %2253 = vmatpush.msra.mxu0 %v583
  %2254 = vmatpush.msra.mxu0 %v581
  %2255 = vmatpush.msra.mxu0 %v579
  %2256 = vmatpush.msra.mxu0 %v577
  %2257 = vmatpush.msra.mxu0 %v575
  %2258 = vmatpush.msra.mxu0 %v573
  %2259 = vmatpush.msra.mxu0 %v571
  %2260 = vmatpush.msra.mxu0 %v569
  %2261 = vmatpush.msra.mxu0 %v567
  %2262 = vmatmul.f32.gmra.mxu0 %v34
  %v2263 = vpop.f32.mrf.mxu0
  %v2264 = vadd.f32 %v2244, %v2263
  %2265 = vdwg.mxu0
  %2266 = vmatpush.msra.mxu0 %v629
  %2267 = vmatpush.msra.mxu0 %v627
  %2268 = vmatpush.msra.mxu0 %v625
  %2269 = vmatpush.msra.mxu0 %v623
  %2270 = vmatpush.msra.mxu0 %v621
  %2271 = vmatpush.msra.mxu0 %v619
  %2272 = vmatpush.msra.mxu0 %v617
  %2273 = vmatpush.msra.mxu0 %v615
  %2274 = vmatpush.msra.mxu0 %v613
  %2275 = vmatpush.msra.mxu0 %v611
  %2276 = vmatpush.msra.mxu0 %v609
  %2277 = vmatpush.msra.mxu0 %v607
  %2278 = vmatpush.msra.mxu0 %v605
  %2279 = vmatpush.msra.mxu0 %v603
  %2280 = vmatpush.msra.mxu0 %v601
  %2281 = vmatpush.msra.mxu0 %v599
  %2282 = vmatmul.f32.gmra.mxu0 %v35
  %v2283 = vpop.f32.mrf.mxu0
  %v2284 = vadd.f32 %v2264, %v2283
  %2285 = vdwg.mxu0
  %2286 = vmatpush.msra.mxu0 %v661
  %2287 = vmatpush.msra.mxu0 %v659
  %2288 = vmatpush.msra.mxu0 %v657
  %2289 = vmatpush.msra.mxu0 %v655
  %2290 = vmatpush.msra.mxu0 %v653
  %2291 = vmatpush.msra.mxu0 %v651
  %2292 = vmatpush.msra.mxu0 %v649
  %2293 = vmatpush.msra.mxu0 %v647
  %2294 = vmatpush.msra.mxu0 %v645
  %2295 = vmatpush.msra.mxu0 %v643
  %2296 = vmatpush.msra.mxu0 %v641
  %2297 = vmatpush.msra.mxu0 %v639
  %2298 = vmatpush.msra.mxu0 %v637
  %2299 = vmatpush.msra.mxu0 %v635
  %2300 = vmatpush.msra.mxu0 %v633
  %2301 = vmatpush.msra.mxu0 %v631
  %2302 = vmatmul.f32.gmra.mxu0 %v36
  %v2303 = vpop.f32.mrf.mxu0
  %v2304 = vadd.f32 %v2284, %v2303
  %2305 = vdwg.mxu0
  %2306 = vmatpush.msra.mxu0 %v693
  %2307 = vmatpush.msra.mxu0 %v691
  %2308 = vmatpush.msra.mxu0 %v689
  %2309 = vmatpush.msra.mxu0 %v687
  %2310 = vmatpush.msra.mxu0 %v685
  %2311 = vmatpush.msra.mxu0 %v683
  %2312 = vmatpush.msra.mxu0 %v681
  %2313 = vmatpush.msra.mxu0 %v679
  %2314 = vmatpush.msra.mxu0 %v677
  %2315 = vmatpush.msra.mxu0 %v675
  %2316 = vmatpush.msra.mxu0 %v673
  %2317 = vmatpush.msra.mxu0 %v671
  %2318 = vmatpush.msra.mxu0 %v669
  %2319 = vmatpush.msra.mxu0 %v667
  %2320 = vmatpush.msra.mxu0 %v665
  %2321 = vmatpush.msra.mxu0 %v663
  %2322 = vmatmul.f32.gmra.mxu0 %v37
  %v2323 = vpop.f32.mrf.mxu0
  %v2324 = vadd.f32 %v2304, %v2323
  %2325 = vdwg.mxu0
  %2326 = vmatpush.msra.mxu0 %v725
  %2327 = vmatpush.msra.mxu0 %v723
  %2328 = vmatpush.msra.mxu0 %v721
  %2329 = vmatpush.msra.mxu0 %v719
  %2330 = vmatpush.msra.mxu0 %v717
  %2331 = vmatpush.msra.mxu0 %v715
  %2332 = vmatpush.msra.mxu0 %v713
  %2333 = vmatpush.msra.mxu0 %v711
  %2334 = vmatpush.msra.mxu0 %v709
  %2335 = vmatpush.msra.mxu0 %v707
  %2336 = vmatpush.msra.mxu0 %v705
  %2337 = vmatpush.msra.mxu0 %v703
  %2338 = vmatpush.msra.mxu0 %v701
  %2339 = vmatpush.msra.mxu0 %v699
  %2340 = vmatpush.msra.mxu0 %v697
  %2341 = vmatpush.msra.mxu0 %v695
  %2342 = vmatmul.f32.gmra.mxu0 %v38
  %v2343 = vpop.f32.mrf.mxu0
  %v2344 = vadd.f32 %v2324, %v2343
  %2345 = vdwg.mxu0
  %2346 = vmatpush.msra.mxu0 %v757
  %2347 = vmatpush.msra.mxu0 %v755
  %2348 = vmatpush.msra.mxu0 %v753
  %2349 = vmatpush.msra.mxu0 %v751
  %2350 = vmatpush.msra.mxu0 %v749
  %2351 = vmatpush.msra.mxu0 %v747
  %2352 = vmatpush.msra.mxu0 %v745
  %2353 = vmatpush.msra.mxu0 %v743
  %2354 = vmatpush.msra.mxu0 %v741
  %2355 = vmatpush.msra.mxu0 %v739
  %2356 = vmatpush.msra.mxu0 %v737
  %2357 = vmatpush.msra.mxu0 %v735
  %2358 = vmatpush.msra.mxu0 %v733
  %2359 = vmatpush.msra.mxu0 %v731
  %2360 = vmatpush.msra.mxu0 %v729
  %2361 = vmatpush.msra.mxu0 %v727
  %2362 = vmatmul.f32.gmra.mxu0 %v39
  %v2363 = vpop.f32.mrf.mxu0
  %v2364 = vadd.f32 %v2344, %v2363
  %2365 = vdwg.mxu0
  %2366 = vmatpush.msra.mxu0 %v789
  %2367 = vmatpush.msra.mxu0 %v787
  %2368 = vmatpush.msra.mxu0 %v785
  %2369 = vmatpush.msra.mxu0 %v783
  %2370 = vmatpush.msra.mxu0 %v781
  %2371 = vmatpush.msra.mxu0 %v779
  %2372 = vmatpush.msra.mxu0 %v777
  %2373 = vmatpush.msra.mxu0 %v775
  %2374 = vmatpush.msra.mxu0 %v773
  %2375 = vmatpush.msra.mxu0 %v771
  %2376 = vmatpush.msra.mxu0 %v769
  %2377 = vmatpush.msra.mxu0 %v767
  %2378 = vmatpush.msra.mxu0 %v765
  %2379 = vmatpush.msra.mxu0 %v763
  %2380 = vmatpush.msra.mxu0 %v761
  %2381 = vmatpush.msra.mxu0 %v759
  %2382 = vmatmul.f32.gmra.mxu0 %v40
  %v2383 = vpop.f32.mrf.mxu0
  %v2384 = vadd.f32 %v2364, %v2383
  %2385 = vdwg.mxu0
  %2386 = vmatpush.msra.mxu0 %v821
  %2387 = vmatpush.msra.mxu0 %v819
  %2388 = vmatpush.msra.mxu0 %v817
  %2389 = vmatpush.msra.mxu0 %v815
  %2390 = vmatpush.msra.mxu0 %v813
  %2391 = vmatpush.msra.mxu0 %v811
  %2392 = vmatpush.msra.mxu0 %v809
  %2393 = vmatpush.msra.mxu0 %v807
  %2394 = vmatpush.msra.mxu0 %v805
  %2395 = vmatpush.msra.mxu0 %v803
  %2396 = vmatpush.msra.mxu0 %v801
  %2397 = vmatpush.msra.mxu0 %v799
  %2398 = vmatpush.msra.mxu0 %v797
  %2399 = vmatpush.msra.mxu0 %v795
  %2400 = vmatpush.msra.mxu0 %v793
  %2401 = vmatpush.msra.mxu0 %v791
  %2402 = vmatmul.f32.gmra.mxu0 %v41
  %v2403 = vpop.f32.mrf.mxu0
  %v2404 = vadd.f32 %v2384, %v2403
  %2405 = vdwg.mxu0
  %2406 = vmatpush.msra.mxu0 %v853
  %2407 = vmatpush.msra.mxu0 %v851
  %2408 = vmatpush.msra.mxu0 %v849
  %2409 = vmatpush.msra.mxu0 %v847
  %2410 = vmatpush.msra.mxu0 %v845
  %2411 = vmatpush.msra.mxu0 %v843
  %2412 = vmatpush.msra.mxu0 %v841
  %2413 = vmatpush.msra.mxu0 %v839
  %2414 = vmatpush.msra.mxu0 %v837
  %2415 = vmatpush.msra.mxu0 %v835
  %2416 = vmatpush.msra.mxu0 %v833
  %2417 = vmatpush.msra.mxu0 %v831
  %2418 = vmatpush.msra.mxu0 %v829
  %2419 = vmatpush.msra.mxu0 %v827
  %2420 = vmatpush.msra.mxu0 %v825
  %2421 = vmatpush.msra.mxu0 %v823
  %2422 = vmatmul.f32.gmra.mxu0 %v42
  %v2423 = vpop.f32.mrf.mxu0
  %v2424 = vadd.f32 %v2404, %v2423
  %2425 = vdwg.mxu0
  %2426 = vmatpush.msra.mxu0 %v885
  %2427 = vmatpush.msra.mxu0 %v883
  %2428 = vmatpush.msra.mxu0 %v881
  %2429 = vmatpush.msra.mxu0 %v879
  %2430 = vmatpush.msra.mxu0 %v877
  %2431 = vmatpush.msra.mxu0 %v875
  %2432 = vmatpush.msra.mxu0 %v873
  %2433 = vmatpush.msra.mxu0 %v871
  %2434 = vmatpush.msra.mxu0 %v869
  %2435 = vmatpush.msra.mxu0 %v867
  %2436 = vmatpush.msra.mxu0 %v865
  %2437 = vmatpush.msra.mxu0 %v863
  %2438 = vmatpush.msra.mxu0 %v861
  %2439 = vmatpush.msra.mxu0 %v859
  %2440 = vmatpush.msra.mxu0 %v857
  %2441 = vmatpush.msra.mxu0 %v855
  %2442 = vmatmul.f32.gmra.mxu0 %v43
  %v2443 = vpop.f32.mrf.mxu0
  %v2444 = vadd.f32 %v2424, %v2443
  %2445 = vdwg.mxu0
  %2446 = vmatpush.msra.mxu0 %v917
  %2447 = vmatpush.msra.mxu0 %v915
  %2448 = vmatpush.msra.mxu0 %v913
  %2449 = vmatpush.msra.mxu0 %v911
  %2450 = vmatpush.msra.mxu0 %v909
  %2451 = vmatpush.msra.mxu0 %v907
  %2452 = vmatpush.msra.mxu0 %v905
  %2453 = vmatpush.msra.mxu0 %v903
  %2454 = vmatpush.msra.mxu0 %v901
  %2455 = vmatpush.msra.mxu0 %v899
  %2456 = vmatpush.msra.mxu0 %v897
  %2457 = vmatpush.msra.mxu0 %v895
  %2458 = vmatpush.msra.mxu0 %v893
  %2459 = vmatpush.msra.mxu0 %v891
  %2460 = vmatpush.msra.mxu0 %v889
  %2461 = vmatpush.msra.mxu0 %v887
  %2462 = vmatmul.f32.gmra.mxu0 %v44
  %v2463 = vpop.f32.mrf.mxu0
  %v2464 = vadd.f32 %v2444, %v2463
  %2465 = vdwg.mxu0
  %2466 = vmatpush.msra.mxu0 %v949
  %2467 = vmatpush.msra.mxu0 %v947
  %2468 = vmatpush.msra.mxu0 %v945
  %2469 = vmatpush.msra.mxu0 %v943
  %2470 = vmatpush.msra.mxu0 %v941
  %2471 = vmatpush.msra.mxu0 %v939
  %2472 = vmatpush.msra.mxu0 %v937
  %2473 = vmatpush.msra.mxu0 %v935
  %2474 = vmatpush.msra.mxu0 %v933
  %2475 = vmatpush.msra.mxu0 %v931
  %2476 = vmatpush.msra.mxu0 %v929
  %2477 = vmatpush.msra.mxu0 %v927
  %2478 = vmatpush.msra.mxu0 %v925
  %2479 = vmatpush.msra.mxu0 %v923
  %2480 = vmatpush.msra.mxu0 %v921
  %2481 = vmatpush.msra.mxu0 %v919
  %2482 = vmatmul.f32.gmra.mxu0 %v45
  %v2483 = vpop.f32.mrf.mxu0
  %v2484 = vadd.f32 %v2464, %v2483
  %2485 = vdwg.mxu0
  %2486 = vmatpush.msra.mxu0 %v981
  %2487 = vmatpush.msra.mxu0 %v979
  %2488 = vmatpush.msra.mxu0 %v977
  %2489 = vmatpush.msra.mxu0 %v975
  %2490 = vmatpush.msra.mxu0 %v973
  %2491 = vmatpush.msra.mxu0 %v971
  %2492 = vmatpush.msra.mxu0 %v969
  %2493 = vmatpush.msra.mxu0 %v967
  %2494 = vmatpush.msra.mxu0 %v965
  %2495 = vmatpush.msra.mxu0 %v963
  %2496 = vmatpush.msra.mxu0 %v961
  %2497 = vmatpush.msra.mxu0 %v959
  %2498 = vmatpush.msra.mxu0 %v957
  %2499 = vmatpush.msra.mxu0 %v955
  %2500 = vmatpush.msra.mxu0 %v953
  %2501 = vmatpush.msra.mxu0 %v951
  %2502 = vmatmul.f32.gmra.mxu0 %v46
  %v2503 = vpop.f32.mrf.mxu0
  %v2504 = vadd.f32 %v2484, %v2503
  %2505 = vdwg.mxu0
  %2506 = vmatpush.msra.mxu0 %v1013
  %2507 = vmatpush.msra.mxu0 %v1011
  %2508 = vmatpush.msra.mxu0 %v1009
  %2509 = vmatpush.msra.mxu0 %v1007
  %2510 = vmatpush.msra.mxu0 %v1005
  %2511 = vmatpush.msra.mxu0 %v1003
  %2512 = vmatpush.msra.mxu0 %v1001
  %2513 = vmatpush.msra.mxu0 %v999
  %2514 = vmatpush.msra.mxu0 %v997
  %2515 = vmatpush.msra.mxu0 %v995
  %2516 = vmatpush.msra.mxu0 %v993
  %2517 = vmatpush.msra.mxu0 %v991
  %2518 = vmatpush.msra.mxu0 %v989
  %2519 = vmatpush.msra.mxu0 %v987
  %2520 = vmatpush.msra.mxu0 %v985
  %2521 = vmatpush.msra.mxu0 %v983
  %2522 = vmatmul.f32.gmra.mxu0 %v47
  %v2523 = vpop.f32.mrf.mxu0
  %v2524 = vadd.f32 %v2504, %v2523
  %2525 = vdwg.mxu0
  %2526 = vmatpush.msra.mxu0 %v1045
  %2527 = vmatpush.msra.mxu0 %v1043
  %2528 = vmatpush.msra.mxu0 %v1041
  %2529 = vmatpush.msra.mxu0 %v1039
  %2530 = vmatpush.msra.mxu0 %v1037
  %2531 = vmatpush.msra.mxu0 %v1035
  %2532 = vmatpush.msra.mxu0 %v1033
  %2533 = vmatpush.msra.mxu0 %v1031
  %2534 = vmatpush.msra.mxu0 %v1029
  %2535 = vmatpush.msra.mxu0 %v1027
  %2536 = vmatpush.msra.mxu0 %v1025
  %2537 = vmatpush.msra.mxu0 %v1023
  %2538 = vmatpush.msra.mxu0 %v1021
  %2539 = vmatpush.msra.mxu0 %v1019
  %2540 = vmatpush.msra.mxu0 %v1017
  %2541 = vmatpush.msra.mxu0 %v1015
  %2542 = vmatmul.f32.gmra.mxu0 %v48
  %v2543 = vpop.f32.mrf.mxu0
  %v2544 = vadd.f32 %v2524, %v2543
  %2545 = vdwg.mxu0
  %2546 = vmatpush.msra.mxu0 %v1077
  %2547 = vmatpush.msra.mxu0 %v1075
  %2548 = vmatpush.msra.mxu0 %v1073
  %2549 = vmatpush.msra.mxu0 %v1071
  %2550 = vmatpush.msra.mxu0 %v1069
  %2551 = vmatpush.msra.mxu0 %v1067
  %2552 = vmatpush.msra.mxu0 %v1065
  %2553 = vmatpush.msra.mxu0 %v1063
  %2554 = vmatpush.msra.mxu0 %v1061
  %2555 = vmatpush.msra.mxu0 %v1059
  %2556 = vmatpush.msra.mxu0 %v1057
  %2557 = vmatpush.msra.mxu0 %v1055
  %2558 = vmatpush.msra.mxu0 %v1053
  %2559 = vmatpush.msra.mxu0 %v1051
  %2560 = vmatpush.msra.mxu0 %v1049
  %2561 = vmatpush.msra.mxu0 %v1047
  %2562 = vmatmul.f32.gmra.mxu0 %v49
  %v2563 = vpop.f32.mrf.mxu0
  %v2564 = vadd.f32 %v2544, %v2563
  %2565 = vdwg.mxu0
  %2566 = vmatpush.msra.mxu0 %v1109
  %2567 = vmatpush.msra.mxu0 %v1107
  %2568 = vmatpush.msra.mxu0 %v1105
  %2569 = vmatpush.msra.mxu0 %v1103
  %2570 = vmatpush.msra.mxu0 %v1101
  %2571 = vmatpush.msra.mxu0 %v1099
  %2572 = vmatpush.msra.mxu0 %v1097
  %2573 = vmatpush.msra.mxu0 %v1095
  %2574 = vmatpush.msra.mxu0 %v1093
  %2575 = vmatpush.msra.mxu0 %v1091
  %2576 = vmatpush.msra.mxu0 %v1089
  %2577 = vmatpush.msra.mxu0 %v1087
  %2578 = vmatpush.msra.mxu0 %v1085
  %2579 = vmatpush.msra.mxu0 %v1083
  %2580 = vmatpush.msra.mxu0 %v1081
  %2581 = vmatpush.msra.mxu0 %v1079
  %2582 = vmatmul.f32.gmra.mxu0 %v50
  %v2583 = vpop.f32.mrf.mxu0
  %v2584 = vadd.f32 %v2564, %v2583
  %2585 = vdwg.mxu0
  %2586 = vmatpush.msra.mxu0 %v1141
  %2587 = vmatpush.msra.mxu0 %v1139
  %2588 = vmatpush.msra.mxu0 %v1137
  %2589 = vmatpush.msra.mxu0 %v1135
  %2590 = vmatpush.msra.mxu0 %v1133
  %2591 = vmatpush.msra.mxu0 %v1131
  %2592 = vmatpush.msra.mxu0 %v1129
  %2593 = vmatpush.msra.mxu0 %v1127
  %2594 = vmatpush.msra.mxu0 %v1125
  %2595 = vmatpush.msra.mxu0 %v1123
  %2596 = vmatpush.msra.mxu0 %v1121
  %2597 = vmatpush.msra.mxu0 %v1119
  %2598 = vmatpush.msra.mxu0 %v1117
  %2599 = vmatpush.msra.mxu0 %v1115
  %2600 = vmatpush.msra.mxu0 %v1113
  %2601 = vmatpush.msra.mxu0 %v1111
  %2602 = vmatmul.f32.gmra.mxu0 %v51
  %v2603 = vpop.f32.mrf.mxu0
  %v2604 = vadd.f32 %v2584, %v2603
  %2605 = vdwg.mxu0
  %2606 = vmatpush.msra.mxu0 %v1173
  %2607 = vmatpush.msra.mxu0 %v1171
  %2608 = vmatpush.msra.mxu0 %v1169
  %2609 = vmatpush.msra.mxu0 %v1167
  %2610 = vmatpush.msra.mxu0 %v1165
  %2611 = vmatpush.msra.mxu0 %v1163
  %2612 = vmatpush.msra.mxu0 %v1161
  %2613 = vmatpush.msra.mxu0 %v1159
  %2614 = vmatpush.msra.mxu0 %v1157
  %2615 = vmatpush.msra.mxu0 %v1155
  %2616 = vmatpush.msra.mxu0 %v1153
  %2617 = vmatpush.msra.mxu0 %v1151
  %2618 = vmatpush.msra.mxu0 %v1149
  %2619 = vmatpush.msra.mxu0 %v1147
  %2620 = vmatpush.msra.mxu0 %v1145
  %2621 = vmatpush.msra.mxu0 %v1143
  %2622 = vmatmul.f32.gmra.mxu0 %v52
  %v2623 = vpop.f32.mrf.mxu0
  %v2624 = vadd.f32 %v2604, %v2623
  %2625 = vdwg.mxu0
  %2626 = vmatpush.msra.mxu0 %v1205
  %2627 = vmatpush.msra.mxu0 %v1203
  %2628 = vmatpush.msra.mxu0 %v1201
  %2629 = vmatpush.msra.mxu0 %v1199
  %2630 = vmatpush.msra.mxu0 %v1197
  %2631 = vmatpush.msra.mxu0 %v1195
  %2632 = vmatpush.msra.mxu0 %v1193
  %2633 = vmatpush.msra.mxu0 %v1191
  %2634 = vmatpush.msra.mxu0 %v1189
  %2635 = vmatpush.msra.mxu0 %v1187
  %2636 = vmatpush.msra.mxu0 %v1185
  %2637 = vmatpush.msra.mxu0 %v1183
  %2638 = vmatpush.msra.mxu0 %v1181
  %2639 = vmatpush.msra.mxu0 %v1179
  %2640 = vmatpush.msra.mxu0 %v1177
  %2641 = vmatpush.msra.mxu0 %v1175
  %2642 = vmatmul.f32.gmra.mxu0 %v53
  %v2643 = vpop.f32.mrf.mxu0
  %v2644 = vadd.f32 %v2624, %v2643
  %2645 = vdwg.mxu0
  %v2646 = vld [vmem:[%s2] sm:$0xff]
  %v2647 = vld [vmem:[%s2 + $0x8] sm:$0xff]
  %v2648 = vld [vmem:[%s2 + $0x10] sm:$0xff]
  %v2649 = vld [vmem:[%s2 + $0x18] sm:$0xff]
  %v2650 = vld [vmem:[%s2 + $0x20] sm:$0xff]
  %v2651 = vld [vmem:[%s2 + $0x28] sm:$0xff]
  %v2652 = vld [vmem:[%s2 + $0x30] sm:$0xff]
  %v2653 = vld [vmem:[%s2 + $0x38] sm:$0xff]
  %v2654 = vld [vmem:[%s2 + $0x40] sm:$0xff]
  %v2655 = vld [vmem:[%s2 + $0x48] sm:$0xff]
  %v2656 = vld [vmem:[%s2 + $0x50] sm:$0xff]
  %v2657 = vld [vmem:[%s2 + $0x58] sm:$0xff]
  %v2658 = vld [vmem:[%s2 + $0x60] sm:$0xff]
  %v2659 = vld [vmem:[%s2 + $0x68] sm:$0xff]
  %v2660 = vld [vmem:[%s2 + $0x70] sm:$0xff]
  %v2661 = vld [vmem:[%s2 + $0x78] sm:$0xff]
  %v2662 = vld [vmem:[%s2 + $0x80] sm:$0xff]
  %v2663 = vld [vmem:[%s2 + $0x88] sm:$0xff]
  %v2664 = vld [vmem:[%s2 + $0x90] sm:$0xff]
  %v2665 = vld [vmem:[%s2 + $0x98] sm:$0xff]
  %v2666 = vld [vmem:[%s2 + $0xa0] sm:$0xff]
  %v2667 = vld [vmem:[%s2 + $0xa8] sm:$0xff]
  %v2668 = vld [vmem:[%s2 + $0xb0] sm:$0xff]
  %v2669 = vld [vmem:[%s2 + $0xb8] sm:$0xff]
  %v2670 = vld [vmem:[%s2 + $0xc0] sm:$0xff]
  %v2671 = vld [vmem:[%s2 + $0xc8] sm:$0xff]
  %v2672 = vld [vmem:[%s2 + $0xd0] sm:$0xff]
  %v2673 = vld [vmem:[%s2 + $0xd8] sm:$0xff]
  %v2674 = vld [vmem:[%s2 + $0xe0] sm:$0xff]
  %v2675 = vld [vmem:[%s2 + $0xe8] sm:$0xff]
  %v2676 = vld [vmem:[%s2 + $0xf0] sm:$0xff]
  %v2677 = vld [vmem:[%s2 + $0xf8] sm:$0xff]
  %v2678 = vld [vmem:[%s2 + $0x100] sm:$0xff]
  %v2679 = vld [vmem:[%s2 + $0x108] sm:$0xff]
  %v2680 = vld [vmem:[%s2 + $0x110] sm:$0xff]
  %v2681 = vld [vmem:[%s2 + $0x118] sm:$0xff]
  %v2682 = vld [vmem:[%s2 + $0x120] sm:$0xff]
  %v2683 = vld [vmem:[%s2 + $0x128] sm:$0xff]
  %v2684 = vld [vmem:[%s2 + $0x130] sm:$0xff]
  %v2685 = vld [vmem:[%s2 + $0x138] sm:$0xff]
  %v2686 = vld [vmem:[%s2 + $0x140] sm:$0xff]
  %v2687 = vld [vmem:[%s2 + $0x148] sm:$0xff]
  %v2688 = vld [vmem:[%s2 + $0x150] sm:$0xff]
  %v2689 = vld [vmem:[%s2 + $0x158] sm:$0xff]
  %v2690 = vld [vmem:[%s2 + $0x160] sm:$0xff]
  %v2691 = vld [vmem:[%s2 + $0x168] sm:$0xff]
  %v2692 = vld [vmem:[%s2 + $0x170] sm:$0xff]
  %v2693 = vld [vmem:[%s2 + $0x178] sm:$0xff]
  %v2694 = vld [vmem:[%s2 + $0x180] sm:$0xff]
  %v2695 = vld [vmem:[%s2 + $0x188] sm:$0xff]
  %v2696 = vld [vmem:[%s2 + $0x190] sm:$0xff]
  %v2697 = vld [vmem:[%s2 + $0x198] sm:$0xff]
  %v2698 = vld [vmem:[%s2 + $0x1a0] sm:$0xff]
  %v2699 = vld [vmem:[%s2 + $0x1a8] sm:$0xff]
  %v2700 = vld [vmem:[%s2 + $0x1b0] sm:$0xff]
  %v2701 = vld [vmem:[%s2 + $0x1b8] sm:$0xff]
  %v2702 = vld [vmem:[%s2 + $0x1c0] sm:$0xff]
  %v2703 = vld [vmem:[%s2 + $0x1c8] sm:$0xff]
  %v2704 = vld [vmem:[%s2 + $0x1d0] sm:$0xff]
  %v2705 = vld [vmem:[%s2 + $0x1d8] sm:$0xff]
  %v2706 = vld [vmem:[%s2 + $0x1e0] sm:$0xff]
  %v2707 = vld [vmem:[%s2 + $0x1e8] sm:$0xff]
  %v2708 = vld [vmem:[%s2 + $0x1f0] sm:$0xff]
  %v2709 = vld [vmem:[%s2 + $0x1f8] sm:$0xff]
  %v2710 = vld [vmem:[%s2 + $0x200] sm:$0xff]
  %v2711 = vld [vmem:[%s2 + $0x208] sm:$0xff]
  %v2712 = vld [vmem:[%s2 + $0x210] sm:$0xff]
  %v2713 = vld [vmem:[%s2 + $0x218] sm:$0xff]
  %v2714 = vld [vmem:[%s2 + $0x220] sm:$0xff]
  %v2715 = vld [vmem:[%s2 + $0x228] sm:$0xff]
  %v2716 = vld [vmem:[%s2 + $0x230] sm:$0xff]
  %v2717 = vld [vmem:[%s2 + $0x238] sm:$0xff]
  %v2718 = vld [vmem:[%s2 + $0x240] sm:$0xff]
  %v2719 = vld [vmem:[%s2 + $0x248] sm:$0xff]
  %v2720 = vld [vmem:[%s2 + $0x250] sm:$0xff]
  %v2721 = vld [vmem:[%s2 + $0x258] sm:$0xff]
  %v2722 = vld [vmem:[%s2 + $0x260] sm:$0xff]
  %v2723 = vld [vmem:[%s2 + $0x268] sm:$0xff]
  %v2724 = vld [vmem:[%s2 + $0x270] sm:$0xff]
  %v2725 = vld [vmem:[%s2 + $0x278] sm:$0xff]
  %v2726 = vld [vmem:[%s2 + $0x280] sm:$0xff]
  %v2727 = vld [vmem:[%s2 + $0x288] sm:$0xff]
  %v2728 = vld [vmem:[%s2 + $0x290] sm:$0xff]
  %v2729 = vld [vmem:[%s2 + $0x298] sm:$0xff]
  %v2730 = vld [vmem:[%s2 + $0x2a0] sm:$0xff]
  %v2731 = vld [vmem:[%s2 + $0x2a8] sm:$0xff]
  %v2732 = vld [vmem:[%s2 + $0x2b0] sm:$0xff]
  %v2733 = vld [vmem:[%s2 + $0x2b8] sm:$0xff]
  %v2734 = vld [vmem:[%s2 + $0x2c0] sm:$0xff]
  %v2735 = vld [vmem:[%s2 + $0x2c8] sm:$0xff]
  %s2736 = sld [smem:[#allocation2]]
  %v2737 = vstv %s2736
  %vm2738 = vcmask 130048
  %v2740 = vsel %vm2738, %v2644, 0
  %2742 = vmatpush.msra.mxu0 %v2721
  %2743 = vmatpush.msra.mxu0 %v2716
  %2744 = vmatpush.msra.mxu0 %v2711
  %2745 = vmatpush.msra.mxu0 %v2706
  %2746 = vmatpush.msra.mxu0 %v2701
  %2747 = vmatpush.msra.mxu0 %v2696
  %2748 = vmatpush.msra.mxu0 %v2691
  %2749 = vmatpush.msra.mxu0 %v2686
  %2750 = vmatpush.msra.mxu0 %v2681
  %2751 = vmatpush.msra.mxu0 %v2676
  %2752 = vmatpush.msra.mxu0 %v2671
  %2753 = vmatpush.msra.mxu0 %v2666
  %2754 = vmatpush.msra.mxu0 %v2661
  %2755 = vmatpush.msra.mxu0 %v2656
  %2756 = vmatpush.msra.mxu0 %v2651
  %2757 = vmatpush.msra.mxu0 %v2646
  %2758 = vmatmul.f32.gmra.mxu0 %v1924
  %v2759 = vpop.f32.mrf.mxu0
  %v2760 = vadd.f32 %v2737, %v2759
  %2761 = vdwg.mxu0
  %2762 = vmatpush.msra.mxu0 0.0
  %2763 = vmatpush.msra.mxu0 0.0
  %2764 = vmatpush.msra.mxu0 0.0
  %2765 = vmatpush.msra.mxu0 0.0
  %2766 = vmatpush.msra.mxu0 0.0
  %2767 = vmatpush.msra.mxu0 0.0
  %2768 = vmatpush.msra.mxu0 0.0
  %2769 = vmatpush.msra.mxu0 0.0
  %2770 = vmatpush.msra.mxu0 0.0
  %2771 = vmatpush.msra.mxu0 0.0
  %2772 = vmatpush.msra.mxu0 0.0
  %2773 = vmatpush.msra.mxu0 0.0
  %2774 = vmatpush.msra.mxu0 0.0
  %2775 = vmatpush.msra.mxu0 0.0
  %2776 = vmatpush.msra.mxu0 %v2731
  %2777 = vmatpush.msra.mxu0 %v2726
  %2778 = vmatmul.f32.gmra.mxu0 %v2740
  %v2779 = vpop.f32.mrf.mxu0
  %v2780 = vadd.f32 %v2760, %v2779
  %2781 = vdwg.mxu0
  %2782 = vmatpush.msra.mxu0 %v2722
  %2783 = vmatpush.msra.mxu0 %v2717
  %2784 = vmatpush.msra.mxu0 %v2712
  %2785 = vmatpush.msra.mxu0 %v2707
  %2786 = vmatpush.msra.mxu0 %v2702
  %2787 = vmatpush.msra.mxu0 %v2697
  %2788 = vmatpush.msra.mxu0 %v2692
  %2789 = vmatpush.msra.mxu0 %v2687
  %2790 = vmatpush.msra.mxu0 %v2682
  %2791 = vmatpush.msra.mxu0 %v2677
  %2792 = vmatpush.msra.mxu0 %v2672
  %2793 = vmatpush.msra.mxu0 %v2667
  %2794 = vmatpush.msra.mxu0 %v2662
  %2795 = vmatpush.msra.mxu0 %v2657
  %2796 = vmatpush.msra.mxu0 %v2652
  %2797 = vmatpush.msra.mxu0 %v2647
  %2798 = vmatmul.f32.gmra.mxu0 %v1924
  %v2799 = vpop.f32.mrf.mxu0
  %v2800 = vadd.f32 %v2737, %v2799
  %2801 = vdwg.mxu0
  %2802 = vmatpush.msra.mxu0 0.0
  %2803 = vmatpush.msra.mxu0 0.0
  %2804 = vmatpush.msra.mxu0 0.0
  %2805 = vmatpush.msra.mxu0 0.0
  %2806 = vmatpush.msra.mxu0 0.0
  %2807 = vmatpush.msra.mxu0 0.0
  %2808 = vmatpush.msra.mxu0 0.0
  %2809 = vmatpush.msra.mxu0 0.0
  %2810 = vmatpush.msra.mxu0 0.0
  %2811 = vmatpush.msra.mxu0 0.0
  %2812 = vmatpush.msra.mxu0 0.0
  %2813 = vmatpush.msra.mxu0 0.0
  %2814 = vmatpush.msra.mxu0 0.0
  %2815 = vmatpush.msra.mxu0 0.0
  %2816 = vmatpush.msra.mxu0 %v2732
  %2817 = vmatpush.msra.mxu0 %v2727
  %2818 = vmatmul.f32.gmra.mxu0 %v2740
  %v2819 = vpop.f32.mrf.mxu0
  %v2820 = vadd.f32 %v2800, %v2819
  %2821 = vdwg.mxu0
  %2822 = vmatpush.msra.mxu0 %v2723
  %2823 = vmatpush.msra.mxu0 %v2718
  %2824 = vmatpush.msra.mxu0 %v2713
  %2825 = vmatpush.msra.mxu0 %v2708
  %2826 = vmatpush.msra.mxu0 %v2703
  %2827 = vmatpush.msra.mxu0 %v2698
  %2828 = vmatpush.msra.mxu0 %v2693
  %2829 = vmatpush.msra.mxu0 %v2688
  %2830 = vmatpush.msra.mxu0 %v2683
  %2831 = vmatpush.msra.mxu0 %v2678
  %2832 = vmatpush.msra.mxu0 %v2673
  %2833 = vmatpush.msra.mxu0 %v2668
  %2834 = vmatpush.msra.mxu0 %v2663
  %2835 = vmatpush.msra.mxu0 %v2658
  %2836 = vmatpush.msra.mxu0 %v2653
  %2837 = vmatpush.msra.mxu0 %v2648
  %2838 = vmatmul.f32.gmra.mxu0 %v1924
  %v2839 = vpop.f32.mrf.mxu0
  %v2840 = vadd.f32 %v2737, %v2839
  %2841 = vdwg.mxu0
  %2842 = vmatpush.msra.mxu0 0.0
  %2843 = vmatpush.msra.mxu0 0.0
  %2844 = vmatpush.msra.mxu0 0.0
  %2845 = vmatpush.msra.mxu0 0.0
  %2846 = vmatpush.msra.mxu0 0.0
  %2847 = vmatpush.msra.mxu0 0.0
  %2848 = vmatpush.msra.mxu0 0.0
  %2849 = vmatpush.msra.mxu0 0.0
  %2850 = vmatpush.msra.mxu0 0.0
  %2851 = vmatpush.msra.mxu0 0.0
  %2852 = vmatpush.msra.mxu0 0.0
  %2853 = vmatpush.msra.mxu0 0.0
  %2854 = vmatpush.msra.mxu0 0.0
  %2855 = vmatpush.msra.mxu0 0.0
  %2856 = vmatpush.msra.mxu0 %v2733
  %2857 = vmatpush.msra.mxu0 %v2728
  %2858 = vmatmul.f32.gmra.mxu0 %v2740
  %v2859 = vpop.f32.mrf.mxu0
  %v2860 = vadd.f32 %v2840, %v2859
  %2861 = vdwg.mxu0
  %2862 = vmatpush.msra.mxu0 %v2724
  %2863 = vmatpush.msra.mxu0 %v2719
  %2864 = vmatpush.msra.mxu0 %v2714
  %2865 = vmatpush.msra.mxu0 %v2709
  %2866 = vmatpush.msra.mxu0 %v2704
  %2867 = vmatpush.msra.mxu0 %v2699
  %2868 = vmatpush.msra.mxu0 %v2694
  %2869 = vmatpush.msra.mxu0 %v2689
  %2870 = vmatpush.msra.mxu0 %v2684
  %2871 = vmatpush.msra.mxu0 %v2679
  %2872 = vmatpush.msra.mxu0 %v2674
  %2873 = vmatpush.msra.mxu0 %v2669
  %2874 = vmatpush.msra.mxu0 %v2664
  %2875 = vmatpush.msra.mxu0 %v2659
  %2876 = vmatpush.msra.mxu0 %v2654
  %2877 = vmatpush.msra.mxu0 %v2649
  %2878 = vmatmul.f32.gmra.mxu0 %v1924
  %v2879 = vpop.f32.mrf.mxu0
  %v2880 = vadd.f32 %v2737, %v2879
  %2881 = vdwg.mxu0
  %2882 = vmatpush.msra.mxu0 0.0
  %2883 = vmatpush.msra.mxu0 0.0
  %2884 = vmatpush.msra.mxu0 0.0
  %2885 = vmatpush.msra.mxu0 0.0
  %2886 = vmatpush.msra.mxu0 0.0
  %2887 = vmatpush.msra.mxu0 0.0
  %2888 = vmatpush.msra.mxu0 0.0
  %2889 = vmatpush.msra.mxu0 0.0
  %2890 = vmatpush.msra.mxu0 0.0
  %2891 = vmatpush.msra.mxu0 0.0
  %2892 = vmatpush.msra.mxu0 0.0
  %2893 = vmatpush.msra.mxu0 0.0
  %2894 = vmatpush.msra.mxu0 0.0
  %2895 = vmatpush.msra.mxu0 0.0
  %2896 = vmatpush.msra.mxu0 %v2734
  %2897 = vmatpush.msra.mxu0 %v2729
  %2898 = vmatmul.f32.gmra.mxu0 %v2740
  %v2899 = vpop.f32.mrf.mxu0
  %v2900 = vadd.f32 %v2880, %v2899
  %2901 = vdwg.mxu0
  %2902 = vmatpush.msra.mxu0 %v2725
  %2903 = vmatpush.msra.mxu0 %v2720
  %2904 = vmatpush.msra.mxu0 %v2715
  %2905 = vmatpush.msra.mxu0 %v2710
  %2906 = vmatpush.msra.mxu0 %v2705
  %2907 = vmatpush.msra.mxu0 %v2700
  %2908 = vmatpush.msra.mxu0 %v2695
  %2909 = vmatpush.msra.mxu0 %v2690
  %2910 = vmatpush.msra.mxu0 %v2685
  %2911 = vmatpush.msra.mxu0 %v2680
  %2912 = vmatpush.msra.mxu0 %v2675
  %2913 = vmatpush.msra.mxu0 %v2670
  %2914 = vmatpush.msra.mxu0 %v2665
  %2915 = vmatpush.msra.mxu0 %v2660
  %2916 = vmatpush.msra.mxu0 %v2655
  %2917 = vmatpush.msra.mxu0 %v2650
  %2918 = vmatmul.f32.gmra.mxu0 %v1924
  %v2919 = vpop.f32.mrf.mxu0
  %v2920 = vadd.f32 %v2737, %v2919
  %2921 = vdwg.mxu0
  %2922 = vmatpush.msra.mxu0 0.0
  %2923 = vmatpush.msra.mxu0 0.0
  %2924 = vmatpush.msra.mxu0 0.0
  %2925 = vmatpush.msra.mxu0 0.0
  %2926 = vmatpush.msra.mxu0 0.0
  %2927 = vmatpush.msra.mxu0 0.0
  %2928 = vmatpush.msra.mxu0 0.0
  %2929 = vmatpush.msra.mxu0 0.0
  %2930 = vmatpush.msra.mxu0 0.0
  %2931 = vmatpush.msra.mxu0 0.0
  %2932 = vmatpush.msra.mxu0 0.0
  %2933 = vmatpush.msra.mxu0 0.0
  %2934 = vmatpush.msra.mxu0 0.0
  %2935 = vmatpush.msra.mxu0 0.0
  %2936 = vmatpush.msra.mxu0 %v2735
  %2937 = vmatpush.msra.mxu0 %v2730
  %2938 = vmatmul.f32.gmra.mxu0 %v2740
  %v2939 = vpop.f32.mrf.mxu0
  %v2940 = vadd.f32 %v2920, %v2939
  %2941 = vdwg.mxu0
  %v2942 = vxor.u32 %v2780, 2147483648
  %v2943 = vxor.u32 %v2820, 2147483648
  %v2944 = vxor.u32 %v2860, 2147483648
  %v2945 = vxor.u32 %v2900, 2147483648
  %v2946 = vxor.u32 %v2940, 2147483648
  %v2947 = vmul.f32 %v2942, 1.442695
  %v2948 = vpow.pop %v2947
  %v2949 = vmul.f32 %v2943, 1.442695
  %v2950 = vpow.pop %v2949
  %v2951 = vmul.f32 %v2944, 1.442695
  %v2952 = vpow.pop %v2951
  %v2953 = vmul.f32 %v2945, 1.442695
  %v2954 = vpow.pop %v2953
  %v2955 = vmul.f32 %v2946, 1.442695
  %v2956 = vpow.pop %v2955
  %v2957 = vadd.f32 %v2948, 1.0
  %v2958 = vadd.f32 %v2950, 1.0
  %v2959 = vadd.f32 %v2952, 1.0
  %v2960 = vadd.f32 %v2954, 1.0
  %v2961 = vadd.f32 %v2956, 1.0
  %v2962 = vrcp.pop %v2957
  %v2963 = vmul.f32 %v2957, %v2962
  %v2964 = vsub.f32 1.0, %v2963
  %v2965 = vmul.f32 %v2962, %v2964
  %v2966 = vadd.f32 %v2962, %v2965
  %vm2967 = vweird.f32 %v2957
  %vm2968 = vweird.f32 %v2962
  %vm2969 = vmor %vm2967, %vm2968
  %v2970 = vsel %vm2969, %v2962, %v2966
  %v2971 = vand.u32 2147483647, %v2957
  %vm2972 = vcmp.eq.f32.partialorder %v2971, 8.507059e+37
  %v2973 = vand.u32 %v2957, 2147483648
  %v2974 = vor.u32 1.1754944e-38, %v2973
  %v2975 = vsel %vm2972, %v2974, %v2970
  %v2976 = vmul.f32 1.0, %v2975
  %v2977 = vrcp.pop %v2958
  %v2978 = vmul.f32 %v2958, %v2977
  %v2979 = vsub.f32 1.0, %v2978
  %v2980 = vmul.f32 %v2977, %v2979
  %v2981 = vadd.f32 %v2977, %v2980
  %vm2982 = vweird.f32 %v2958
  %vm2983 = vweird.f32 %v2977
  %vm2984 = vmor %vm2982, %vm2983
  %v2985 = vsel %vm2984, %v2977, %v2981
  %v2986 = vand.u32 2147483647, %v2958
  %vm2987 = vcmp.eq.f32.partialorder %v2986, 8.507059e+37
  %v2988 = vand.u32 %v2958, 2147483648
  %v2989 = vor.u32 1.1754944e-38, %v2988
  %v2990 = vsel %vm2987, %v2989, %v2985
  %v2991 = vmul.f32 1.0, %v2990
  %v2992 = vrcp.pop %v2959
  %v2993 = vmul.f32 %v2959, %v2992
  %v2994 = vsub.f32 1.0, %v2993
  %v2995 = vmul.f32 %v2992, %v2994
  %v2996 = vadd.f32 %v2992, %v2995
  %vm2997 = vweird.f32 %v2959
  %vm2998 = vweird.f32 %v2992
  %vm2999 = vmor %vm2997, %vm2998
  %v3000 = vsel %vm2999, %v2992, %v2996
  %v3001 = vand.u32 2147483647, %v2959
  %vm3002 = vcmp.eq.f32.partialorder %v3001, 8.507059e+37
  %v3003 = vand.u32 %v2959, 2147483648
  %v3004 = vor.u32 1.1754944e-38, %v3003
  %v3005 = vsel %vm3002, %v3004, %v3000
  %v3006 = vmul.f32 1.0, %v3005
  %v3007 = vrcp.pop %v2960
  %v3008 = vmul.f32 %v2960, %v3007
  %v3009 = vsub.f32 1.0, %v3008
  %v3010 = vmul.f32 %v3007, %v3009
  %v3011 = vadd.f32 %v3007, %v3010
  %vm3012 = vweird.f32 %v2960
  %vm3013 = vweird.f32 %v3007
  %vm3014 = vmor %vm3012, %vm3013
  %v3015 = vsel %vm3014, %v3007, %v3011
  %v3016 = vand.u32 2147483647, %v2960
  %vm3017 = vcmp.eq.f32.partialorder %v3016, 8.507059e+37
  %v3018 = vand.u32 %v2960, 2147483648
  %v3019 = vor.u32 1.1754944e-38, %v3018
  %v3020 = vsel %vm3017, %v3019, %v3015
  %v3021 = vmul.f32 1.0, %v3020
  %v3022 = vrcp.pop %v2961
  %v3023 = vmul.f32 %v2961, %v3022
  %v3024 = vsub.f32 1.0, %v3023
  %v3025 = vmul.f32 %v3022, %v3024
  %v3026 = vadd.f32 %v3022, %v3025
  %vm3027 = vweird.f32 %v2961
  %vm3028 = vweird.f32 %v3022
  %vm3029 = vmor %vm3027, %vm3028
  %v3030 = vsel %vm3029, %v3022, %v3026
  %v3031 = vand.u32 2147483647, %v2961
  %vm3032 = vcmp.eq.f32.partialorder %v3031, 8.507059e+37
  %v3033 = vand.u32 %v2961, 2147483648
  %v3034 = vor.u32 1.1754944e-38, %v3033
  %v3035 = vsel %vm3032, %v3034, %v3030
  %v3036 = vmul.f32 1.0, %v3035
  %3037 = vst [vmem:[%s4] sm:$0xff] %v2976
  %3038 = vst [vmem:[%s4 + $0x8] sm:$0xff] %v2991
  %3039 = vst [vmem:[%s4 + $0x10] sm:$0xff] %v3006
  %3040 = vst [vmem:[%s4 + $0x18] sm:$0xff] %v3021
  %3041 = vst [vmem:[%s4 + $0x20] sm:$0xff] %v3036
  // Predicated region
  $region18: #{decoder_head.1} parent=0 // pred_check
    _
  $region19: #{decoder_head.1} parent=0 // pred_check_branch
    %3043 = sbr.rel (0) target = $region21
  $region20: #{decoder_head.1} parent=0 // pred_region
    _
  $region21: #{decoder_head.1} parent=0 // pred_fallthru
    _
  // Predicated region
  $region22: #{decoder_head.1} parent=0 // pred_check
    _
  $region23: #{decoder_head.1} parent=0 // pred_check_branch
    %3045 = sbr.rel (0) target = $region25
  $region24: #{decoder_head.1} parent=0 // pred_region
    _
  $region25: #{decoder_head.1} parent=0 // pred_fallthru
    _

</llo_original>
